<compile_context>
chip_gen: v7x
topology: tpu7x:2x2x1
jax: 0.10.0
libtpu: 0.0.40
codegen_flags: <defaults>
</compile_context>

<pallas_src>
import functools

import jax
import jax.numpy as jnp
from jax import lax
from jax.experimental import pallas as pl
from jax.experimental.pallas import tpu as pltpu


def _round_up(x, m):
    return (x + m - 1) // m * m


def _block_kernel(x_ref, hm_ref, w1_ref, b1_ref, w2_ref, b2_ref, o_ref,
                  xe1, xe2, *, H, W, B, STRIDE, OFS):
    """Fused conv3x3+ReLU -> conv3x3+ReLU -> maxpool2x2 for B images.

    x_ref:  (B, Cin, H*W)        bf16 images, spatial flattened onto lanes
    hm_ref: (2, SPAN)            bf16 horizontal-validity masks (left / right)
    w*_ref: (9, Cout, cpad)      bf16 per-tap weights (pad channels are zero)
    b*_ref: (Cout, 1)            f32 biases
    o_ref:  (B, Cout, Ho*Wo)     f32 pooled output
    xe1/xe2:(cpad, L)            bf16 zero-margined activation scratches
    """
    HW = H * W
    SPAN = (B - 1) * STRIDE + HW
    Cin = x_ref.shape[1]
    Cout = w1_ref.shape[1]
    Ho, Wo = H // 2, W // 2

    # Hoisted mask loads (reused by all horizontal taps of both convs).
    hm_left = hm_ref[0:1, :]      # valid where reading (ww - 1) is in-bounds
    hm_right = hm_ref[1:2, :]     # valid where reading (ww + 1) is in-bounds

    def zero_pad_regions(xe, c_used):
        # Keep halo margins, inter-image gaps and channel-pad rows at zero.
        # Interior image slots are fully rewritten below, so only these small
        # regions need clearing each step.
        cpad, L = xe.shape
        xe[:, 0:OFS] = jnp.zeros((cpad, OFS), xe.dtype)
        for n in range(B):
            g0 = OFS + n * STRIDE + HW
            g1 = OFS + (n + 1) * STRIDE
            xe[:, g0:g1] = jnp.zeros((cpad, g1 - g0), xe.dtype)
        if cpad > c_used:
            xe[c_used:cpad, :] = jnp.zeros((cpad - c_used, L), xe.dtype)

    def conv3x3_relu(xe, w_ref, b_ref):
        # 9 per-tap matmuls accumulated in f32; no im2col buffer.
        acc = None
        for dy in range(3):
            for dx in range(3):
                t = dy * 3 + dx
                s = (dy - 1) * W + (dx - 1)               # flat tap shift
                tap = xe[:, OFS + s:OFS + s + SPAN]       # (cpad, SPAN) bf16
                if dx == 0:
                    tap = tap * hm_left                   # horizontal wrap mask
                elif dx == 2:
                    tap = tap * hm_right
                part = jnp.dot(w_ref[t], tap,
                               preferred_element_type=jnp.float32)
                acc = part if acc is None else acc + part
        return jnp.maximum(acc + b_ref[...], 0.0)         # (Cout, SPAN) f32

    def maxpool2x2(y):
        # VPU pool of one image (Cout, H*W) -> (Cout, Ho*Wo); floors odd H/W
        # exactly like nn.MaxPool2d(2, 2).
        He, We = 2 * Ho, 2 * Wo
        if (He, We) != (H, W):
            y = y.reshape(Cout, H, W)[:, :He, :We].reshape(Cout, He * We)
        a = jnp.max(y.reshape(Cout, He * Wo, 2), axis=-1)   # horizontal pairs
        b = a.reshape(Cout, Ho, 2 * Wo)
        v = jnp.maximum(b[:, :, :Wo], b[:, :, Wo:])         # vertical pairs
        return v.reshape(Cout, Ho * Wo)

    zero_pad_regions(xe1, Cin)
    zero_pad_regions(xe2, Cout)

    # Place the B images side by side in the zero-margined conv1 scratch.
    for n in range(B):
        base = OFS + n * STRIDE
        xe1[:Cin, base:base + HW] = x_ref[n]

    y1 = conv3x3_relu(xe1, w1_ref, b1_ref)                  # (Cout, SPAN) f32

    # Copy only the valid per-image columns into the conv2 scratch (gap junk
    # columns of y1 are never written, so the zero margins stay intact).
    for n in range(B):
        base = OFS + n * STRIDE
        xe2[:Cout, base:base + HW] = (
            y1[:, n * STRIDE:n * STRIDE + HW].astype(xe2.dtype))

    y2 = conv3x3_relu(xe2, w2_ref, b2_ref)                  # (Cout, SPAN) f32

    for n in range(B):
        o_ref[n] = maxpool2x2(
            y2[:, n * STRIDE:n * STRIDE + HW]).astype(o_ref.dtype)


def _pack_w(w_hwio, cpad, dtype):
    """(3,3,Cin,Cout) HWIO -> (9, Cout, cpad), per-tap, channels zero-padded."""
    kh, kw, cin, cout = w_hwio.shape
    w = w_hwio.reshape(kh * kw, cin, cout)
    w = jnp.transpose(w, (0, 2, 1))                         # (9, Cout, Cin)
    w = jnp.pad(w, ((0, 0), (0, 0), (0, cpad - cin)))
    return w.astype(dtype)


def block_forward(x_nchw, w1, b1, w2, b2):
    """Forward of Block(Cin, Cout, batch_norm=False, pool=True).

    x_nchw: (N, Cin, H, W) float32; conv weights in HWIO layout.
    Returns (N, Cout, H//2, W//2) float32 (PyTorch NCHW convention).
    """
    N, Cin, H, W = x_nchw.shape
    Cout = w1.shape[-1]
    Ho, Wo = H // 2, W // 2
    HW, HoWo = H * W, Ho * Wo
    cpad1 = _round_up(Cin, 8)
    cpad2 = _round_up(Cout, 8)

    # Batch blocking: largest B that divides N, keeps the grid >= 2 (so both
    # v7x TensorCores get work) and keeps a conservative VMEM estimate under
    # ~36 MiB.  Falls back to B=1.
    B = 1
    for cand in (8, 4, 2):
        if N % cand or N // cand < 2:
            continue
        stride_c = _round_up(HW + W + 1, 128)
        L_c = _round_up(W + 1, 128) + cand * stride_c
        span_c = (cand - 1) * stride_c + HW
        est = (2 * (cpad1 + cpad2) * L_c          # bf16 xe scratches
               + 16 * Cout * span_c               # f32 acc/y1/y2 working set
               + 4 * cand * Cin * HW              # 2x-buffered bf16 input blk
               + 8 * cand * Cout * HoWo)          # 2x-buffered f32 output blk
        if est <= 36 * 1024 * 1024:
            B = cand
            break
    G = N // B

    OFS = _round_up(W + 1, 128)                   # 128-aligned leading margin
    STRIDE = _round_up(HW + W + 1, 128)           # per-image slot (>= HW+W+1)
    L = OFS + B * STRIDE                          # scratch lane extent
    SPAN = (B - 1) * STRIDE + HW                  # conv matmul RHS width

    x_flat = x_nchw.reshape(N, Cin, HW).astype(jnp.bfloat16)   # free reshape
    w1p = _pack_w(w1, cpad1, jnp.bfloat16)
    w2p = _pack_w(w2, cpad2, jnp.bfloat16)
    b1c = b1.reshape(Cout, 1).astype(jnp.float32)
    b2c = b2.reshape(Cout, 1).astype(jnp.float32)

    # Horizontal-validity masks over the whole span (gap columns are 0; they
    # are never consumed).  Vertical padding is handled by the zero margins.
    c = jnp.arange(SPAN)
    n_idx = c // STRIDE
    off = c - n_idx * STRIDE
    in_img = off < HW
    ww = off % W
    hmask = jnp.stack([in_img & (ww >= 1),
                       in_img & (ww <= W - 2)]).astype(jnp.bfloat16)

    kernel = functools.partial(_block_kernel, H=H, W=W, B=B,
                               STRIDE=STRIDE, OFS=OFS)

    grid_spec = pltpu.PrefetchScalarGridSpec(
        num_scalar_prefetch=0,
        grid=(G,),
        in_specs=[
            pl.BlockSpec((B, Cin, HW), lambda g: (g, 0, 0)),
            # Batch-invariant operands below are small; default double
            # buffering costs only a few KiB so pipeline_mode is left default.
            pl.BlockSpec((2, SPAN), lambda g: (0, 0)),
            pl.BlockSpec((9, Cout, cpad1), lambda g: (0, 0, 0)),
            pl.BlockSpec((Cout, 1), lambda g: (0, 0)),
            pl.BlockSpec((9, Cout, cpad2), lambda g: (0, 0, 0)),
            pl.BlockSpec((Cout, 1), lambda g: (0, 0)),
        ],
        out_specs=pl.BlockSpec((B, Cout, HoWo), lambda g: (g, 0, 0)),
        scratch_shapes=[
            pltpu.VMEM((cpad1, L), jnp.bfloat16),
            pltpu.VMEM((cpad2, L), jnp.bfloat16),
        ],
    )

    out = pl.pallas_call(
        kernel,
        out_shape=jax.ShapeDtypeStruct((N, Cout, HoWo), jnp.float32),
        grid_spec=grid_spec,
        compiler_params=pltpu.CompilerParams(
            dimension_semantics=("parallel",),
            # 48 MiB: inside v7x's 64 MiB physical VMEM, well below v5e/v6e's
            # 128 MiB; actual usage at these sizes is a tiny fraction of it.
            vmem_limit_bytes=48 * 1024 * 1024),
    )(x_flat, hmask, w1p, b1c, w2p, b2c)
    return out.reshape(N, Cout, Ho, Wo)


def block_forward_ref(x_nchw, w1, b1, w2, b2):
    """Pure-JAX f32 reference (matches the PyTorch Block semantics)."""
    x = jnp.transpose(x_nchw, (0, 2, 3, 1))
    dn = ("NHWC", "HWIO", "NHWC")
    y = lax.conv_general_dilated(x, w1, (1, 1), "SAME", dimension_numbers=dn)
    y = jnp.maximum(y + b1, 0.0)
    y = lax.conv_general_dilated(y, w2, (1, 1), "SAME", dimension_numbers=dn)
    y = jnp.maximum(y + b2, 0.0)
    y = lax.reduce_window(y, -jnp.inf, lax.max,
                          (1, 2, 2, 1), (1, 2, 2, 1), "VALID")
    return jnp.transpose(y, (0, 3, 1, 2))


if __name__ == "__main__":
    N, Cin, Cout, H, W = 2, 4, 8, 16, 16

    key = jax.random.PRNGKey(0)
    k1, k2, k3, k4, k5 = jax.random.split(key, 5)

    # Pre-round x / weights to bf16-representable f32 so the bf16-operand
    # kernel and the f32 reference see identical operands (tight tolerance).
    rnd = lambda a: a.astype(jnp.bfloat16).astype(jnp.float32)
    x = rnd(jax.random.normal(k1, (N, Cin, H, W), jnp.float32))
    w1 = rnd(jax.random.normal(k2, (3, 3, Cin, Cout), jnp.float32) * 0.1)
    b1 = jax.random.normal(k3, (Cout,), jnp.float32) * 0.1
    w2 = rnd(jax.random.normal(k4, (3, 3, Cout, Cout), jnp.float32) * 0.1)
    b2 = jax.random.normal(k5, (Cout,), jnp.float32) * 0.1

    out = jax.block_until_ready(jax.jit(block_forward)(x, w1, b1, w2, b2))
    ref = block_forward_ref(x, w1, b1, w2, b2)
    assert out.shape == (N, Cout, H // 2, W // 2), out.shape
    assert jnp.allclose(out, ref, atol=3e-2, rtol=3e-2), \
        float(jnp.max(jnp.abs(out - ref)))

    # Second config exercises the batch-blocked path (B=2 images per step).
    N2 = 4
    x2 = rnd(jax.random.normal(jax.random.PRNGKey(1), (N2, Cin, H, W),
                               jnp.float32))
    out2 = jax.block_until_ready(jax.jit(block_forward)(x2, w1, b1, w2, b2))
    ref2 = block_forward_ref(x2, w1, b1, w2, b2)
    assert out2.shape == (N2, Cout, H // 2, W // 2), out2.shape
    assert jnp.allclose(out2, ref2, atol=3e-2, rtol=3e-2), \
        float(jnp.max(jnp.abs(out2 - ref2)))

    print("KERNEL_OK")
</pallas_src>

<mosaic_0001>
module attributes {stable_mosaic.version = 11 : i64} {
  func.func @_block_kernel(%arg0: i32, %arg1: memref<1x4x256xbf16, #tpu.memory_space<vmem>>, %arg2: memref<2x256xbf16, #tpu.memory_space<vmem>>, %arg3: memref<9x8x8xbf16, #tpu.memory_space<vmem>>, %arg4: memref<8x1xf32, #tpu.memory_space<vmem>>, %arg5: memref<9x8x8xbf16, #tpu.memory_space<vmem>>, %arg6: memref<8x1xf32, #tpu.memory_space<vmem>>, %arg7: memref<1x8x64xf32, #tpu.memory_space<vmem>>, %arg8: memref<8x512xbf16, #tpu.memory_space<vmem>>, %arg9: memref<8x512xbf16, #tpu.memory_space<vmem>>) attributes {dimension_semantics = [#tpu.dimension_semantics<parallel>], iteration_bounds = array<i64: 2>, scalar_prefetch = 0 : i64, scratch_operands = 2 : i64, tpu.core_type = #tpu.core_type<tc>, window_params = [{transform_indices = @transform_0, window_bounds = array<i64: 1, 4, 256>}, {pipeline_mode = #tpu.pipeline_mode<synchronous>, transform_indices = @transform_1, window_bounds = array<i64: 2, 256>}, {pipeline_mode = #tpu.pipeline_mode<synchronous>, transform_indices = @transform_2, window_bounds = array<i64: 9, 8, 8>}, {pipeline_mode = #tpu.pipeline_mode<synchronous>, transform_indices = @transform_3, window_bounds = array<i64: 8, 1>}, {pipeline_mode = #tpu.pipeline_mode<synchronous>, transform_indices = @transform_4, window_bounds = array<i64: 9, 8, 8>}, {pipeline_mode = #tpu.pipeline_mode<synchronous>, transform_indices = @transform_5, window_bounds = array<i64: 8, 1>}, {transform_indices = @transform_6, window_bounds = array<i64: 1, 8, 64>}]} {
    %c0 = arith.constant 0 : index
    %c0_0 = arith.constant 0 : index
    %0 = vector.load %arg2[%c0, %c0_0] : memref<2x256xbf16, #tpu.memory_space<vmem>>, vector<1x256xbf16>
    %c1 = arith.constant 1 : index
    %c0_1 = arith.constant 0 : index
    %1 = vector.load %arg2[%c1, %c0_1] : memref<2x256xbf16, #tpu.memory_space<vmem>>, vector<1x256xbf16>
    %cst = arith.constant 0.000000e+00 : bf16
    %2 = vector.broadcast %cst : bf16 to vector<8x128xbf16>
    %c0_2 = arith.constant 0 : index
    %c0_3 = arith.constant 0 : index
    %3 = vector.load %arg8[%c0_2, %c0_3] : memref<8x512xbf16, #tpu.memory_space<vmem>>, vector<8x128xbf16>
    tpu.vector_store %arg8[%c0_2, %c0_3], %2 {strides = array<i32>} : memref<8x512xbf16, #tpu.memory_space<vmem>>, vector<8x128xbf16>,
    %cst_4 = arith.constant 0.000000e+00 : bf16
    %4 = vector.broadcast %cst_4 : bf16 to vector<8x128xbf16>
    %c0_5 = arith.constant 0 : index
    %c384 = arith.constant 384 : index
    %5 = vector.load %arg8[%c0_5, %c384] : memref<8x512xbf16, #tpu.memory_space<vmem>>, vector<8x128xbf16>
    tpu.vector_store %arg8[%c0_5, %c384], %4 {strides = array<i32>} : memref<8x512xbf16, #tpu.memory_space<vmem>>, vector<8x128xbf16>,
    %cst_6 = arith.constant 0.000000e+00 : bf16
    %6 = vector.broadcast %cst_6 : bf16 to vector<4x512xbf16>
    %c4 = arith.constant 4 : index
    %c0_7 = arith.constant 0 : index
    %7 = vector.load %arg8[%c4, %c0_7] : memref<8x512xbf16, #tpu.memory_space<vmem>>, vector<4x512xbf16>
    tpu.vector_store %arg8[%c4, %c0_7], %6 {strides = array<i32>} : memref<8x512xbf16, #tpu.memory_space<vmem>>, vector<4x512xbf16>,
    %cst_8 = arith.constant 0.000000e+00 : bf16
    %8 = vector.broadcast %cst_8 : bf16 to vector<8x128xbf16>
    %c0_9 = arith.constant 0 : index
    %c0_10 = arith.constant 0 : index
    %9 = vector.load %arg9[%c0_9, %c0_10] : memref<8x512xbf16, #tpu.memory_space<vmem>>, vector<8x128xbf16>
    tpu.vector_store %arg9[%c0_9, %c0_10], %8 {strides = array<i32>} : memref<8x512xbf16, #tpu.memory_space<vmem>>, vector<8x128xbf16>,
    %cst_11 = arith.constant 0.000000e+00 : bf16
    %10 = vector.broadcast %cst_11 : bf16 to vector<8x128xbf16>
    %c0_12 = arith.constant 0 : index
    %c384_13 = arith.constant 384 : index
    %11 = vector.load %arg9[%c0_12, %c384_13] : memref<8x512xbf16, #tpu.memory_space<vmem>>, vector<8x128xbf16>
    tpu.vector_store %arg9[%c0_12, %c384_13], %10 {strides = array<i32>} : memref<8x512xbf16, #tpu.memory_space<vmem>>, vector<8x128xbf16>,
    %c0_14 = arith.constant 0 : index
    %c0_15 = arith.constant 0 : index
    %c0_16 = arith.constant 0 : index
    %12 = vector.load %arg1[%c0_14, %c0_15, %c0_16] : memref<1x4x256xbf16, #tpu.memory_space<vmem>>, vector<1x4x256xbf16>
    %13 = vector.shape_cast %12 : vector<1x4x256xbf16> to vector<4x256xbf16>
    %c0_17 = arith.constant 0 : index
    %c128 = arith.constant 128 : index
    %14 = vector.load %arg8[%c0_17, %c128] : memref<8x512xbf16, #tpu.memory_space<vmem>>, vector<4x256xbf16>
    tpu.vector_store %arg8[%c0_17, %c128], %13 {strides = array<i32>} : memref<8x512xbf16, #tpu.memory_space<vmem>>, vector<4x256xbf16>,
    %c0_18 = arith.constant 0 : index
    %c111 = arith.constant 111 : index
    %15 = vector.load %arg8[%c0_18, %c111] : memref<8x512xbf16, #tpu.memory_space<vmem>>, vector<8x256xbf16>
    %16 = vector.broadcast %0 : vector<1x256xbf16> to vector<8x256xbf16>
    %17 = arith.mulf %15, %16 : vector<8x256xbf16>
    %c0_19 = arith.constant 0 : index
    %c0_20 = arith.constant 0 : index
    %c0_21 = arith.constant 0 : index
    %18 = vector.load %arg3[%c0_19, %c0_20, %c0_21] : memref<9x8x8xbf16, #tpu.memory_space<vmem>>, vector<1x8x8xbf16>
    %19 = vector.shape_cast %18 : vector<1x8x8xbf16> to vector<8x8xbf16>
    %cst_22 = arith.constant dense<0.000000e+00> : vector<8x256xf32>
    %20 = tpu.matmul %19, %17, %cst_22 {dimension_numbers = #tpu.dot_dimension_numbers<[1], [0], [0], [1], [0, 0, 1, 1], [], []>} : vector<8x8xbf16>, vector<8x256xbf16>, vector<8x256xf32> -> vector<8x256xf32>
    %c0_23 = arith.constant 0 : index
    %c112 = arith.constant 112 : index
    %21 = vector.load %arg8[%c0_23, %c112] : memref<8x512xbf16, #tpu.memory_space<vmem>>, vector<8x256xbf16>
    %c1_24 = arith.constant 1 : index
    %c0_25 = arith.constant 0 : index
    %c0_26 = arith.constant 0 : index
    %22 = vector.load %arg3[%c1_24, %c0_25, %c0_26] : memref<9x8x8xbf16, #tpu.memory_space<vmem>>, vector<1x8x8xbf16>
    %23 = vector.shape_cast %22 : vector<1x8x8xbf16> to vector<8x8xbf16>
    %cst_27 = arith.constant dense<0.000000e+00> : vector<8x256xf32>
    %24 = tpu.matmul %23, %21, %cst_27 {dimension_numbers = #tpu.dot_dimension_numbers<[1], [0], [0], [1], [0, 0, 1, 1], [], []>} : vector<8x8xbf16>, vector<8x256xbf16>, vector<8x256xf32> -> vector<8x256xf32>
    %25 = arith.addf %20, %24 : vector<8x256xf32>
    %c0_28 = arith.constant 0 : index
    %c113 = arith.constant 113 : index
    %26 = vector.load %arg8[%c0_28, %c113] : memref<8x512xbf16, #tpu.memory_space<vmem>>, vector<8x256xbf16>
    %27 = vector.broadcast %1 : vector<1x256xbf16> to vector<8x256xbf16>
    %28 = arith.mulf %26, %27 : vector<8x256xbf16>
    %c2 = arith.constant 2 : index
    %c0_29 = arith.constant 0 : index
    %c0_30 = arith.constant 0 : index
    %29 = vector.load %arg3[%c2, %c0_29, %c0_30] : memref<9x8x8xbf16, #tpu.memory_space<vmem>>, vector<1x8x8xbf16>
    %30 = vector.shape_cast %29 : vector<1x8x8xbf16> to vector<8x8xbf16>
    %cst_31 = arith.constant dense<0.000000e+00> : vector<8x256xf32>
    %31 = tpu.matmul %30, %28, %cst_31 {dimension_numbers = #tpu.dot_dimension_numbers<[1], [0], [0], [1], [0, 0, 1, 1], [], []>} : vector<8x8xbf16>, vector<8x256xbf16>, vector<8x256xf32> -> vector<8x256xf32>
    %32 = arith.addf %25, %31 : vector<8x256xf32>
    %c0_32 = arith.constant 0 : index
    %c127 = arith.constant 127 : index
    %33 = vector.load %arg8[%c0_32, %c127] : memref<8x512xbf16, #tpu.memory_space<vmem>>, vector<8x256xbf16>
    %34 = vector.broadcast %0 : vector<1x256xbf16> to vector<8x256xbf16>
    %35 = arith.mulf %33, %34 : vector<8x256xbf16>
    %c3 = arith.constant 3 : index
    %c0_33 = arith.constant 0 : index
    %c0_34 = arith.constant 0 : index
    %36 = vector.load %arg3[%c3, %c0_33, %c0_34] : memref<9x8x8xbf16, #tpu.memory_space<vmem>>, vector<1x8x8xbf16>
    %37 = vector.shape_cast %36 : vector<1x8x8xbf16> to vector<8x8xbf16>
    %cst_35 = arith.constant dense<0.000000e+00> : vector<8x256xf32>
    %38 = tpu.matmul %37, %35, %cst_35 {dimension_numbers = #tpu.dot_dimension_numbers<[1], [0], [0], [1], [0, 0, 1, 1], [], []>} : vector<8x8xbf16>, vector<8x256xbf16>, vector<8x256xf32> -> vector<8x256xf32>
    %39 = arith.addf %32, %38 : vector<8x256xf32>
    %c0_36 = arith.constant 0 : index
    %c128_37 = arith.constant 128 : index
    %40 = vector.load %arg8[%c0_36, %c128_37] : memref<8x512xbf16, #tpu.memory_space<vmem>>, vector<8x256xbf16>
    %c4_38 = arith.constant 4 : index
    %c0_39 = arith.constant 0 : index
    %c0_40 = arith.constant 0 : index
    %41 = vector.load %arg3[%c4_38, %c0_39, %c0_40] : memref<9x8x8xbf16, #tpu.memory_space<vmem>>, vector<1x8x8xbf16>
    %42 = vector.shape_cast %41 : vector<1x8x8xbf16> to vector<8x8xbf16>
    %cst_41 = arith.constant dense<0.000000e+00> : vector<8x256xf32>
    %43 = tpu.matmul %42, %40, %cst_41 {dimension_numbers = #tpu.dot_dimension_numbers<[1], [0], [0], [1], [0, 0, 1, 1], [], []>} : vector<8x8xbf16>, vector<8x256xbf16>, vector<8x256xf32> -> vector<8x256xf32>
    %44 = arith.addf %39, %43 : vector<8x256xf32>
    %c0_42 = arith.constant 0 : index
    %c129 = arith.constant 129 : index
    %45 = vector.load %arg8[%c0_42, %c129] : memref<8x512xbf16, #tpu.memory_space<vmem>>, vector<8x256xbf16>
    %46 = vector.broadcast %1 : vector<1x256xbf16> to vector<8x256xbf16>
    %47 = arith.mulf %45, %46 : vector<8x256xbf16>
    %c5 = arith.constant 5 : index
    %c0_43 = arith.constant 0 : index
    %c0_44 = arith.constant 0 : index
    %48 = vector.load %arg3[%c5, %c0_43, %c0_44] : memref<9x8x8xbf16, #tpu.memory_space<vmem>>, vector<1x8x8xbf16>
    %49 = vector.shape_cast %48 : vector<1x8x8xbf16> to vector<8x8xbf16>
    %cst_45 = arith.constant dense<0.000000e+00> : vector<8x256xf32>
    %50 = tpu.matmul %49, %47, %cst_45 {dimension_numbers = #tpu.dot_dimension_numbers<[1], [0], [0], [1], [0, 0, 1, 1], [], []>} : vector<8x8xbf16>, vector<8x256xbf16>, vector<8x256xf32> -> vector<8x256xf32>
    %51 = arith.addf %44, %50 : vector<8x256xf32>
    %c0_46 = arith.constant 0 : index
    %c143 = arith.constant 143 : index
    %52 = vector.load %arg8[%c0_46, %c143] : memref<8x512xbf16, #tpu.memory_space<vmem>>, vector<8x256xbf16>
    %53 = vector.broadcast %0 : vector<1x256xbf16> to vector<8x256xbf16>
    %54 = arith.mulf %52, %53 : vector<8x256xbf16>
    %c6 = arith.constant 6 : index
    %c0_47 = arith.constant 0 : index
    %c0_48 = arith.constant 0 : index
    %55 = vector.load %arg3[%c6, %c0_47, %c0_48] : memref<9x8x8xbf16, #tpu.memory_space<vmem>>, vector<1x8x8xbf16>
    %56 = vector.shape_cast %55 : vector<1x8x8xbf16> to vector<8x8xbf16>
    %cst_49 = arith.constant dense<0.000000e+00> : vector<8x256xf32>
    %57 = tpu.matmul %56, %54, %cst_49 {dimension_numbers = #tpu.dot_dimension_numbers<[1], [0], [0], [1], [0, 0, 1, 1], [], []>} : vector<8x8xbf16>, vector<8x256xbf16>, vector<8x256xf32> -> vector<8x256xf32>
    %58 = arith.addf %51, %57 : vector<8x256xf32>
    %c0_50 = arith.constant 0 : index
    %c144 = arith.constant 144 : index
    %59 = vector.load %arg8[%c0_50, %c144] : memref<8x512xbf16, #tpu.memory_space<vmem>>, vector<8x256xbf16>
    %c7 = arith.constant 7 : index
    %c0_51 = arith.constant 0 : index
    %c0_52 = arith.constant 0 : index
    %60 = vector.load %arg3[%c7, %c0_51, %c0_52] : memref<9x8x8xbf16, #tpu.memory_space<vmem>>, vector<1x8x8xbf16>
    %61 = vector.shape_cast %60 : vector<1x8x8xbf16> to vector<8x8xbf16>
    %cst_53 = arith.constant dense<0.000000e+00> : vector<8x256xf32>
    %62 = tpu.matmul %61, %59, %cst_53 {dimension_numbers = #tpu.dot_dimension_numbers<[1], [0], [0], [1], [0, 0, 1, 1], [], []>} : vector<8x8xbf16>, vector<8x256xbf16>, vector<8x256xf32> -> vector<8x256xf32>
    %63 = arith.addf %58, %62 : vector<8x256xf32>
    %c0_54 = arith.constant 0 : index
    %c145 = arith.constant 145 : index
    %64 = vector.load %arg8[%c0_54, %c145] : memref<8x512xbf16, #tpu.memory_space<vmem>>, vector<8x256xbf16>
    %65 = vector.broadcast %1 : vector<1x256xbf16> to vector<8x256xbf16>
    %66 = arith.mulf %64, %65 : vector<8x256xbf16>
    %c8 = arith.constant 8 : index
    %c0_55 = arith.constant 0 : index
    %c0_56 = arith.constant 0 : index
    %67 = vector.load %arg3[%c8, %c0_55, %c0_56] : memref<9x8x8xbf16, #tpu.memory_space<vmem>>, vector<1x8x8xbf16>
    %68 = vector.shape_cast %67 : vector<1x8x8xbf16> to vector<8x8xbf16>
    %cst_57 = arith.constant dense<0.000000e+00> : vector<8x256xf32>
    %69 = tpu.matmul %68, %66, %cst_57 {dimension_numbers = #tpu.dot_dimension_numbers<[1], [0], [0], [1], [0, 0, 1, 1], [], []>} : vector<8x8xbf16>, vector<8x256xbf16>, vector<8x256xf32> -> vector<8x256xf32>
    %70 = arith.addf %63, %69 : vector<8x256xf32>
    %c0_58 = arith.constant 0 : index
    %c0_59 = arith.constant 0 : index
    %71 = vector.load %arg4[%c0_58, %c0_59] : memref<8x1xf32, #tpu.memory_space<vmem>>, vector<8x1xf32>
    %72 = vector.broadcast %71 : vector<8x1xf32> to vector<8x256xf32>
    %73 = arith.addf %70, %72 : vector<8x256xf32>
    %cst_60 = arith.constant 0.000000e+00 : f32
    %74 = vector.broadcast %cst_60 : f32 to vector<8x256xf32>
    %75 = arith.maximumf %73, %74 : vector<8x256xf32>
    %76 = arith.truncf %75 : vector<8x256xf32> to vector<8x256xbf16>
    %c0_61 = arith.constant 0 : index
    %c128_62 = arith.constant 128 : index
    %77 = vector.load %arg9[%c0_61, %c128_62] : memref<8x512xbf16, #tpu.memory_space<vmem>>, vector<8x256xbf16>
    tpu.vector_store %arg9[%c0_61, %c128_62], %76 {strides = array<i32>} : memref<8x512xbf16, #tpu.memory_space<vmem>>, vector<8x256xbf16>,
    %c0_63 = arith.constant 0 : index
    %c111_64 = arith.constant 111 : index
    %78 = vector.load %arg9[%c0_63, %c111_64] : memref<8x512xbf16, #tpu.memory_space<vmem>>, vector<8x256xbf16>
    %79 = vector.broadcast %0 : vector<1x256xbf16> to vector<8x256xbf16>
    %80 = arith.mulf %78, %79 : vector<8x256xbf16>
    %c0_65 = arith.constant 0 : index
    %c0_66 = arith.constant 0 : index
    %c0_67 = arith.constant 0 : index
    %81 = vector.load %arg5[%c0_65, %c0_66, %c0_67] : memref<9x8x8xbf16, #tpu.memory_space<vmem>>, vector<1x8x8xbf16>
    %82 = vector.shape_cast %81 : vector<1x8x8xbf16> to vector<8x8xbf16>
    %cst_68 = arith.constant dense<0.000000e+00> : vector<8x256xf32>
    %83 = tpu.matmul %82, %80, %cst_68 {dimension_numbers = #tpu.dot_dimension_numbers<[1], [0], [0], [1], [0, 0, 1, 1], [], []>} : vector<8x8xbf16>, vector<8x256xbf16>, vector<8x256xf32> -> vector<8x256xf32>
    %c0_69 = arith.constant 0 : index
    %c112_70 = arith.constant 112 : index
    %84 = vector.load %arg9[%c0_69, %c112_70] : memref<8x512xbf16, #tpu.memory_space<vmem>>, vector<8x256xbf16>
    %c1_71 = arith.constant 1 : index
    %c0_72 = arith.constant 0 : index
    %c0_73 = arith.constant 0 : index
    %85 = vector.load %arg5[%c1_71, %c0_72, %c0_73] : memref<9x8x8xbf16, #tpu.memory_space<vmem>>, vector<1x8x8xbf16>
    %86 = vector.shape_cast %85 : vector<1x8x8xbf16> to vector<8x8xbf16>
    %cst_74 = arith.constant dense<0.000000e+00> : vector<8x256xf32>
    %87 = tpu.matmul %86, %84, %cst_74 {dimension_numbers = #tpu.dot_dimension_numbers<[1], [0], [0], [1], [0, 0, 1, 1], [], []>} : vector<8x8xbf16>, vector<8x256xbf16>, vector<8x256xf32> -> vector<8x256xf32>
    %88 = arith.addf %83, %87 : vector<8x256xf32>
    %c0_75 = arith.constant 0 : index
    %c113_76 = arith.constant 113 : index
    %89 = vector.load %arg9[%c0_75, %c113_76] : memref<8x512xbf16, #tpu.memory_space<vmem>>, vector<8x256xbf16>
    %90 = vector.broadcast %1 : vector<1x256xbf16> to vector<8x256xbf16>
    %91 = arith.mulf %89, %90 : vector<8x256xbf16>
    %c2_77 = arith.constant 2 : index
    %c0_78 = arith.constant 0 : index
    %c0_79 = arith.constant 0 : index
    %92 = vector.load %arg5[%c2_77, %c0_78, %c0_79] : memref<9x8x8xbf16, #tpu.memory_space<vmem>>, vector<1x8x8xbf16>
    %93 = vector.shape_cast %92 : vector<1x8x8xbf16> to vector<8x8xbf16>
    %cst_80 = arith.constant dense<0.000000e+00> : vector<8x256xf32>
    %94 = tpu.matmul %93, %91, %cst_80 {dimension_numbers = #tpu.dot_dimension_numbers<[1], [0], [0], [1], [0, 0, 1, 1], [], []>} : vector<8x8xbf16>, vector<8x256xbf16>, vector<8x256xf32> -> vector<8x256xf32>
    %95 = arith.addf %88, %94 : vector<8x256xf32>
    %c0_81 = arith.constant 0 : index
    %c127_82 = arith.constant 127 : index
    %96 = vector.load %arg9[%c0_81, %c127_82] : memref<8x512xbf16, #tpu.memory_space<vmem>>, vector<8x256xbf16>
    %97 = vector.broadcast %0 : vector<1x256xbf16> to vector<8x256xbf16>
    %98 = arith.mulf %96, %97 : vector<8x256xbf16>
    %c3_83 = arith.constant 3 : index
    %c0_84 = arith.constant 0 : index
    %c0_85 = arith.constant 0 : index
    %99 = vector.load %arg5[%c3_83, %c0_84, %c0_85] : memref<9x8x8xbf16, #tpu.memory_space<vmem>>, vector<1x8x8xbf16>
    %100 = vector.shape_cast %99 : vector<1x8x8xbf16> to vector<8x8xbf16>
    %cst_86 = arith.constant dense<0.000000e+00> : vector<8x256xf32>
    %101 = tpu.matmul %100, %98, %cst_86 {dimension_numbers = #tpu.dot_dimension_numbers<[1], [0], [0], [1], [0, 0, 1, 1], [], []>} : vector<8x8xbf16>, vector<8x256xbf16>, vector<8x256xf32> -> vector<8x256xf32>
    %102 = arith.addf %95, %101 : vector<8x256xf32>
    %c0_87 = arith.constant 0 : index
    %c128_88 = arith.constant 128 : index
    %103 = vector.load %arg9[%c0_87, %c128_88] : memref<8x512xbf16, #tpu.memory_space<vmem>>, vector<8x256xbf16>
    %c4_89 = arith.constant 4 : index
    %c0_90 = arith.constant 0 : index
    %c0_91 = arith.constant 0 : index
    %104 = vector.load %arg5[%c4_89, %c0_90, %c0_91] : memref<9x8x8xbf16, #tpu.memory_space<vmem>>, vector<1x8x8xbf16>
    %105 = vector.shape_cast %104 : vector<1x8x8xbf16> to vector<8x8xbf16>
    %cst_92 = arith.constant dense<0.000000e+00> : vector<8x256xf32>
    %106 = tpu.matmul %105, %103, %cst_92 {dimension_numbers = #tpu.dot_dimension_numbers<[1], [0], [0], [1], [0, 0, 1, 1], [], []>} : vector<8x8xbf16>, vector<8x256xbf16>, vector<8x256xf32> -> vector<8x256xf32>
    %107 = arith.addf %102, %106 : vector<8x256xf32>
    %c0_93 = arith.constant 0 : index
    %c129_94 = arith.constant 129 : index
    %108 = vector.load %arg9[%c0_93, %c129_94] : memref<8x512xbf16, #tpu.memory_space<vmem>>, vector<8x256xbf16>
    %109 = vector.broadcast %1 : vector<1x256xbf16> to vector<8x256xbf16>
    %110 = arith.mulf %108, %109 : vector<8x256xbf16>
    %c5_95 = arith.constant 5 : index
    %c0_96 = arith.constant 0 : index
    %c0_97 = arith.constant 0 : index
    %111 = vector.load %arg5[%c5_95, %c0_96, %c0_97] : memref<9x8x8xbf16, #tpu.memory_space<vmem>>, vector<1x8x8xbf16>
    %112 = vector.shape_cast %111 : vector<1x8x8xbf16> to vector<8x8xbf16>
    %cst_98 = arith.constant dense<0.000000e+00> : vector<8x256xf32>
    %113 = tpu.matmul %112, %110, %cst_98 {dimension_numbers = #tpu.dot_dimension_numbers<[1], [0], [0], [1], [0, 0, 1, 1], [], []>} : vector<8x8xbf16>, vector<8x256xbf16>, vector<8x256xf32> -> vector<8x256xf32>
    %114 = arith.addf %107, %113 : vector<8x256xf32>
    %c0_99 = arith.constant 0 : index
    %c143_100 = arith.constant 143 : index
    %115 = vector.load %arg9[%c0_99, %c143_100] : memref<8x512xbf16, #tpu.memory_space<vmem>>, vector<8x256xbf16>
    %116 = vector.broadcast %0 : vector<1x256xbf16> to vector<8x256xbf16>
    %117 = arith.mulf %115, %116 : vector<8x256xbf16>
    %c6_101 = arith.constant 6 : index
    %c0_102 = arith.constant 0 : index
    %c0_103 = arith.constant 0 : index
    %118 = vector.load %arg5[%c6_101, %c0_102, %c0_103] : memref<9x8x8xbf16, #tpu.memory_space<vmem>>, vector<1x8x8xbf16>
    %119 = vector.shape_cast %118 : vector<1x8x8xbf16> to vector<8x8xbf16>
    %cst_104 = arith.constant dense<0.000000e+00> : vector<8x256xf32>
    %120 = tpu.matmul %119, %117, %cst_104 {dimension_numbers = #tpu.dot_dimension_numbers<[1], [0], [0], [1], [0, 0, 1, 1], [], []>} : vector<8x8xbf16>, vector<8x256xbf16>, vector<8x256xf32> -> vector<8x256xf32>
    %121 = arith.addf %114, %120 : vector<8x256xf32>
    %c0_105 = arith.constant 0 : index
    %c144_106 = arith.constant 144 : index
    %122 = vector.load %arg9[%c0_105, %c144_106] : memref<8x512xbf16, #tpu.memory_space<vmem>>, vector<8x256xbf16>
    %c7_107 = arith.constant 7 : index
    %c0_108 = arith.constant 0 : index
    %c0_109 = arith.constant 0 : index
    %123 = vector.load %arg5[%c7_107, %c0_108, %c0_109] : memref<9x8x8xbf16, #tpu.memory_space<vmem>>, vector<1x8x8xbf16>
    %124 = vector.shape_cast %123 : vector<1x8x8xbf16> to vector<8x8xbf16>
    %cst_110 = arith.constant dense<0.000000e+00> : vector<8x256xf32>
    %125 = tpu.matmul %124, %122, %cst_110 {dimension_numbers = #tpu.dot_dimension_numbers<[1], [0], [0], [1], [0, 0, 1, 1], [], []>} : vector<8x8xbf16>, vector<8x256xbf16>, vector<8x256xf32> -> vector<8x256xf32>
    %126 = arith.addf %121, %125 : vector<8x256xf32>
    %c0_111 = arith.constant 0 : index
    %c145_112 = arith.constant 145 : index
    %127 = vector.load %arg9[%c0_111, %c145_112] : memref<8x512xbf16, #tpu.memory_space<vmem>>, vector<8x256xbf16>
    %128 = vector.broadcast %1 : vector<1x256xbf16> to vector<8x256xbf16>
    %129 = arith.mulf %127, %128 : vector<8x256xbf16>
    %c8_113 = arith.constant 8 : index
    %c0_114 = arith.constant 0 : index
    %c0_115 = arith.constant 0 : index
    %130 = vector.load %arg5[%c8_113, %c0_114, %c0_115] : memref<9x8x8xbf16, #tpu.memory_space<vmem>>, vector<1x8x8xbf16>
    %131 = vector.shape_cast %130 : vector<1x8x8xbf16> to vector<8x8xbf16>
    %cst_116 = arith.constant dense<0.000000e+00> : vector<8x256xf32>
    %132 = tpu.matmul %131, %129, %cst_116 {dimension_numbers = #tpu.dot_dimension_numbers<[1], [0], [0], [1], [0, 0, 1, 1], [], []>} : vector<8x8xbf16>, vector<8x256xbf16>, vector<8x256xf32> -> vector<8x256xf32>
    %133 = arith.addf %126, %132 : vector<8x256xf32>
    %c0_117 = arith.constant 0 : index
    %c0_118 = arith.constant 0 : index
    %134 = vector.load %arg6[%c0_117, %c0_118] : memref<8x1xf32, #tpu.memory_space<vmem>>, vector<8x1xf32>
    %135 = vector.broadcast %134 : vector<8x1xf32> to vector<8x256xf32>
    %136 = arith.addf %133, %135 : vector<8x256xf32>
    %cst_119 = arith.constant 0.000000e+00 : f32
    %137 = vector.broadcast %cst_119 : f32 to vector<8x256xf32>
    %138 = arith.maximumf %136, %137 : vector<8x256xf32>
    %139 = vector.shape_cast %138 : vector<8x256xf32> to vector<8x128x2xf32>
    %cst_120 = arith.constant dense<0xFF800000> : vector<8x128xf32>
    %140 = vector.multi_reduction <maximumf>, %139, %cst_120 [2] : vector<8x128x2xf32> to vector<8x128xf32>
    %141 = vector.shape_cast %140 : vector<8x128xf32> to vector<8x8x16xf32>
    %142 = vector.extract_strided_slice %141 {offsets = [0, 0, 0], sizes = [8, 8, 8], strides = [1, 1, 1]} : vector<8x8x16xf32> to vector<8x8x8xf32>
    %143 = vector.extract_strided_slice %141 {offsets = [0, 0, 8], sizes = [8, 8, 8], strides = [1, 1, 1]} : vector<8x8x16xf32> to vector<8x8x8xf32>
    %144 = arith.maximumf %142, %143 : vector<8x8x8xf32>
    %145 = vector.shape_cast %144 : vector<8x8x8xf32> to vector<8x64xf32>
    %c0_121 = arith.constant 0 : index
    %c0_122 = arith.constant 0 : index
    %c0_123 = arith.constant 0 : index
    %146 = vector.load %arg7[%c0_121, %c0_122, %c0_123] : memref<1x8x64xf32, #tpu.memory_space<vmem>>, vector<1x8x64xf32>
    %147 = vector.shape_cast %146 : vector<1x8x64xf32> to vector<8x64xf32>
    %148 = vector.shape_cast %145 : vector<8x64xf32> to vector<1x8x64xf32>
    tpu.vector_store %arg7[%c0_121, %c0_122, %c0_123], %148 {strides = array<i32>} : memref<1x8x64xf32, #tpu.memory_space<vmem>>, vector<1x8x64xf32>,
    return
  }
  func.func @transform_0(%arg0: i32) -> (i32, i32, i32) {
    %c0_i32 = arith.constant 0 : i32
    %c0_i32_0 = arith.constant 0 : i32
    %c0_i32_1 = arith.constant 0 : i32
    return %arg0, %c0_i32, %c0_i32_0 : i32, i32, i32
  }
  func.func @transform_1(%arg0: i32) -> (i32, i32) {
    %c0_i32 = arith.constant 0 : i32
    %c0_i32_0 = arith.constant 0 : i32
    %c0_i32_1 = arith.constant 0 : i32
    return %c0_i32, %c0_i32_0 : i32, i32
  }
  func.func @transform_2(%arg0: i32) -> (i32, i32, i32) {
    %c0_i32 = arith.constant 0 : i32
    %c0_i32_0 = arith.constant 0 : i32
    %c0_i32_1 = arith.constant 0 : i32
    %c0_i32_2 = arith.constant 0 : i32
    return %c0_i32, %c0_i32_0, %c0_i32_1 : i32, i32, i32
  }
  func.func @transform_3(%arg0: i32) -> (i32, i32) {
    %c0_i32 = arith.constant 0 : i32
    %c0_i32_0 = arith.constant 0 : i32
    %c0_i32_1 = arith.constant 0 : i32
    return %c0_i32, %c0_i32_0 : i32, i32
  }
  func.func @transform_4(%arg0: i32) -> (i32, i32, i32) {
    %c0_i32 = arith.constant 0 : i32
    %c0_i32_0 = arith.constant 0 : i32
    %c0_i32_1 = arith.constant 0 : i32
    %c0_i32_2 = arith.constant 0 : i32
    return %c0_i32, %c0_i32_0, %c0_i32_1 : i32, i32, i32
  }
  func.func @transform_5(%arg0: i32) -> (i32, i32) {
    %c0_i32 = arith.constant 0 : i32
    %c0_i32_0 = arith.constant 0 : i32
    %c0_i32_1 = arith.constant 0 : i32
    return %c0_i32, %c0_i32_0 : i32, i32
  }
  func.func @transform_6(%arg0: i32) -> (i32, i32, i32) {
    %c0_i32 = arith.constant 0 : i32
    %c0_i32_0 = arith.constant 0 : i32
    %c0_i32_1 = arith.constant 0 : i32
    return %arg0, %c0_i32, %c0_i32_0 : i32, i32, i32
  }
}

</mosaic_0001>

<llo_original>
// kernel: block_forward.1
$region0: #{block_forward.1}
  #allocation0 [shape = 'u32[]', space=smem, size = 0x4, offset = 0x4, fixed_abs, tag = 'smem constant byte address 0x4 - core index']
  #allocation1 [shape = 'u32[144,128]{1,0:T(1,128)}', space=vmem, size = 0x12000, scoped, tag = 'internal scratch']
  #allocation2 [shape = 'bf16[8,512]{1,0:T(8,128)(2,1)}', space=vmem, size = 0x2000, scoped, tag = 'scratch operand']
  #allocation3 [shape = 'bf16[8,512]{1,0:T(8,128)(2,1)}', space=vmem, size = 0x2000, scoped, tag = 'scratch operand']
  %s0 = inlined_call_operand.vmem [shape: bf16[2,4,256], index: 0, kind: input, shape index: {}]
  %s1 = inlined_call_operand.vmem [shape: bf16[2,256], index: 1, kind: input, shape index: {}]
  %s2 = inlined_call_operand.vmem [shape: bf16[9,8,8], index: 2, kind: input, shape index: {}]
  %s3 = inlined_call_operand.vmem [shape: f32[8,1], index: 3, kind: input, shape index: {}]
  %s4 = inlined_call_operand.vmem [shape: bf16[9,8,8], index: 4, kind: input, shape index: {}]
  %s5 = inlined_call_operand.vmem [shape: f32[8,1], index: 5, kind: input, shape index: {}]
  %s6 = inlined_call_operand.vmem [shape: f32[2,8,64], index: 6, kind: output, shape index: {}]
  %s7 = sld [smem:[#allocation0]]
  $region57: #{block_forward.1} parent=0
    _
  %s9 = ssub.s32 1, %s7
  %s10 = scalar_select 0, %s9, %s7
  loop: start=0, step=1, limit=4
  $region2: #{block_forward.1} parent=0 // loop_pre_header
    _
  $region3: #{block_forward.1} parent=0 // loop_header
    %s12 = sphi 0, %s16
    %p13 = scmp.ge.s32.totalorder %s12, 4
    %s22 = sphi 0, %s24
    %s25 = sphi 0, %s22
    %s26 = sphi 0, %s25
    %s42 = sphi 0, %s26
    %s46 = sphi 0, %s46
    %s48 = sphi 0, %s46
    %s49 = sphi 0, %s48
    %s63 = sphi 0, %s49
    %s67 = sphi 0, %s67
    %s69 = sphi 0, %s67
    %s70 = sphi 0, %s69
    %s84 = sphi 0, %s70
    %s88 = sphi 0, %s88
    %s90 = sphi 0, %s88
    %s91 = sphi 0, %s90
    %s105 = sphi 0, %s91
    %s109 = sphi 0, %s109
    %s111 = sphi 0, %s109
    %s112 = sphi 0, %s111
    %s126 = sphi 0, %s112
    %s130 = sphi 0, %s130
    %s132 = sphi 0, %s130
    %s133 = sphi 0, %s132
    %s147 = sphi 0, %s133
    %s153 = sphi 0, %s155
    %s156 = sphi 0, %s153
    %s157 = sphi 0, %s156
    %s173 = sphi 0, %s157
  $region4: #{block_forward.1} parent=0 // loop_header_branch
    %15 = sbr.rel (%p13) target = $region8
  $region5: #{block_forward.1} parent=0 // loop_body
    %s17 = ssub.s32 %s12, 1
    %s18 = ssub.s32 %s12, 2
    %s19 = sadd.s32 %s12, 1
    %s20 = ssub.s32 %s12, %s19
    %p21 = scmp.eq.s32.totalorder %s20, 0
    %s23 = sadd.s32 %s22, 1
    %s24 = scalar_select %p21, %s22, %s23
    %p27 = pneg %p21
    %p28 = scmp.eq.s32.totalorder %s12, 1
    %p29 = por %p27, %p28
    %p30 = scmp.ne.s32.totalorder %s22, %s25
    %p31 = scmp.eq.s32.totalorder %s12, 0
    %p32 = por %p30, %p31
    %p33 = scmp.ne.s32.totalorder %s22, %s25
    %p34 = scmp.eq.s32.totalorder %s17, 1
    %p35 = por %p33, %p34
    %p36 = scmp.ne.s32.totalorder %s25, %s26
    %p37 = scmp.eq.s32.totalorder %s17, 0
    %p38 = por %p36, %p37
    %p39 = scmp.ne.s32.totalorder %s25, %s26
    %p40 = scmp.eq.s32.totalorder %s18, 1
    %p41 = por %p39, %p40
    %p43 = scmp.ne.s32.totalorder %s26, %s42
    %p44 = scmp.eq.s32.totalorder %s18, 0
    %p45 = por %p43, %p44
    %s47 = sadd.s32 %s46, 1
    %p50 = scmp.eq.s32.totalorder %s12, 1
    %p51 = scmp.ne.s32.totalorder %s46, %s48
    %p52 = scmp.eq.s32.totalorder %s12, 0
    %p53 = por %p51, %p52
    %p54 = scmp.ne.s32.totalorder %s46, %s48
    %p55 = scmp.eq.s32.totalorder %s17, 1
    %p56 = por %p54, %p55
    %p57 = scmp.ne.s32.totalorder %s48, %s49
    %p58 = scmp.eq.s32.totalorder %s17, 0
    %p59 = por %p57, %p58
    %p60 = scmp.ne.s32.totalorder %s48, %s49
    %p61 = scmp.eq.s32.totalorder %s18, 1
    %p62 = por %p60, %p61
    %p64 = scmp.ne.s32.totalorder %s49, %s63
    %p65 = scmp.eq.s32.totalorder %s18, 0
    %p66 = por %p64, %p65
    %s68 = sadd.s32 %s67, 1
    %p71 = scmp.eq.s32.totalorder %s12, 1
    %p72 = scmp.ne.s32.totalorder %s67, %s69
    %p73 = scmp.eq.s32.totalorder %s12, 0
    %p74 = por %p72, %p73
    %p75 = scmp.ne.s32.totalorder %s67, %s69
    %p76 = scmp.eq.s32.totalorder %s17, 1
    %p77 = por %p75, %p76
    %p78 = scmp.ne.s32.totalorder %s69, %s70
    %p79 = scmp.eq.s32.totalorder %s17, 0
    %p80 = por %p78, %p79
    %p81 = scmp.ne.s32.totalorder %s69, %s70
    %p82 = scmp.eq.s32.totalorder %s18, 1
    %p83 = por %p81, %p82
    %p85 = scmp.ne.s32.totalorder %s70, %s84
    %p86 = scmp.eq.s32.totalorder %s18, 0
    %p87 = por %p85, %p86
    %s89 = sadd.s32 %s88, 1
    %p92 = scmp.eq.s32.totalorder %s12, 1
    %p93 = scmp.ne.s32.totalorder %s88, %s90
    %p94 = scmp.eq.s32.totalorder %s12, 0
    %p95 = por %p93, %p94
    %p96 = scmp.ne.s32.totalorder %s88, %s90
    %p97 = scmp.eq.s32.totalorder %s17, 1
    %p98 = por %p96, %p97
    %p99 = scmp.ne.s32.totalorder %s90, %s91
    %p100 = scmp.eq.s32.totalorder %s17, 0
    %p101 = por %p99, %p100
    %p102 = scmp.ne.s32.totalorder %s90, %s91
    %p103 = scmp.eq.s32.totalorder %s18, 1
    %p104 = por %p102, %p103
    %p106 = scmp.ne.s32.totalorder %s91, %s105
    %p107 = scmp.eq.s32.totalorder %s18, 0
    %p108 = por %p106, %p107
    %s110 = sadd.s32 %s109, 1
    %p113 = scmp.eq.s32.totalorder %s12, 1
    %p114 = scmp.ne.s32.totalorder %s109, %s111
    %p115 = scmp.eq.s32.totalorder %s12, 0
    %p116 = por %p114, %p115
    %p117 = scmp.ne.s32.totalorder %s109, %s111
    %p118 = scmp.eq.s32.totalorder %s17, 1
    %p119 = por %p117, %p118
    %p120 = scmp.ne.s32.totalorder %s111, %s112
    %p121 = scmp.eq.s32.totalorder %s17, 0
    %p122 = por %p120, %p121
    %p123 = scmp.ne.s32.totalorder %s111, %s112
    %p124 = scmp.eq.s32.totalorder %s18, 1
    %p125 = por %p123, %p124
    %p127 = scmp.ne.s32.totalorder %s112, %s126
    %p128 = scmp.eq.s32.totalorder %s18, 0
    %p129 = por %p127, %p128
    %s131 = sadd.s32 %s130, 1
    %p134 = scmp.eq.s32.totalorder %s12, 1
    %p135 = scmp.ne.s32.totalorder %s130, %s132
    %p136 = scmp.eq.s32.totalorder %s12, 0
    %p137 = por %p135, %p136
    %p138 = scmp.ne.s32.totalorder %s130, %s132
    %p139 = scmp.eq.s32.totalorder %s17, 1
    %p140 = por %p138, %p139
    %p141 = scmp.ne.s32.totalorder %s132, %s133
    %p142 = scmp.eq.s32.totalorder %s17, 0
    %p143 = por %p141, %p142
    %p144 = scmp.ne.s32.totalorder %s132, %s133
    %p145 = scmp.eq.s32.totalorder %s18, 1
    %p146 = por %p144, %p145
    %p148 = scmp.ne.s32.totalorder %s133, %s147
    %p149 = scmp.eq.s32.totalorder %s18, 0
    %p150 = por %p148, %p149
    %s151 = ssub.s32 %s12, %s19
    %p152 = scmp.eq.s32.totalorder %s151, 0
    %s154 = sadd.s32 %s153, 1
    %s155 = scalar_select %p152, %s153, %s154
    %p158 = pneg %p152
    %p159 = scmp.eq.s32.totalorder %s12, 1
    %p160 = por %p158, %p159
    %p161 = scmp.ne.s32.totalorder %s153, %s156
    %p162 = scmp.eq.s32.totalorder %s12, 0
    %p163 = por %p161, %p162
    %p164 = scmp.ne.s32.totalorder %s153, %s156
    %p165 = scmp.eq.s32.totalorder %s17, 1
    %p166 = por %p164, %p165
    %p167 = scmp.ne.s32.totalorder %s156, %s157
    %p168 = scmp.eq.s32.totalorder %s17, 0
    %p169 = por %p167, %p168
    %p170 = scmp.ne.s32.totalorder %s156, %s157
    %p171 = scmp.eq.s32.totalorder %s18, 1
    %p172 = por %p170, %p171
    %p174 = scmp.ne.s32.totalorder %s157, %s173
    %p175 = scmp.eq.s32.totalorder %s18, 0
    %p176 = por %p174, %p175
    %p177 = scmp.le.s32.totalorder 1, %s12
    %p178 = scmp.lt.s32.totalorder %s12, 3
    %p179 = pnand %p177, %p178
    %p180 = pneg %p179
    // Predicated region
    $region9: #{block_forward.1} parent=5 // pred_check
      _
    $region10: #{block_forward.1} parent=5 // pred_check_branch
      %182 = sbr.rel (%p179) target = $region12
    $region11: #{block_forward.1} parent=5 // pred_region
      %s183 = ssub.s32 %s12, 1
      // Predicated region
      $region13: #{block_forward.1} parent=11 // pred_check
        %p184 = pneg %p59
      $region14: #{block_forward.1} parent=11 // pred_check_branch
        %186 = sbr.rel (%p184) target = $region16
      $region15: #{block_forward.1} parent=11 // pred_region
        _
      $region16: #{block_forward.1} parent=11 // pred_fallthru
        _
      // Predicated region
      $region17: #{block_forward.1} parent=11 // pred_check
        %p187 = pneg %p80
      $region18: #{block_forward.1} parent=11 // pred_check_branch
        %189 = sbr.rel (%p187) target = $region20
      $region19: #{block_forward.1} parent=11 // pred_region
        _
      $region20: #{block_forward.1} parent=11 // pred_fallthru
        _
      // Predicated region
      $region21: #{block_forward.1} parent=11 // pred_check
        %p190 = pneg %p101
      $region22: #{block_forward.1} parent=11 // pred_check_branch
        %192 = sbr.rel (%p190) target = $region24
      $region23: #{block_forward.1} parent=11 // pred_region
        _
      $region24: #{block_forward.1} parent=11 // pred_fallthru
        _
      // Predicated region
      $region25: #{block_forward.1} parent=11 // pred_check
        %p193 = pneg %p122
      $region26: #{block_forward.1} parent=11 // pred_check_branch
        %195 = sbr.rel (%p193) target = $region28
      $region27: #{block_forward.1} parent=11 // pred_region
        _
      $region28: #{block_forward.1} parent=11 // pred_fallthru
        _
      // Predicated region
      $region29: #{block_forward.1} parent=11 // pred_check
        %p196 = pneg %p143
      $region30: #{block_forward.1} parent=11 // pred_check_branch
        %198 = sbr.rel (%p196) target = $region32
      $region31: #{block_forward.1} parent=11 // pred_region
        _
      $region32: #{block_forward.1} parent=11 // pred_fallthru
        _
    $region12: #{block_forward.1} parent=5 // pred_fallthru
      _
    %p199 = scmp.lt.s32.totalorder %s12, 2
    // Predicated region
    $region33: #{block_forward.1} parent=5 // pred_check
      %p200 = pneg %p199
    $region34: #{block_forward.1} parent=5 // pred_check_branch
      %202 = sbr.rel (%p200) target = $region36
    $region35: #{block_forward.1} parent=5 // pred_region
      // Predicated region
      $region37: #{block_forward.1} parent=35 // pred_check
        %p203 = pneg %p32
      $region38: #{block_forward.1} parent=35 // pred_check_branch
        %205 = sbr.rel (%p203) target = $region40
      $region39: #{block_forward.1} parent=35 // pred_region
        %p206 = scmp.lt.s32.totalorder %s12, 1
        %s207 = scalar_select %p206, %s12, 1
        %s208 = smul.addr %s207, 2
        %s209 = smul.addr %s208, 2
        %s210 = scalar_lea.vmem %s0, %s209
      $region40: #{block_forward.1} parent=35 // pred_fallthru
        _
    $region36: #{block_forward.1} parent=5 // pred_fallthru
      _
    %p211 = scmp.le.s32.totalorder 1, %s12
    %p212 = scmp.lt.s32.totalorder %s12, 3
    %p213 = pnand %p211, %p212
    %p214 = pneg %p213
    // Predicated region
    $region41: #{block_forward.1} parent=5 // pred_check
      _
    $region42: #{block_forward.1} parent=5 // pred_check_branch
      %216 = sbr.rel (%p213) target = $region44
    $region43: #{block_forward.1} parent=5 // pred_region
      %s217 = ssub.s32 %s12, 1
      %p218 = scmp.lt.s32.totalorder %s17, 1
      %s219 = scalar_select %p218, %s17, 1
      %s220 = smul.addr %s219, 2
      %s221 = smul.addr %s220, 2
      %s222 = scalar_lea.vmem %s0, %s221
      %p223 = pneg %p38
      %p224 = pneg %p35
      %p225 = pneg %p59
      %p226 = pneg %p56
      %p227 = pneg %p80
      %p228 = pneg %p77
      %p229 = pneg %p101
      %p230 = pneg %p98
      %p231 = pneg %p122
      %p232 = pneg %p119
      %p233 = pneg %p143
      %p234 = pneg %p140
      %p235 = pneg %p169
      %p236 = pneg %p166
      %p237 = scmp.lt.s32.totalorder %s17, 1
      %s238 = scalar_select %p237, %s17, 1
      %s239 = smul.addr %s238, 8
      %s240 = scalar_lea.vmem %s6, %s239
      %p241 = scmp.lt.s32.totalorder %s17, 1
      %s242 = scalar_select %p241, %s17, 1
      %s243 = smul.addr %s242, 2
      %s244 = smul.addr %s243, 2
      %s245 = scalar_lea.vmem %s0, %s244
      %p246 = scmp.lt.s32.totalorder %s17, 1
      %s247 = scalar_select %p246, %s17, 1
      %s248 = smul.addr %s247, 8
      %s249 = scalar_lea.vmem %s6, %s248
      %v251 = vld [vmem:[%s1] sm:$0x3]
      %252 = vst [vmem:[#allocation2] sm:$0xf] 0
      %253 = vst [vmem:[#allocation2 + $0xc] sm:$0xf] 0
      %254 = vst [vmem:[#allocation2] sm:$0xcc] 0
      %255 = vst [vmem:[#allocation2 + $0x8] sm:$0xcc] 0
      %256 = vst [vmem:[#allocation3] sm:$0xf] 0
      %257 = vst [vmem:[#allocation3 + $0xc] sm:$0xf] 0
      %v258 = vld [vmem:[%s245] sm:$0xf]
      %v261 = vunpack.c.l.s4 1983009808
      %v262 = vunpack.c.0.s8 %v261
      %v263 = vlaneseq
      %v264 = vshrl.u32 %v263, 7
      %v265 = vsub.s32 %v262, %v264
      %v266 = vrot.slane %v258, %v265
      %268 = vst [vmem:[#allocation2 + $0x4] sm:$0x33] %v266
      %v269 = vld [vmem:[#allocation2] sm:$0xff]
      %v270 = vld [vmem:[#allocation2 + $0x8] sm:$0xf]
      %v273 = vunpack.c.l.s4 1966171168
      %v274 = vunpack.c.0.s8 %v273
      %v275 = vlaneseq
      %v276 = vshrl.u32 %v275, 7
      %v277 = vsub.s32 %v274, %v276
      %v278 = vrot.slane %v251, %v277
      %v279 = vcombine.high %v278, %v278
      %v281 = vunpack.c.l.s4 1966171168
      %v282 = vunpack.c.0.s8 %v281
      %v283 = vlaneseq
      %v284 = vshrl.u32 %v283, 7
      %v285 = vsub.s32 %v282, %v284
      %v286 = vrot.slane %v278, %v285
      %v288 = vunpack.c.l.s4 1966171168
      %v289 = vunpack.c.0.s8 %v288
      %v290 = vlaneseq
      %v291 = vshrl.u32 %v290, 7
      %v292 = vsub.s32 %v289, %v291
      %v293 = vrot.slane %v279, %v292
      %v295 = vpack.i.b16 %v286, %v286
      %v297 = vlaneseq
      %v298 = vshrl.u32 %v297, 7
      %v299 = vsub.s32 0, %v298
      %v300 = vrot.slane %v295, %v299
      %v302 = vpack.i.b16 %v293, %v293
      %v304 = vlaneseq
      %v305 = vshrl.u32 %v304, 7
      %v306 = vsub.s32 0, %v305
      %v307 = vrot.slane %v302, %v306
      %v310 = vunpack.c.l.b16 %v300
      %v311 = vunpack.c.l.b16 %v307
      %v312 = vpack.c.b16 %v311, %v310
      %313 = vrot.lane.b32.xlu0 %v312, 111
      %v314 = vpop.permute.xlu0 %313
      %v315 = vrot.slane %v314, 4
      %vm316 = vcmask 908288
      %v317 = vsel %vm316, %v315, %v314
      %v320 = vmul.bf16 %v269, %v317
      %v321 = vmul.bf16 %v270, %v315
      %v322 = vld [vmem:[%s2] sm:$0xf]
      %s323 = scalar_lea.vmem %s2, 4
      %v324 = vld [vmem:[%s323] sm:$0xf]
      %v327 = vunpack.c.l.b16 %v269
      %v328 = vunpack.c.h.b16 %v269
      %v329 = vunpack.c.l.b16 %v270
      %v330 = vpack.c.b16 %v327, %v327
      %v331 = vpack.c.b16 %v328, %v328
      %v332 = vpack.c.b16 %v329, %v329
      %333 = vrot.lane.b32.xlu0 %v330, 16
      %v334 = vpop.permute.xlu0 %333
      %335 = vrot.lane.b32.xlu0 %v331, 16
      %v336 = vpop.permute.xlu0 %335
      %337 = vrot.lane.b32.xlu0 %v332, 16
      %v338 = vpop.permute.xlu0 %337
      %vm339 = vcmask 130048
      %v340 = vsel %vm339, %v334, %v336
      %v341 = vsel %vm339, %v336, %v338
      %vm342 = vcmask 64512
      %v344 = vsel %vm342, %v324, 0
      %vm346 = vcmask 1043456
      %v348 = vsel %vm346, %v340, 0
      %v351 = vsel %vm346, %v341, 0
      %353 = vmatprep.subr.bf16.mxu0 %v351
      %354 = vmatpush1.bf16.msra.mxu0 %v348
      %355 = vmatprep.subr.bf16.mxu0 0
      %356 = vmatpush1.bf16.msra.mxu0 0
      %357 = vmatprep.subr.bf16.mxu0 0
      %358 = vmatpush1.bf16.msra.mxu0 0
      %359 = vmatprep.subr.bf16.mxu0 0
      %360 = vmatpush1.bf16.msra.mxu0 0
      %361 = vmatprep.subr.bf16.mxu0 0
      %362 = vmatpush1.bf16.msra.mxu0 0
      %363 = vmatprep.subr.bf16.mxu0 0
      %364 = vmatpush1.bf16.msra.mxu0 0
      %365 = vmatprep.subr.bf16.mxu0 0
      %366 = vmatpush1.bf16.msra.mxu0 0
      %367 = vmatprep.subr.bf16.mxu0 0
      %368 = vmatpush1.bf16.msra.mxu0 0
      %369 = vmatprep.subr.bf16.mxu0 0
      %370 = vmatpush1.bf16.msra.mxu0 0
      %371 = vmatprep.subr.bf16.mxu0 0
      %372 = vmatpush1.bf16.msra.mxu0 0
      %373 = vmatprep.subr.bf16.mxu0 0
      %374 = vmatpush1.bf16.msra.mxu0 0
      %375 = vmatprep.subr.bf16.mxu0 0
      %376 = vmatpush1.bf16.msra.mxu0 0
      %377 = vmatprep.subr.bf16.mxu0 0
      %378 = vmatpush1.bf16.msra.mxu0 0
      %379 = vmatprep.subr.bf16.mxu0 0
      %380 = vmatpush1.bf16.msra.mxu0 0
      %381 = vmatprep.subr.bf16.mxu0 0
      %382 = vmatpush1.bf16.msra.mxu0 0
      %383 = vmatprep.subr.bf16.mxu0 0
      %384 = vmatpush1.bf16.msra.mxu0 0
      %385 = vmatprep.mubr.bf16.mxu0 0
      %386 = vmatmul.mubr.bf16.gmra.mrb[0].mxu0 %v344
      %v387 = vpop.f32.mrb[0].mxu0
      %v388 = vadd.f32 0.0, %v387
      %v389 = vpop.f32.mrb[0].mxu0
      %v390 = vadd.f32 0.0, %v389
      %v391 = vpop.f32.mrb[0].mxu0
      %v392 = vpop.f32.mrb[0].mxu0
      %393 = vdwg.mxu0
      %v396 = vunpack.c.l.b16 %v320
      %v397 = vunpack.c.h.b16 %v320
      %v398 = vunpack.c.l.b16 %v321
      %v399 = vpack.c.b16 %v396, %v396
      %v400 = vpack.c.b16 %v397, %v397
      %v401 = vpack.c.b16 %v398, %v398
      %402 = vrot.lane.b32.xlu0 %v399, 17
      %v403 = vpop.permute.xlu0 %402
      %404 = vrot.lane.b32.xlu0 %v400, 17
      %v405 = vpop.permute.xlu0 %404
      %406 = vrot.lane.b32.xlu0 %v401, 17
      %v407 = vpop.permute.xlu0 %406
      %vm408 = vcmask 138240
      %v409 = vsel %vm408, %v403, %v405
      %v410 = vsel %vm408, %v405, %v407
      %v412 = vsel %vm342, %v322, 0
      %v415 = vsel %vm346, %v409, 0
      %v418 = vsel %vm346, %v410, 0
      %420 = vmatprep.subr.bf16.mxu0 %v418
      %421 = vmatpush1.bf16.msra.mxu0 %v415
      %422 = vmatprep.subr.bf16.mxu0 0
      %423 = vmatpush1.bf16.msra.mxu0 0
      %424 = vmatprep.subr.bf16.mxu0 0
      %425 = vmatpush1.bf16.msra.mxu0 0
      %426 = vmatprep.subr.bf16.mxu0 0
      %427 = vmatpush1.bf16.msra.mxu0 0
      %428 = vmatprep.subr.bf16.mxu0 0
      %429 = vmatpush1.bf16.msra.mxu0 0
      %430 = vmatprep.subr.bf16.mxu0 0
      %431 = vmatpush1.bf16.msra.mxu0 0
      %432 = vmatprep.subr.bf16.mxu0 0
      %433 = vmatpush1.bf16.msra.mxu0 0
      %434 = vmatprep.subr.bf16.mxu0 0
      %435 = vmatpush1.bf16.msra.mxu0 0
      %436 = vmatprep.subr.bf16.mxu0 0
      %437 = vmatpush1.bf16.msra.mxu0 0
      %438 = vmatprep.subr.bf16.mxu0 0
      %439 = vmatpush1.bf16.msra.mxu0 0
      %440 = vmatprep.subr.bf16.mxu0 0
      %441 = vmatpush1.bf16.msra.mxu0 0
      %442 = vmatprep.subr.bf16.mxu0 0
      %443 = vmatpush1.bf16.msra.mxu0 0
      %444 = vmatprep.subr.bf16.mxu0 0
      %445 = vmatpush1.bf16.msra.mxu0 0
      %446 = vmatprep.subr.bf16.mxu0 0
      %447 = vmatpush1.bf16.msra.mxu0 0
      %448 = vmatprep.subr.bf16.mxu0 0
      %449 = vmatpush1.bf16.msra.mxu0 0
      %450 = vmatprep.subr.bf16.mxu0 0
      %451 = vmatpush1.bf16.msra.mxu0 0
      %452 = vmatprep.mubr.bf16.mxu0 0
      %453 = vmatmul.mubr.bf16.gmra.mrb[0].mxu0 %v412
      %v454 = vpop.f32.mrb[0].mxu0
      %v455 = vadd.f32 %v388, %v454
      %v456 = vpop.f32.mrb[0].mxu0
      %v457 = vadd.f32 %v390, %v456
      %v458 = vpop.f32.mrb[0].mxu0
      %v459 = vpop.f32.mrb[0].mxu0
      %460 = vdwg.mxu0
      %v461 = vshrl.u32 %v286, 16
      %v462 = vpack.i.b16 %v461, %v461
      %v464 = vlaneseq
      %v465 = vshrl.u32 %v464, 7
      %v466 = vsub.s32 0, %v465
      %v467 = vrot.slane %v462, %v466
      %v468 = vshrl.u32 %v293, 16
      %v469 = vpack.i.b16 %v468, %v468
      %v471 = vlaneseq
      %v472 = vshrl.u32 %v471, 7
      %v473 = vsub.s32 0, %v472
      %v474 = vrot.slane %v469, %v473
      %v477 = vunpack.c.l.b16 %v467
      %v478 = vunpack.c.l.b16 %v474
      %v479 = vpack.c.b16 %v478, %v477
      %480 = vrot.lane.b32.xlu0 %v479, 113
      %v481 = vpop.permute.xlu0 %480
      %v482 = vrot.slane %v481, 4
      %vm483 = vcmask 924672
      %v484 = vsel %vm483, %v482, %v481
      %v487 = vmul.bf16 %v269, %v484
      %v488 = vmul.bf16 %v270, %v482
      %s489 = scalar_lea.vmem %s2, 8
      %v490 = vld [vmem:[%s489] sm:$0xf]
      %v493 = vunpack.c.l.b16 %v487
      %v494 = vunpack.c.h.b16 %v487
      %v495 = vunpack.c.l.b16 %v488
      %v496 = vpack.c.b16 %v493, %v493
      %v497 = vpack.c.b16 %v494, %v494
      %v498 = vpack.c.b16 %v495, %v495
      %499 = vrot.lane.b32.xlu0 %v496, 15
      %v500 = vpop.permute.xlu0 %499
      %501 = vrot.lane.b32.xlu0 %v497, 15
      %v502 = vpop.permute.xlu0 %501
      %503 = vrot.lane.b32.xlu0 %v498, 15
      %v504 = vpop.permute.xlu0 %503
      %vm505 = vcmask 121856
      %v506 = vsel %vm505, %v500, %v502
      %v507 = vsel %vm505, %v502, %v504
      %v509 = vsel %vm342, %v490, 0
      %v512 = vsel %vm346, %v506, 0
      %v515 = vsel %vm346, %v507, 0
      %517 = vmatprep.subr.bf16.mxu0 %v515
      %518 = vmatpush1.bf16.msra.mxu0 %v512
      %519 = vmatprep.subr.bf16.mxu0 0
      %520 = vmatpush1.bf16.msra.mxu0 0
      %521 = vmatprep.subr.bf16.mxu0 0
      %522 = vmatpush1.bf16.msra.mxu0 0
      %523 = vmatprep.subr.bf16.mxu0 0
      %524 = vmatpush1.bf16.msra.mxu0 0
      %525 = vmatprep.subr.bf16.mxu0 0
      %526 = vmatpush1.bf16.msra.mxu0 0
      %527 = vmatprep.subr.bf16.mxu0 0
      %528 = vmatpush1.bf16.msra.mxu0 0
      %529 = vmatprep.subr.bf16.mxu0 0
      %530 = vmatpush1.bf16.msra.mxu0 0
      %531 = vmatprep.subr.bf16.mxu0 0
      %532 = vmatpush1.bf16.msra.mxu0 0
      %533 = vmatprep.subr.bf16.mxu0 0
      %534 = vmatpush1.bf16.msra.mxu0 0
      %535 = vmatprep.subr.bf16.mxu0 0
      %536 = vmatpush1.bf16.msra.mxu0 0
      %537 = vmatprep.subr.bf16.mxu0 0
      %538 = vmatpush1.bf16.msra.mxu0 0
      %539 = vmatprep.subr.bf16.mxu0 0
      %540 = vmatpush1.bf16.msra.mxu0 0
      %541 = vmatprep.subr.bf16.mxu0 0
      %542 = vmatpush1.bf16.msra.mxu0 0
      %543 = vmatprep.subr.bf16.mxu0 0
      %544 = vmatpush1.bf16.msra.mxu0 0
      %545 = vmatprep.subr.bf16.mxu0 0
      %546 = vmatpush1.bf16.msra.mxu0 0
      %547 = vmatprep.subr.bf16.mxu0 0
      %548 = vmatpush1.bf16.msra.mxu0 0
      %549 = vmatprep.mubr.bf16.mxu0 0
      %550 = vmatmul.mubr.bf16.gmra.mrb[0].mxu0 %v509
      %v551 = vpop.f32.mrb[0].mxu0
      %v552 = vadd.f32 0.0, %v551
      %v553 = vpop.f32.mrb[0].mxu0
      %v554 = vadd.f32 0.0, %v553
      %v555 = vpop.f32.mrb[0].mxu0
      %v556 = vpop.f32.mrb[0].mxu0
      %557 = vdwg.mxu0
      %v558 = vadd.f32 %v455, %v552
      %v559 = vadd.f32 %v457, %v554
      %v560 = vld [vmem:[#allocation2] sm:$0xff]
      %v561 = vld [vmem:[#allocation2 + $0x8] sm:$0xf]
      %562 = vrot.lane.b32.xlu0 %v312, 127
      %v563 = vpop.permute.xlu0 %562
      %v564 = vrot.slane %v563, 4
      %vm565 = vcmask 1039360
      %v566 = vsel %vm565, %v564, %v563
      %v569 = vmul.bf16 %v560, %v566
      %v570 = vmul.bf16 %v561, %v564
      %s571 = scalar_lea.vmem %s2, 12
      %v572 = vld [vmem:[%s571] sm:$0xf]
      %v575 = vunpack.c.l.b16 %v569
      %v576 = vunpack.c.h.b16 %v569
      %v577 = vunpack.c.l.b16 %v570
      %v578 = vpack.c.b16 %v575, %v575
      %v579 = vpack.c.b16 %v576, %v576
      %v580 = vpack.c.b16 %v577, %v577
      %581 = vrot.lane.b32.xlu0 %v578, 1
      %v582 = vpop.permute.xlu0 %581
      %583 = vrot.lane.b32.xlu0 %v579, 1
      %v584 = vpop.permute.xlu0 %583
      %585 = vrot.lane.b32.xlu0 %v580, 1
      %v586 = vpop.permute.xlu0 %585
      %vm587 = vcmask 7168
      %v588 = vsel %vm587, %v582, %v584
      %v589 = vsel %vm587, %v584, %v586
      %v591 = vsel %vm342, %v572, 0
      %v594 = vsel %vm346, %v588, 0
      %v597 = vsel %vm346, %v589, 0
      %599 = vmatprep.subr.bf16.mxu0 %v597
      %600 = vmatpush1.bf16.msra.mxu0 %v594
      %601 = vmatprep.subr.bf16.mxu0 0
      %602 = vmatpush1.bf16.msra.mxu0 0
      %603 = vmatprep.subr.bf16.mxu0 0
      %604 = vmatpush1.bf16.msra.mxu0 0
      %605 = vmatprep.subr.bf16.mxu0 0
      %606 = vmatpush1.bf16.msra.mxu0 0
      %607 = vmatprep.subr.bf16.mxu0 0
      %608 = vmatpush1.bf16.msra.mxu0 0
      %609 = vmatprep.subr.bf16.mxu0 0
      %610 = vmatpush1.bf16.msra.mxu0 0
      %611 = vmatprep.subr.bf16.mxu0 0
      %612 = vmatpush1.bf16.msra.mxu0 0
      %613 = vmatprep.subr.bf16.mxu0 0
      %614 = vmatpush1.bf16.msra.mxu0 0
      %615 = vmatprep.subr.bf16.mxu0 0
      %616 = vmatpush1.bf16.msra.mxu0 0
      %617 = vmatprep.subr.bf16.mxu0 0
      %618 = vmatpush1.bf16.msra.mxu0 0
      %619 = vmatprep.subr.bf16.mxu0 0
      %620 = vmatpush1.bf16.msra.mxu0 0
      %621 = vmatprep.subr.bf16.mxu0 0
      %622 = vmatpush1.bf16.msra.mxu0 0
      %623 = vmatprep.subr.bf16.mxu0 0
      %624 = vmatpush1.bf16.msra.mxu0 0
      %625 = vmatprep.subr.bf16.mxu0 0
      %626 = vmatpush1.bf16.msra.mxu0 0
      %627 = vmatprep.subr.bf16.mxu0 0
      %628 = vmatpush1.bf16.msra.mxu0 0
      %629 = vmatprep.subr.bf16.mxu0 0
      %630 = vmatpush1.bf16.msra.mxu0 0
      %631 = vmatprep.mubr.bf16.mxu0 0
      %632 = vmatmul.mubr.bf16.gmra.mrb[0].mxu0 %v591
      %v633 = vpop.f32.mrb[0].mxu0
      %v634 = vadd.f32 0.0, %v633
      %v635 = vpop.f32.mrb[0].mxu0
      %v636 = vadd.f32 0.0, %v635
      %v637 = vpop.f32.mrb[0].mxu0
      %v638 = vpop.f32.mrb[0].mxu0
      %639 = vdwg.mxu0
      %v640 = vadd.f32 %v558, %v634
      %v641 = vadd.f32 %v559, %v636
      %v642 = vld [vmem:[#allocation2 + $0x4] sm:$0xff]
      %s643 = scalar_lea.vmem %s2, 16
      %v644 = vld [vmem:[%s643] sm:$0xf]
      %v646 = vunpack.c.l.b16 %v642
      %v647 = vunpack.c.h.b16 %v642
      %v648 = vpack.c.b16 %v646, %v646
      %v649 = vpack.c.b16 %v647, %v647
      %v651 = vsel %vm342, %v644, 0
      %v654 = vsel %vm346, %v648, 0
      %v657 = vsel %vm346, %v649, 0
      %659 = vmatprep.subr.bf16.mxu0 %v657
      %660 = vmatpush1.bf16.msra.mxu0 %v654
      %661 = vmatprep.subr.bf16.mxu0 0
      %662 = vmatpush1.bf16.msra.mxu0 0
      %663 = vmatprep.subr.bf16.mxu0 0
      %664 = vmatpush1.bf16.msra.mxu0 0
      %665 = vmatprep.subr.bf16.mxu0 0
      %666 = vmatpush1.bf16.msra.mxu0 0
      %667 = vmatprep.subr.bf16.mxu0 0
      %668 = vmatpush1.bf16.msra.mxu0 0
      %669 = vmatprep.subr.bf16.mxu0 0
      %670 = vmatpush1.bf16.msra.mxu0 0
      %671 = vmatprep.subr.bf16.mxu0 0
      %672 = vmatpush1.bf16.msra.mxu0 0
      %673 = vmatprep.subr.bf16.mxu0 0
      %674 = vmatpush1.bf16.msra.mxu0 0
      %675 = vmatprep.subr.bf16.mxu0 0
      %676 = vmatpush1.bf16.msra.mxu0 0
      %677 = vmatprep.subr.bf16.mxu0 0
      %678 = vmatpush1.bf16.msra.mxu0 0
      %679 = vmatprep.subr.bf16.mxu0 0
      %680 = vmatpush1.bf16.msra.mxu0 0
      %681 = vmatprep.subr.bf16.mxu0 0
      %682 = vmatpush1.bf16.msra.mxu0 0
      %683 = vmatprep.subr.bf16.mxu0 0
      %684 = vmatpush1.bf16.msra.mxu0 0
      %685 = vmatprep.subr.bf16.mxu0 0
      %686 = vmatpush1.bf16.msra.mxu0 0
      %687 = vmatprep.subr.bf16.mxu0 0
      %688 = vmatpush1.bf16.msra.mxu0 0
      %689 = vmatprep.subr.bf16.mxu0 0
      %690 = vmatpush1.bf16.msra.mxu0 0
      %691 = vmatprep.mubr.bf16.mxu0 0
      %692 = vmatmul.mubr.bf16.gmra.mrb[0].mxu0 %v651
      %v693 = vpop.f32.mrb[0].mxu0
      %v694 = vadd.f32 0.0, %v693
      %v695 = vpop.f32.mrb[0].mxu0
      %v696 = vadd.f32 0.0, %v695
      %v697 = vpop.f32.mrb[0].mxu0
      %v698 = vpop.f32.mrb[0].mxu0
      %699 = vdwg.mxu0
      %v700 = vadd.f32 %v640, %v694
      %v701 = vadd.f32 %v641, %v696
      %v702 = vld [vmem:[#allocation2 + $0x4] sm:$0xff]
      %v703 = vld [vmem:[#allocation2 + $0xc] sm:$0xf]
      %704 = vrot.lane.b32.xlu0 %v479, 1
      %v705 = vpop.permute.xlu0 %704
      %v706 = vrot.slane %v705, 4
      %v707 = vsel %vm587, %v706, %v705
      %v710 = vmul.bf16 %v702, %v707
      %v711 = vmul.bf16 %v703, %v706
      %s712 = scalar_lea.vmem %s2, 20
      %v713 = vld [vmem:[%s712] sm:$0xf]
      %v716 = vunpack.c.l.b16 %v710
      %v717 = vunpack.c.h.b16 %v710
      %v718 = vunpack.c.l.b16 %v711
      %v719 = vpack.c.b16 %v716, %v716
      %v720 = vpack.c.b16 %v717, %v717
      %v721 = vpack.c.b16 %v718, %v718
      %722 = vrot.lane.b32.xlu0 %v719, 127
      %v723 = vpop.permute.xlu0 %722
      %724 = vrot.lane.b32.xlu0 %v720, 127
      %v725 = vpop.permute.xlu0 %724
      %726 = vrot.lane.b32.xlu0 %v721, 127
      %v727 = vpop.permute.xlu0 %726
      %v728 = vsel %vm565, %v723, %v725
      %v729 = vsel %vm565, %v725, %v727
      %v731 = vsel %vm342, %v713, 0
      %v734 = vsel %vm346, %v728, 0
      %v737 = vsel %vm346, %v729, 0
      %739 = vmatprep.subr.bf16.mxu0 %v737
      %740 = vmatpush1.bf16.msra.mxu0 %v734
      %741 = vmatprep.subr.bf16.mxu0 0
      %742 = vmatpush1.bf16.msra.mxu0 0
      %743 = vmatprep.subr.bf16.mxu0 0
      %744 = vmatpush1.bf16.msra.mxu0 0
      %745 = vmatprep.subr.bf16.mxu0 0
      %746 = vmatpush1.bf16.msra.mxu0 0
      %747 = vmatprep.subr.bf16.mxu0 0
      %748 = vmatpush1.bf16.msra.mxu0 0
      %749 = vmatprep.subr.bf16.mxu0 0
      %750 = vmatpush1.bf16.msra.mxu0 0
      %751 = vmatprep.subr.bf16.mxu0 0
      %752 = vmatpush1.bf16.msra.mxu0 0
      %753 = vmatprep.subr.bf16.mxu0 0
      %754 = vmatpush1.bf16.msra.mxu0 0
      %755 = vmatprep.subr.bf16.mxu0 0
      %756 = vmatpush1.bf16.msra.mxu0 0
      %757 = vmatprep.subr.bf16.mxu0 0
      %758 = vmatpush1.bf16.msra.mxu0 0
      %759 = vmatprep.subr.bf16.mxu0 0
      %760 = vmatpush1.bf16.msra.mxu0 0
      %761 = vmatprep.subr.bf16.mxu0 0
      %762 = vmatpush1.bf16.msra.mxu0 0
      %763 = vmatprep.subr.bf16.mxu0 0
      %764 = vmatpush1.bf16.msra.mxu0 0
      %765 = vmatprep.subr.bf16.mxu0 0
      %766 = vmatpush1.bf16.msra.mxu0 0
      %767 = vmatprep.subr.bf16.mxu0 0
      %768 = vmatpush1.bf16.msra.mxu0 0
      %769 = vmatprep.subr.bf16.mxu0 0
      %770 = vmatpush1.bf16.msra.mxu0 0
      %771 = vmatprep.mubr.bf16.mxu0 0
      %772 = vmatmul.mubr.bf16.gmra.mrb[0].mxu0 %v731
      %v773 = vpop.f32.mrb[0].mxu0
      %v774 = vadd.f32 0.0, %v773
      %v775 = vpop.f32.mrb[0].mxu0
      %v776 = vadd.f32 0.0, %v775
      %v777 = vpop.f32.mrb[0].mxu0
      %v778 = vpop.f32.mrb[0].mxu0
      %779 = vdwg.mxu0
      %v780 = vadd.f32 %v700, %v774
      %v781 = vadd.f32 %v701, %v776
      %782 = vrot.lane.b32.xlu0 %v312, 15
      %v783 = vpop.permute.xlu0 %782
      %v784 = vrot.slane %v783, 4
      %v785 = vsel %vm505, %v784, %v783
      %v788 = vmul.bf16 %v702, %v785
      %v789 = vmul.bf16 %v703, %v784
      %s790 = scalar_lea.vmem %s2, 24
      %v791 = vld [vmem:[%s790] sm:$0xf]
      %v794 = vunpack.c.l.b16 %v788
      %v795 = vunpack.c.h.b16 %v788
      %v796 = vunpack.c.l.b16 %v789
      %v797 = vpack.c.b16 %v794, %v794
      %v798 = vpack.c.b16 %v795, %v795
      %v799 = vpack.c.b16 %v796, %v796
      %800 = vrot.lane.b32.xlu0 %v797, 113
      %v801 = vpop.permute.xlu0 %800
      %802 = vrot.lane.b32.xlu0 %v798, 113
      %v803 = vpop.permute.xlu0 %802
      %804 = vrot.lane.b32.xlu0 %v799, 113
      %v805 = vpop.permute.xlu0 %804
      %v806 = vsel %vm483, %v801, %v803
      %v807 = vsel %vm483, %v803, %v805
      %v809 = vsel %vm342, %v791, 0
      %v812 = vsel %vm346, %v806, 0
      %v815 = vsel %vm346, %v807, 0
      %817 = vmatprep.subr.bf16.mxu0 %v815
      %818 = vmatpush1.bf16.msra.mxu0 %v812
      %819 = vmatprep.subr.bf16.mxu0 0
      %820 = vmatpush1.bf16.msra.mxu0 0
      %821 = vmatprep.subr.bf16.mxu0 0
      %822 = vmatpush1.bf16.msra.mxu0 0
      %823 = vmatprep.subr.bf16.mxu0 0
      %824 = vmatpush1.bf16.msra.mxu0 0
      %825 = vmatprep.subr.bf16.mxu0 0
      %826 = vmatpush1.bf16.msra.mxu0 0
      %827 = vmatprep.subr.bf16.mxu0 0
      %828 = vmatpush1.bf16.msra.mxu0 0
      %829 = vmatprep.subr.bf16.mxu0 0
      %830 = vmatpush1.bf16.msra.mxu0 0
      %831 = vmatprep.subr.bf16.mxu0 0
      %832 = vmatpush1.bf16.msra.mxu0 0
      %833 = vmatprep.subr.bf16.mxu0 0
      %834 = vmatpush1.bf16.msra.mxu0 0
      %835 = vmatprep.subr.bf16.mxu0 0
      %836 = vmatpush1.bf16.msra.mxu0 0
      %837 = vmatprep.subr.bf16.mxu0 0
      %838 = vmatpush1.bf16.msra.mxu0 0
      %839 = vmatprep.subr.bf16.mxu0 0
      %840 = vmatpush1.bf16.msra.mxu0 0
      %841 = vmatprep.subr.bf16.mxu0 0
      %842 = vmatpush1.bf16.msra.mxu0 0
      %843 = vmatprep.subr.bf16.mxu0 0
      %844 = vmatpush1.bf16.msra.mxu0 0
      %845 = vmatprep.subr.bf16.mxu0 0
      %846 = vmatpush1.bf16.msra.mxu0 0
      %847 = vmatprep.subr.bf16.mxu0 0
      %848 = vmatpush1.bf16.msra.mxu0 0
      %849 = vmatprep.mubr.bf16.mxu0 0
      %850 = vmatmul.mubr.bf16.gmra.mrb[0].mxu0 %v809
      %v851 = vpop.f32.mrb[0].mxu0
      %v852 = vadd.f32 0.0, %v851
      %v853 = vpop.f32.mrb[0].mxu0
      %v854 = vadd.f32 0.0, %v853
      %v855 = vpop.f32.mrb[0].mxu0
      %v856 = vpop.f32.mrb[0].mxu0
      %857 = vdwg.mxu0
      %v858 = vadd.f32 %v780, %v852
      %v859 = vadd.f32 %v781, %v854
      %s860 = scalar_lea.vmem %s2, 28
      %v861 = vld [vmem:[%s860] sm:$0xf]
      %v864 = vunpack.c.l.b16 %v702
      %v865 = vunpack.c.h.b16 %v702
      %v866 = vunpack.c.l.b16 %v703
      %v867 = vpack.c.b16 %v864, %v864
      %v868 = vpack.c.b16 %v865, %v865
      %v869 = vpack.c.b16 %v866, %v866
      %870 = vrot.lane.b32.xlu0 %v867, 112
      %v871 = vpop.permute.xlu0 %870
      %872 = vrot.lane.b32.xlu0 %v868, 112
      %v873 = vpop.permute.xlu0 %872
      %874 = vrot.lane.b32.xlu0 %v869, 112
      %v875 = vpop.permute.xlu0 %874
      %vm876 = vcmask 916480
      %v877 = vsel %vm876, %v871, %v873
      %v878 = vsel %vm876, %v873, %v875
      %v880 = vsel %vm342, %v861, 0
      %v883 = vsel %vm346, %v877, 0
      %v886 = vsel %vm346, %v878, 0
      %888 = vmatprep.subr.bf16.mxu0 %v886
      %889 = vmatpush1.bf16.msra.mxu0 %v883
      %890 = vmatprep.subr.bf16.mxu0 0
      %891 = vmatpush1.bf16.msra.mxu0 0
      %892 = vmatprep.subr.bf16.mxu0 0
      %893 = vmatpush1.bf16.msra.mxu0 0
      %894 = vmatprep.subr.bf16.mxu0 0
      %895 = vmatpush1.bf16.msra.mxu0 0
      %896 = vmatprep.subr.bf16.mxu0 0
      %897 = vmatpush1.bf16.msra.mxu0 0
      %898 = vmatprep.subr.bf16.mxu0 0
      %899 = vmatpush1.bf16.msra.mxu0 0
      %900 = vmatprep.subr.bf16.mxu0 0
      %901 = vmatpush1.bf16.msra.mxu0 0
      %902 = vmatprep.subr.bf16.mxu0 0
      %903 = vmatpush1.bf16.msra.mxu0 0
      %904 = vmatprep.subr.bf16.mxu0 0
      %905 = vmatpush1.bf16.msra.mxu0 0
      %906 = vmatprep.subr.bf16.mxu0 0
      %907 = vmatpush1.bf16.msra.mxu0 0
      %908 = vmatprep.subr.bf16.mxu0 0
      %909 = vmatpush1.bf16.msra.mxu0 0
      %910 = vmatprep.subr.bf16.mxu0 0
      %911 = vmatpush1.bf16.msra.mxu0 0
      %912 = vmatprep.subr.bf16.mxu0 0
      %913 = vmatpush1.bf16.msra.mxu0 0
      %914 = vmatprep.subr.bf16.mxu0 0
      %915 = vmatpush1.bf16.msra.mxu0 0
      %916 = vmatprep.subr.bf16.mxu0 0
      %917 = vmatpush1.bf16.msra.mxu0 0
      %918 = vmatprep.subr.bf16.mxu0 0
      %919 = vmatpush1.bf16.msra.mxu0 0
      %920 = vmatprep.mubr.bf16.mxu0 0
      %921 = vmatmul.mubr.bf16.gmra.mrb[0].mxu0 %v880
      %v922 = vpop.f32.mrb[0].mxu0
      %v923 = vadd.f32 0.0, %v922
      %v924 = vpop.f32.mrb[0].mxu0
      %v925 = vadd.f32 0.0, %v924
      %v926 = vpop.f32.mrb[0].mxu0
      %v927 = vpop.f32.mrb[0].mxu0
      %928 = vdwg.mxu0
      %v929 = vadd.f32 %v858, %v923
      %v930 = vadd.f32 %v859, %v925
      %931 = vrot.lane.b32.xlu0 %v479, 17
      %v932 = vpop.permute.xlu0 %931
      %v933 = vrot.slane %v932, 4
      %v934 = vsel %vm408, %v933, %v932
      %v937 = vmul.bf16 %v702, %v934
      %v938 = vmul.bf16 %v703, %v933
      %s939 = scalar_lea.vmem %s2, 32
      %v940 = vld [vmem:[%s939] sm:$0xf]
      %v943 = vunpack.c.l.b16 %v937
      %v944 = vunpack.c.h.b16 %v937
      %v945 = vunpack.c.l.b16 %v938
      %v946 = vpack.c.b16 %v943, %v943
      %v947 = vpack.c.b16 %v944, %v944
      %v948 = vpack.c.b16 %v945, %v945
      %949 = vrot.lane.b32.xlu0 %v946, 111
      %v950 = vpop.permute.xlu0 %949
      %951 = vrot.lane.b32.xlu0 %v947, 111
      %v952 = vpop.permute.xlu0 %951
      %953 = vrot.lane.b32.xlu0 %v948, 111
      %v954 = vpop.permute.xlu0 %953
      %v955 = vsel %vm316, %v950, %v952
      %v956 = vsel %vm316, %v952, %v954
      %v958 = vsel %vm342, %v940, 0
      %v961 = vsel %vm346, %v955, 0
      %v964 = vsel %vm346, %v956, 0
      %966 = vmatprep.subr.bf16.mxu0 %v964
      %967 = vmatpush1.bf16.msra.mxu0 %v961
      %968 = vmatprep.subr.bf16.mxu0 0
      %969 = vmatpush1.bf16.msra.mxu0 0
      %970 = vmatprep.subr.bf16.mxu0 0
      %971 = vmatpush1.bf16.msra.mxu0 0
      %972 = vmatprep.subr.bf16.mxu0 0
      %973 = vmatpush1.bf16.msra.mxu0 0
      %974 = vmatprep.subr.bf16.mxu0 0
      %975 = vmatpush1.bf16.msra.mxu0 0
      %976 = vmatprep.subr.bf16.mxu0 0
      %977 = vmatpush1.bf16.msra.mxu0 0
      %978 = vmatprep.subr.bf16.mxu0 0
      %979 = vmatpush1.bf16.msra.mxu0 0
      %980 = vmatprep.subr.bf16.mxu0 0
      %981 = vmatpush1.bf16.msra.mxu0 0
      %982 = vmatprep.subr.bf16.mxu0 0
      %983 = vmatpush1.bf16.msra.mxu0 0
      %984 = vmatprep.subr.bf16.mxu0 0
      %985 = vmatpush1.bf16.msra.mxu0 0
      %986 = vmatprep.subr.bf16.mxu0 0
      %987 = vmatpush1.bf16.msra.mxu0 0
      %988 = vmatprep.subr.bf16.mxu0 0
      %989 = vmatpush1.bf16.msra.mxu0 0
      %990 = vmatprep.subr.bf16.mxu0 0
      %991 = vmatpush1.bf16.msra.mxu0 0
      %992 = vmatprep.subr.bf16.mxu0 0
      %993 = vmatpush1.bf16.msra.mxu0 0
      %994 = vmatprep.subr.bf16.mxu0 0
      %995 = vmatpush1.bf16.msra.mxu0 0
      %996 = vmatprep.subr.bf16.mxu0 0
      %997 = vmatpush1.bf16.msra.mxu0 0
      %998 = vmatprep.mubr.bf16.mxu0 0
      %999 = vmatmul.mubr.bf16.gmra.mrb[0].mxu0 %v958
      %v1000 = vpop.f32.mrb[0].mxu0
      %v1001 = vadd.f32 0.0, %v1000
      %v1002 = vpop.f32.mrb[0].mxu0
      %v1003 = vadd.f32 0.0, %v1002
      %v1004 = vpop.f32.mrb[0].mxu0
      %v1005 = vpop.f32.mrb[0].mxu0
      %1006 = vdwg.mxu0
      %v1007 = vadd.f32 %v929, %v1001
      %v1008 = vadd.f32 %v930, %v1003
      %v1009 = vld [vmem:[%s3] sm:$0xff]
      %1011 = vset.pattern.permute.xlu0 0
      %1012 = vperm.xlu0 %1011, %v1009
      %v1013 = vpop.permute.xlu0 %1012
      %v1015 = vadd.f32 %v1007, %v1013
      %v1016 = vadd.f32 %v1008, %v1013
      %v1017 = vmax.f32 %v1015, 0.0
      %v1018 = vmax.f32 %v1016, 0.0
      %v1019 = vpack.c.bf16 %v1017, %v1017
      %v1020 = vpack.c.bf16 %v1018, %v1018
      %v1023 = vunpack.c.l.b16 %v1019
      %v1024 = vunpack.c.l.b16 %v1020
      %v1025 = vpack.c.b16 %v1024, %v1023
      %1027 = vst [vmem:[#allocation3 + $0x4] sm:$0xff] %v1025
      %v1028 = vld [vmem:[#allocation3] sm:$0xff]
      %v1029 = vld [vmem:[#allocation3 + $0x8] sm:$0xf]
      %v1030 = vmul.bf16 %v1028, %v317
      %v1031 = vmul.bf16 %v1029, %v315
      %v1032 = vld [vmem:[%s4] sm:$0xf]
      %s1033 = scalar_lea.vmem %s4, 4
      %v1034 = vld [vmem:[%s1033] sm:$0xf]
      %v1037 = vunpack.c.l.b16 %v1028
      %v1038 = vunpack.c.h.b16 %v1028
      %v1039 = vunpack.c.l.b16 %v1029
      %v1040 = vpack.c.b16 %v1037, %v1037
      %v1041 = vpack.c.b16 %v1038, %v1038
      %v1042 = vpack.c.b16 %v1039, %v1039
      %1043 = vrot.lane.b32.xlu0 %v1040, 16
      %v1044 = vpop.permute.xlu0 %1043
      %1045 = vrot.lane.b32.xlu0 %v1041, 16
      %v1046 = vpop.permute.xlu0 %1045
      %1047 = vrot.lane.b32.xlu0 %v1042, 16
      %v1048 = vpop.permute.xlu0 %1047
      %v1049 = vsel %vm339, %v1044, %v1046
      %v1050 = vsel %vm339, %v1046, %v1048
      %v1052 = vsel %vm342, %v1034, 0
      %v1055 = vsel %vm346, %v1049, 0
      %v1058 = vsel %vm346, %v1050, 0
      %1060 = vmatprep.subr.bf16.mxu0 %v1058
      %1061 = vmatpush1.bf16.msra.mxu0 %v1055
      %1062 = vmatprep.subr.bf16.mxu0 0
      %1063 = vmatpush1.bf16.msra.mxu0 0
      %1064 = vmatprep.subr.bf16.mxu0 0
      %1065 = vmatpush1.bf16.msra.mxu0 0
      %1066 = vmatprep.subr.bf16.mxu0 0
      %1067 = vmatpush1.bf16.msra.mxu0 0
      %1068 = vmatprep.subr.bf16.mxu0 0
      %1069 = vmatpush1.bf16.msra.mxu0 0
      %1070 = vmatprep.subr.bf16.mxu0 0
      %1071 = vmatpush1.bf16.msra.mxu0 0
      %1072 = vmatprep.subr.bf16.mxu0 0
      %1073 = vmatpush1.bf16.msra.mxu0 0
      %1074 = vmatprep.subr.bf16.mxu0 0
      %1075 = vmatpush1.bf16.msra.mxu0 0
      %1076 = vmatprep.subr.bf16.mxu0 0
      %1077 = vmatpush1.bf16.msra.mxu0 0
      %1078 = vmatprep.subr.bf16.mxu0 0
      %1079 = vmatpush1.bf16.msra.mxu0 0
      %1080 = vmatprep.subr.bf16.mxu0 0
      %1081 = vmatpush1.bf16.msra.mxu0 0
      %1082 = vmatprep.subr.bf16.mxu0 0
      %1083 = vmatpush1.bf16.msra.mxu0 0
      %1084 = vmatprep.subr.bf16.mxu0 0
      %1085 = vmatpush1.bf16.msra.mxu0 0
      %1086 = vmatprep.subr.bf16.mxu0 0
      %1087 = vmatpush1.bf16.msra.mxu0 0
      %1088 = vmatprep.subr.bf16.mxu0 0
      %1089 = vmatpush1.bf16.msra.mxu0 0
      %1090 = vmatprep.subr.bf16.mxu0 0
      %1091 = vmatpush1.bf16.msra.mxu0 0
      %1092 = vmatprep.mubr.bf16.mxu0 0
      %1093 = vmatmul.mubr.bf16.gmra.mrb[0].mxu0 %v1052
      %v1094 = vpop.f32.mrb[0].mxu0
      %v1095 = vadd.f32 0.0, %v1094
      %v1096 = vpop.f32.mrb[0].mxu0
      %v1097 = vadd.f32 0.0, %v1096
      %v1098 = vpop.f32.mrb[0].mxu0
      %v1099 = vpop.f32.mrb[0].mxu0
      %1100 = vdwg.mxu0
      %v1103 = vunpack.c.l.b16 %v1030
      %v1104 = vunpack.c.h.b16 %v1030
      %v1105 = vunpack.c.l.b16 %v1031
      %v1106 = vpack.c.b16 %v1103, %v1103
      %v1107 = vpack.c.b16 %v1104, %v1104
      %v1108 = vpack.c.b16 %v1105, %v1105
      %1109 = vrot.lane.b32.xlu0 %v1106, 17
      %v1110 = vpop.permute.xlu0 %1109
      %1111 = vrot.lane.b32.xlu0 %v1107, 17
      %v1112 = vpop.permute.xlu0 %1111
      %1113 = vrot.lane.b32.xlu0 %v1108, 17
      %v1114 = vpop.permute.xlu0 %1113
      %v1115 = vsel %vm408, %v1110, %v1112
      %v1116 = vsel %vm408, %v1112, %v1114
      %v1118 = vsel %vm342, %v1032, 0
      %v1121 = vsel %vm346, %v1115, 0
      %v1124 = vsel %vm346, %v1116, 0
      %1126 = vmatprep.subr.bf16.mxu0 %v1124
      %1127 = vmatpush1.bf16.msra.mxu0 %v1121
      %1128 = vmatprep.subr.bf16.mxu0 0
      %1129 = vmatpush1.bf16.msra.mxu0 0
      %1130 = vmatprep.subr.bf16.mxu0 0
      %1131 = vmatpush1.bf16.msra.mxu0 0
      %1132 = vmatprep.subr.bf16.mxu0 0
      %1133 = vmatpush1.bf16.msra.mxu0 0
      %1134 = vmatprep.subr.bf16.mxu0 0
      %1135 = vmatpush1.bf16.msra.mxu0 0
      %1136 = vmatprep.subr.bf16.mxu0 0
      %1137 = vmatpush1.bf16.msra.mxu0 0
      %1138 = vmatprep.subr.bf16.mxu0 0
      %1139 = vmatpush1.bf16.msra.mxu0 0
      %1140 = vmatprep.subr.bf16.mxu0 0
      %1141 = vmatpush1.bf16.msra.mxu0 0
      %1142 = vmatprep.subr.bf16.mxu0 0
      %1143 = vmatpush1.bf16.msra.mxu0 0
      %1144 = vmatprep.subr.bf16.mxu0 0
      %1145 = vmatpush1.bf16.msra.mxu0 0
      %1146 = vmatprep.subr.bf16.mxu0 0
      %1147 = vmatpush1.bf16.msra.mxu0 0
      %1148 = vmatprep.subr.bf16.mxu0 0
      %1149 = vmatpush1.bf16.msra.mxu0 0
      %1150 = vmatprep.subr.bf16.mxu0 0
      %1151 = vmatpush1.bf16.msra.mxu0 0
      %1152 = vmatprep.subr.bf16.mxu0 0
      %1153 = vmatpush1.bf16.msra.mxu0 0
      %1154 = vmatprep.subr.bf16.mxu0 0
      %1155 = vmatpush1.bf16.msra.mxu0 0
      %1156 = vmatprep.subr.bf16.mxu0 0
      %1157 = vmatpush1.bf16.msra.mxu0 0
      %1158 = vmatprep.mubr.bf16.mxu0 0
      %1159 = vmatmul.mubr.bf16.gmra.mrb[0].mxu0 %v1118
      %v1160 = vpop.f32.mrb[0].mxu0
      %v1161 = vadd.f32 %v1095, %v1160
      %v1162 = vpop.f32.mrb[0].mxu0
      %v1163 = vadd.f32 %v1097, %v1162
      %v1164 = vpop.f32.mrb[0].mxu0
      %v1165 = vpop.f32.mrb[0].mxu0
      %1166 = vdwg.mxu0
      %v1167 = vmul.bf16 %v1028, %v484
      %v1168 = vmul.bf16 %v1029, %v482
      %s1169 = scalar_lea.vmem %s4, 8
      %v1170 = vld [vmem:[%s1169] sm:$0xf]
      %v1173 = vunpack.c.l.b16 %v1167
      %v1174 = vunpack.c.h.b16 %v1167
      %v1175 = vunpack.c.l.b16 %v1168
      %v1176 = vpack.c.b16 %v1173, %v1173
      %v1177 = vpack.c.b16 %v1174, %v1174
      %v1178 = vpack.c.b16 %v1175, %v1175
      %1179 = vrot.lane.b32.xlu0 %v1176, 15
      %v1180 = vpop.permute.xlu0 %1179
      %1181 = vrot.lane.b32.xlu0 %v1177, 15
      %v1182 = vpop.permute.xlu0 %1181
      %1183 = vrot.lane.b32.xlu0 %v1178, 15
      %v1184 = vpop.permute.xlu0 %1183
      %v1185 = vsel %vm505, %v1180, %v1182
      %v1186 = vsel %vm505, %v1182, %v1184
      %v1188 = vsel %vm342, %v1170, 0
      %v1191 = vsel %vm346, %v1185, 0
      %v1194 = vsel %vm346, %v1186, 0
      %1196 = vmatprep.subr.bf16.mxu0 %v1194
      %1197 = vmatpush1.bf16.msra.mxu0 %v1191
      %1198 = vmatprep.subr.bf16.mxu0 0
      %1199 = vmatpush1.bf16.msra.mxu0 0
      %1200 = vmatprep.subr.bf16.mxu0 0
      %1201 = vmatpush1.bf16.msra.mxu0 0
      %1202 = vmatprep.subr.bf16.mxu0 0
      %1203 = vmatpush1.bf16.msra.mxu0 0
      %1204 = vmatprep.subr.bf16.mxu0 0
      %1205 = vmatpush1.bf16.msra.mxu0 0
      %1206 = vmatprep.subr.bf16.mxu0 0
      %1207 = vmatpush1.bf16.msra.mxu0 0
      %1208 = vmatprep.subr.bf16.mxu0 0
      %1209 = vmatpush1.bf16.msra.mxu0 0
      %1210 = vmatprep.subr.bf16.mxu0 0
      %1211 = vmatpush1.bf16.msra.mxu0 0
      %1212 = vmatprep.subr.bf16.mxu0 0
      %1213 = vmatpush1.bf16.msra.mxu0 0
      %1214 = vmatprep.subr.bf16.mxu0 0
      %1215 = vmatpush1.bf16.msra.mxu0 0
      %1216 = vmatprep.subr.bf16.mxu0 0
      %1217 = vmatpush1.bf16.msra.mxu0 0
      %1218 = vmatprep.subr.bf16.mxu0 0
      %1219 = vmatpush1.bf16.msra.mxu0 0
      %1220 = vmatprep.subr.bf16.mxu0 0
      %1221 = vmatpush1.bf16.msra.mxu0 0
      %1222 = vmatprep.subr.bf16.mxu0 0
      %1223 = vmatpush1.bf16.msra.mxu0 0
      %1224 = vmatprep.subr.bf16.mxu0 0
      %1225 = vmatpush1.bf16.msra.mxu0 0
      %1226 = vmatprep.subr.bf16.mxu0 0
      %1227 = vmatpush1.bf16.msra.mxu0 0
      %1228 = vmatprep.mubr.bf16.mxu0 0
      %1229 = vmatmul.mubr.bf16.gmra.mrb[0].mxu0 %v1188
      %v1230 = vpop.f32.mrb[0].mxu0
      %v1231 = vadd.f32 0.0, %v1230
      %v1232 = vpop.f32.mrb[0].mxu0
      %v1233 = vadd.f32 0.0, %v1232
      %v1234 = vpop.f32.mrb[0].mxu0
      %v1235 = vpop.f32.mrb[0].mxu0
      %1236 = vdwg.mxu0
      %v1237 = vadd.f32 %v1161, %v1231
      %v1238 = vadd.f32 %v1163, %v1233
      %v1239 = vmul.bf16 %v1028, %v566
      %v1240 = vmul.bf16 %v1029, %v564
      %s1241 = scalar_lea.vmem %s4, 12
      %v1242 = vld [vmem:[%s1241] sm:$0xf]
      %v1245 = vunpack.c.l.b16 %v1239
      %v1246 = vunpack.c.h.b16 %v1239
      %v1247 = vunpack.c.l.b16 %v1240
      %v1248 = vpack.c.b16 %v1245, %v1245
      %v1249 = vpack.c.b16 %v1246, %v1246
      %v1250 = vpack.c.b16 %v1247, %v1247
      %1251 = vrot.lane.b32.xlu0 %v1248, 1
      %v1252 = vpop.permute.xlu0 %1251
      %1253 = vrot.lane.b32.xlu0 %v1249, 1
      %v1254 = vpop.permute.xlu0 %1253
      %1255 = vrot.lane.b32.xlu0 %v1250, 1
      %v1256 = vpop.permute.xlu0 %1255
      %v1257 = vsel %vm587, %v1252, %v1254
      %v1258 = vsel %vm587, %v1254, %v1256
      %v1260 = vsel %vm342, %v1242, 0
      %v1263 = vsel %vm346, %v1257, 0
      %v1266 = vsel %vm346, %v1258, 0
      %1268 = vmatprep.subr.bf16.mxu0 %v1266
      %1269 = vmatpush1.bf16.msra.mxu0 %v1263
      %1270 = vmatprep.subr.bf16.mxu0 0
      %1271 = vmatpush1.bf16.msra.mxu0 0
      %1272 = vmatprep.subr.bf16.mxu0 0
      %1273 = vmatpush1.bf16.msra.mxu0 0
      %1274 = vmatprep.subr.bf16.mxu0 0
      %1275 = vmatpush1.bf16.msra.mxu0 0
      %1276 = vmatprep.subr.bf16.mxu0 0
      %1277 = vmatpush1.bf16.msra.mxu0 0
      %1278 = vmatprep.subr.bf16.mxu0 0
      %1279 = vmatpush1.bf16.msra.mxu0 0
      %1280 = vmatprep.subr.bf16.mxu0 0
      %1281 = vmatpush1.bf16.msra.mxu0 0
      %1282 = vmatprep.subr.bf16.mxu0 0
      %1283 = vmatpush1.bf16.msra.mxu0 0
      %1284 = vmatprep.subr.bf16.mxu0 0
      %1285 = vmatpush1.bf16.msra.mxu0 0
      %1286 = vmatprep.subr.bf16.mxu0 0
      %1287 = vmatpush1.bf16.msra.mxu0 0
      %1288 = vmatprep.subr.bf16.mxu0 0
      %1289 = vmatpush1.bf16.msra.mxu0 0
      %1290 = vmatprep.subr.bf16.mxu0 0
      %1291 = vmatpush1.bf16.msra.mxu0 0
      %1292 = vmatprep.subr.bf16.mxu0 0
      %1293 = vmatpush1.bf16.msra.mxu0 0
      %1294 = vmatprep.subr.bf16.mxu0 0
      %1295 = vmatpush1.bf16.msra.mxu0 0
      %1296 = vmatprep.subr.bf16.mxu0 0
      %1297 = vmatpush1.bf16.msra.mxu0 0
      %1298 = vmatprep.subr.bf16.mxu0 0
      %1299 = vmatpush1.bf16.msra.mxu0 0
      %1300 = vmatprep.mubr.bf16.mxu0 0
      %1301 = vmatmul.mubr.bf16.gmra.mrb[0].mxu0 %v1260
      %v1302 = vpop.f32.mrb[0].mxu0
      %v1303 = vadd.f32 0.0, %v1302
      %v1304 = vpop.f32.mrb[0].mxu0
      %v1305 = vadd.f32 0.0, %v1304
      %v1306 = vpop.f32.mrb[0].mxu0
      %v1307 = vpop.f32.mrb[0].mxu0
      %1308 = vdwg.mxu0
      %v1309 = vadd.f32 %v1237, %v1303
      %v1310 = vadd.f32 %v1238, %v1305
      %v1311 = vld [vmem:[#allocation3 + $0x4] sm:$0xff]
      %s1312 = scalar_lea.vmem %s4, 16
      %v1313 = vld [vmem:[%s1312] sm:$0xf]
      %v1315 = vunpack.c.l.b16 %v1311
      %v1316 = vunpack.c.h.b16 %v1311
      %v1317 = vpack.c.b16 %v1315, %v1315
      %v1318 = vpack.c.b16 %v1316, %v1316
      %v1320 = vsel %vm342, %v1313, 0
      %v1323 = vsel %vm346, %v1317, 0
      %v1326 = vsel %vm346, %v1318, 0
      %1328 = vmatprep.subr.bf16.mxu0 %v1326
      %1329 = vmatpush1.bf16.msra.mxu0 %v1323
      %1330 = vmatprep.subr.bf16.mxu0 0
      %1331 = vmatpush1.bf16.msra.mxu0 0
      %1332 = vmatprep.subr.bf16.mxu0 0
      %1333 = vmatpush1.bf16.msra.mxu0 0
      %1334 = vmatprep.subr.bf16.mxu0 0
      %1335 = vmatpush1.bf16.msra.mxu0 0
      %1336 = vmatprep.subr.bf16.mxu0 0
      %1337 = vmatpush1.bf16.msra.mxu0 0
      %1338 = vmatprep.subr.bf16.mxu0 0
      %1339 = vmatpush1.bf16.msra.mxu0 0
      %1340 = vmatprep.subr.bf16.mxu0 0
      %1341 = vmatpush1.bf16.msra.mxu0 0
      %1342 = vmatprep.subr.bf16.mxu0 0
      %1343 = vmatpush1.bf16.msra.mxu0 0
      %1344 = vmatprep.subr.bf16.mxu0 0
      %1345 = vmatpush1.bf16.msra.mxu0 0
      %1346 = vmatprep.subr.bf16.mxu0 0
      %1347 = vmatpush1.bf16.msra.mxu0 0
      %1348 = vmatprep.subr.bf16.mxu0 0
      %1349 = vmatpush1.bf16.msra.mxu0 0
      %1350 = vmatprep.subr.bf16.mxu0 0
      %1351 = vmatpush1.bf16.msra.mxu0 0
      %1352 = vmatprep.subr.bf16.mxu0 0
      %1353 = vmatpush1.bf16.msra.mxu0 0
      %1354 = vmatprep.subr.bf16.mxu0 0
      %1355 = vmatpush1.bf16.msra.mxu0 0
      %1356 = vmatprep.subr.bf16.mxu0 0
      %1357 = vmatpush1.bf16.msra.mxu0 0
      %1358 = vmatprep.subr.bf16.mxu0 0
      %1359 = vmatpush1.bf16.msra.mxu0 0
      %1360 = vmatprep.mubr.bf16.mxu0 0
      %1361 = vmatmul.mubr.bf16.gmra.mrb[0].mxu0 %v1320
      %v1362 = vpop.f32.mrb[0].mxu0
      %v1363 = vadd.f32 0.0, %v1362
      %v1364 = vpop.f32.mrb[0].mxu0
      %v1365 = vadd.f32 0.0, %v1364
      %v1366 = vpop.f32.mrb[0].mxu0
      %v1367 = vpop.f32.mrb[0].mxu0
      %1368 = vdwg.mxu0
      %v1369 = vadd.f32 %v1309, %v1363
      %v1370 = vadd.f32 %v1310, %v1365
      %v1371 = vld [vmem:[#allocation3 + $0x4] sm:$0xff]
      %v1372 = vld [vmem:[#allocation3 + $0xc] sm:$0xf]
      %v1373 = vmul.bf16 %v1371, %v707
      %v1374 = vmul.bf16 %v1372, %v706
      %s1375 = scalar_lea.vmem %s4, 20
      %v1376 = vld [vmem:[%s1375] sm:$0xf]
      %v1379 = vunpack.c.l.b16 %v1373
      %v1380 = vunpack.c.h.b16 %v1373
      %v1381 = vunpack.c.l.b16 %v1374
      %v1382 = vpack.c.b16 %v1379, %v1379
      %v1383 = vpack.c.b16 %v1380, %v1380
      %v1384 = vpack.c.b16 %v1381, %v1381
      %1385 = vrot.lane.b32.xlu0 %v1382, 127
      %v1386 = vpop.permute.xlu0 %1385
      %1387 = vrot.lane.b32.xlu0 %v1383, 127
      %v1388 = vpop.permute.xlu0 %1387
      %1389 = vrot.lane.b32.xlu0 %v1384, 127
      %v1390 = vpop.permute.xlu0 %1389
      %v1391 = vsel %vm565, %v1386, %v1388
      %v1392 = vsel %vm565, %v1388, %v1390
      %v1394 = vsel %vm342, %v1376, 0
      %v1397 = vsel %vm346, %v1391, 0
      %v1400 = vsel %vm346, %v1392, 0
      %1402 = vmatprep.subr.bf16.mxu0 %v1400
      %1403 = vmatpush1.bf16.msra.mxu0 %v1397
      %1404 = vmatprep.subr.bf16.mxu0 0
      %1405 = vmatpush1.bf16.msra.mxu0 0
      %1406 = vmatprep.subr.bf16.mxu0 0
      %1407 = vmatpush1.bf16.msra.mxu0 0
      %1408 = vmatprep.subr.bf16.mxu0 0
      %1409 = vmatpush1.bf16.msra.mxu0 0
      %1410 = vmatprep.subr.bf16.mxu0 0
      %1411 = vmatpush1.bf16.msra.mxu0 0
      %1412 = vmatprep.subr.bf16.mxu0 0
      %1413 = vmatpush1.bf16.msra.mxu0 0
      %1414 = vmatprep.subr.bf16.mxu0 0
      %1415 = vmatpush1.bf16.msra.mxu0 0
      %1416 = vmatprep.subr.bf16.mxu0 0
      %1417 = vmatpush1.bf16.msra.mxu0 0
      %1418 = vmatprep.subr.bf16.mxu0 0
      %1419 = vmatpush1.bf16.msra.mxu0 0
      %1420 = vmatprep.subr.bf16.mxu0 0
      %1421 = vmatpush1.bf16.msra.mxu0 0
      %1422 = vmatprep.subr.bf16.mxu0 0
      %1423 = vmatpush1.bf16.msra.mxu0 0
      %1424 = vmatprep.subr.bf16.mxu0 0
      %1425 = vmatpush1.bf16.msra.mxu0 0
      %1426 = vmatprep.subr.bf16.mxu0 0
      %1427 = vmatpush1.bf16.msra.mxu0 0
      %1428 = vmatprep.subr.bf16.mxu0 0
      %1429 = vmatpush1.bf16.msra.mxu0 0
      %1430 = vmatprep.subr.bf16.mxu0 0
      %1431 = vmatpush1.bf16.msra.mxu0 0
      %1432 = vmatprep.subr.bf16.mxu0 0
      %1433 = vmatpush1.bf16.msra.mxu0 0
      %1434 = vmatprep.mubr.bf16.mxu0 0
      %1435 = vmatmul.mubr.bf16.gmra.mrb[0].mxu0 %v1394
      %v1436 = vpop.f32.mrb[0].mxu0
      %v1437 = vadd.f32 0.0, %v1436
      %v1438 = vpop.f32.mrb[0].mxu0
      %v1439 = vadd.f32 0.0, %v1438
      %v1440 = vpop.f32.mrb[0].mxu0
      %v1441 = vpop.f32.mrb[0].mxu0
      %1442 = vdwg.mxu0
      %v1443 = vadd.f32 %v1369, %v1437
      %v1444 = vadd.f32 %v1370, %v1439
      %v1445 = vmul.bf16 %v1371, %v785
      %v1446 = vmul.bf16 %v1372, %v784
      %s1447 = scalar_lea.vmem %s4, 24
      %v1448 = vld [vmem:[%s1447] sm:$0xf]
      %v1451 = vunpack.c.l.b16 %v1445
      %v1452 = vunpack.c.h.b16 %v1445
      %v1453 = vunpack.c.l.b16 %v1446
      %v1454 = vpack.c.b16 %v1451, %v1451
      %v1455 = vpack.c.b16 %v1452, %v1452
      %v1456 = vpack.c.b16 %v1453, %v1453
      %1457 = vrot.lane.b32.xlu0 %v1454, 113
      %v1458 = vpop.permute.xlu0 %1457
      %1459 = vrot.lane.b32.xlu0 %v1455, 113
      %v1460 = vpop.permute.xlu0 %1459
      %1461 = vrot.lane.b32.xlu0 %v1456, 113
      %v1462 = vpop.permute.xlu0 %1461
      %v1463 = vsel %vm483, %v1458, %v1460
      %v1464 = vsel %vm483, %v1460, %v1462
      %v1466 = vsel %vm342, %v1448, 0
      %v1469 = vsel %vm346, %v1463, 0
      %v1472 = vsel %vm346, %v1464, 0
      %1474 = vmatprep.subr.bf16.mxu0 %v1472
      %1475 = vmatpush1.bf16.msra.mxu0 %v1469
      %1476 = vmatprep.subr.bf16.mxu0 0
      %1477 = vmatpush1.bf16.msra.mxu0 0
      %1478 = vmatprep.subr.bf16.mxu0 0
      %1479 = vmatpush1.bf16.msra.mxu0 0
      %1480 = vmatprep.subr.bf16.mxu0 0
      %1481 = vmatpush1.bf16.msra.mxu0 0
      %1482 = vmatprep.subr.bf16.mxu0 0
      %1483 = vmatpush1.bf16.msra.mxu0 0
      %1484 = vmatprep.subr.bf16.mxu0 0
      %1485 = vmatpush1.bf16.msra.mxu0 0
      %1486 = vmatprep.subr.bf16.mxu0 0
      %1487 = vmatpush1.bf16.msra.mxu0 0
      %1488 = vmatprep.subr.bf16.mxu0 0
      %1489 = vmatpush1.bf16.msra.mxu0 0
      %1490 = vmatprep.subr.bf16.mxu0 0
      %1491 = vmatpush1.bf16.msra.mxu0 0
      %1492 = vmatprep.subr.bf16.mxu0 0
      %1493 = vmatpush1.bf16.msra.mxu0 0
      %1494 = vmatprep.subr.bf16.mxu0 0
      %1495 = vmatpush1.bf16.msra.mxu0 0
      %1496 = vmatprep.subr.bf16.mxu0 0
      %1497 = vmatpush1.bf16.msra.mxu0 0
      %1498 = vmatprep.subr.bf16.mxu0 0
      %1499 = vmatpush1.bf16.msra.mxu0 0
      %1500 = vmatprep.subr.bf16.mxu0 0
      %1501 = vmatpush1.bf16.msra.mxu0 0
      %1502 = vmatprep.subr.bf16.mxu0 0
      %1503 = vmatpush1.bf16.msra.mxu0 0
      %1504 = vmatprep.subr.bf16.mxu0 0
      %1505 = vmatpush1.bf16.msra.mxu0 0
      %1506 = vmatprep.mubr.bf16.mxu0 0
      %1507 = vmatmul.mubr.bf16.gmra.mrb[0].mxu0 %v1466
      %v1508 = vpop.f32.mrb[0].mxu0
      %v1509 = vadd.f32 0.0, %v1508
      %v1510 = vpop.f32.mrb[0].mxu0
      %v1511 = vadd.f32 0.0, %v1510
      %v1512 = vpop.f32.mrb[0].mxu0
      %v1513 = vpop.f32.mrb[0].mxu0
      %1514 = vdwg.mxu0
      %v1515 = vadd.f32 %v1443, %v1509
      %v1516 = vadd.f32 %v1444, %v1511
      %s1517 = scalar_lea.vmem %s4, 28
      %v1518 = vld [vmem:[%s1517] sm:$0xf]
      %v1521 = vunpack.c.l.b16 %v1371
      %v1522 = vunpack.c.h.b16 %v1371
      %v1523 = vunpack.c.l.b16 %v1372
      %v1524 = vpack.c.b16 %v1521, %v1521
      %v1525 = vpack.c.b16 %v1522, %v1522
      %v1526 = vpack.c.b16 %v1523, %v1523
      %1527 = vrot.lane.b32.xlu0 %v1524, 112
      %v1528 = vpop.permute.xlu0 %1527
      %1529 = vrot.lane.b32.xlu0 %v1525, 112
      %v1530 = vpop.permute.xlu0 %1529
      %1531 = vrot.lane.b32.xlu0 %v1526, 112
      %v1532 = vpop.permute.xlu0 %1531
      %v1533 = vsel %vm876, %v1528, %v1530
      %v1534 = vsel %vm876, %v1530, %v1532
      %v1536 = vsel %vm342, %v1518, 0
      %v1539 = vsel %vm346, %v1533, 0
      %v1542 = vsel %vm346, %v1534, 0
      %1544 = vmatprep.subr.bf16.mxu0 %v1542
      %1545 = vmatpush1.bf16.msra.mxu0 %v1539
      %1546 = vmatprep.subr.bf16.mxu0 0
      %1547 = vmatpush1.bf16.msra.mxu0 0
      %1548 = vmatprep.subr.bf16.mxu0 0
      %1549 = vmatpush1.bf16.msra.mxu0 0
      %1550 = vmatprep.subr.bf16.mxu0 0
      %1551 = vmatpush1.bf16.msra.mxu0 0
      %1552 = vmatprep.subr.bf16.mxu0 0
      %1553 = vmatpush1.bf16.msra.mxu0 0
      %1554 = vmatprep.subr.bf16.mxu0 0
      %1555 = vmatpush1.bf16.msra.mxu0 0
      %1556 = vmatprep.subr.bf16.mxu0 0
      %1557 = vmatpush1.bf16.msra.mxu0 0
      %1558 = vmatprep.subr.bf16.mxu0 0
      %1559 = vmatpush1.bf16.msra.mxu0 0
      %1560 = vmatprep.subr.bf16.mxu0 0
      %1561 = vmatpush1.bf16.msra.mxu0 0
      %1562 = vmatprep.subr.bf16.mxu0 0
      %1563 = vmatpush1.bf16.msra.mxu0 0
      %1564 = vmatprep.subr.bf16.mxu0 0
      %1565 = vmatpush1.bf16.msra.mxu0 0
      %1566 = vmatprep.subr.bf16.mxu0 0
      %1567 = vmatpush1.bf16.msra.mxu0 0
      %1568 = vmatprep.subr.bf16.mxu0 0
      %1569 = vmatpush1.bf16.msra.mxu0 0
      %1570 = vmatprep.subr.bf16.mxu0 0
      %1571 = vmatpush1.bf16.msra.mxu0 0
      %1572 = vmatprep.subr.bf16.mxu0 0
      %1573 = vmatpush1.bf16.msra.mxu0 0
      %1574 = vmatprep.subr.bf16.mxu0 0
      %1575 = vmatpush1.bf16.msra.mxu0 0
      %1576 = vmatprep.mubr.bf16.mxu0 0
      %1577 = vmatmul.mubr.bf16.gmra.mrb[0].mxu0 %v1536
      %v1578 = vpop.f32.mrb[0].mxu0
      %v1579 = vadd.f32 0.0, %v1578
      %v1580 = vpop.f32.mrb[0].mxu0
      %v1581 = vadd.f32 0.0, %v1580
      %v1582 = vpop.f32.mrb[0].mxu0
      %v1583 = vpop.f32.mrb[0].mxu0
      %1584 = vdwg.mxu0
      %v1585 = vadd.f32 %v1515, %v1579
      %v1586 = vadd.f32 %v1516, %v1581
      %v1587 = vmul.bf16 %v1371, %v934
      %v1588 = vmul.bf16 %v1372, %v933
      %s1589 = scalar_lea.vmem %s4, 32
      %v1590 = vld [vmem:[%s1589] sm:$0xf]
      %v1593 = vunpack.c.l.b16 %v1587
      %v1594 = vunpack.c.h.b16 %v1587
      %v1595 = vunpack.c.l.b16 %v1588
      %v1596 = vpack.c.b16 %v1593, %v1593
      %v1597 = vpack.c.b16 %v1594, %v1594
      %v1598 = vpack.c.b16 %v1595, %v1595
      %1599 = vrot.lane.b32.xlu0 %v1596, 111
      %v1600 = vpop.permute.xlu0 %1599
      %1601 = vrot.lane.b32.xlu0 %v1597, 111
      %v1602 = vpop.permute.xlu0 %1601
      %1603 = vrot.lane.b32.xlu0 %v1598, 111
      %v1604 = vpop.permute.xlu0 %1603
      %v1605 = vsel %vm316, %v1600, %v1602
      %v1606 = vsel %vm316, %v1602, %v1604
      %v1608 = vsel %vm342, %v1590, 0
      %v1611 = vsel %vm346, %v1605, 0
      %v1614 = vsel %vm346, %v1606, 0
      %1616 = vmatprep.subr.bf16.mxu0 %v1614
      %1617 = vmatpush1.bf16.msra.mxu0 %v1611
      %1618 = vmatprep.subr.bf16.mxu0 0
      %1619 = vmatpush1.bf16.msra.mxu0 0
      %1620 = vmatprep.subr.bf16.mxu0 0
      %1621 = vmatpush1.bf16.msra.mxu0 0
      %1622 = vmatprep.subr.bf16.mxu0 0
      %1623 = vmatpush1.bf16.msra.mxu0 0
      %1624 = vmatprep.subr.bf16.mxu0 0
      %1625 = vmatpush1.bf16.msra.mxu0 0
      %1626 = vmatprep.subr.bf16.mxu0 0
      %1627 = vmatpush1.bf16.msra.mxu0 0
      %1628 = vmatprep.subr.bf16.mxu0 0
      %1629 = vmatpush1.bf16.msra.mxu0 0
      %1630 = vmatprep.subr.bf16.mxu0 0
      %1631 = vmatpush1.bf16.msra.mxu0 0
      %1632 = vmatprep.subr.bf16.mxu0 0
      %1633 = vmatpush1.bf16.msra.mxu0 0
      %1634 = vmatprep.subr.bf16.mxu0 0
      %1635 = vmatpush1.bf16.msra.mxu0 0
      %1636 = vmatprep.subr.bf16.mxu0 0
      %1637 = vmatpush1.bf16.msra.mxu0 0
      %1638 = vmatprep.subr.bf16.mxu0 0
      %1639 = vmatpush1.bf16.msra.mxu0 0
      %1640 = vmatprep.subr.bf16.mxu0 0
      %1641 = vmatpush1.bf16.msra.mxu0 0
      %1642 = vmatprep.subr.bf16.mxu0 0
      %1643 = vmatpush1.bf16.msra.mxu0 0
      %1644 = vmatprep.subr.bf16.mxu0 0
      %1645 = vmatpush1.bf16.msra.mxu0 0
      %1646 = vmatprep.subr.bf16.mxu0 0
      %1647 = vmatpush1.bf16.msra.mxu0 0
      %1648 = vmatprep.mubr.bf16.mxu0 0
      %1649 = vmatmul.mubr.bf16.gmra.mrb[0].mxu0 %v1608
      %v1650 = vpop.f32.mrb[0].mxu0
      %v1651 = vadd.f32 0.0, %v1650
      %v1652 = vpop.f32.mrb[0].mxu0
      %v1653 = vadd.f32 0.0, %v1652
      %v1654 = vpop.f32.mrb[0].mxu0
      %v1655 = vpop.f32.mrb[0].mxu0
      %1656 = vdwg.mxu0
      %v1657 = vadd.f32 %v1585, %v1651
      %v1658 = vadd.f32 %v1586, %v1653
      %v1659 = vld [vmem:[%s5] sm:$0xff]
      %1661 = vset.pattern.permute.xlu0 0
      %1662 = vperm.xlu0 %1661, %v1659
      %v1663 = vpop.permute.xlu0 %1662
      %v1665 = vadd.f32 %v1657, %v1663
      %v1666 = vadd.f32 %v1658, %v1663
      %v1667 = vmax.f32 %v1665, 0.0
      %v1668 = vmax.f32 %v1666, 0.0
      %1670 = vrot.lane.b32.xlu0 %v1667, 126
      %v1671 = vpop.permute.xlu0 %1670
      %1673 = vrot.lane.b32.xlu0 %v1667, 124
      %v1674 = vpop.permute.xlu0 %1673
      %1676 = vrot.lane.b32.xlu0 %v1667, 122
      %v1677 = vpop.permute.xlu0 %1676
      %1679 = vrot.lane.b32.xlu0 %v1667, 120
      %v1680 = vpop.permute.xlu0 %1679
      %1682 = vrot.lane.b32.xlu0 %v1667, 118
      %v1683 = vpop.permute.xlu0 %1682
      %1685 = vrot.lane.b32.xlu0 %v1667, 116
      %v1686 = vpop.permute.xlu0 %1685
      %1688 = vrot.lane.b32.xlu0 %v1667, 114
      %v1689 = vpop.permute.xlu0 %1688
      %1691 = vrot.lane.b32.xlu0 %v1667, 112
      %v1692 = vpop.permute.xlu0 %1691
      %1694 = vrot.lane.b32.xlu0 %v1667, 110
      %v1695 = vpop.permute.xlu0 %1694
      %1697 = vrot.lane.b32.xlu0 %v1667, 108
      %v1698 = vpop.permute.xlu0 %1697
      %1700 = vrot.lane.b32.xlu0 %v1667, 106
      %v1701 = vpop.permute.xlu0 %1700
      %1703 = vrot.lane.b32.xlu0 %v1667, 104
      %v1704 = vpop.permute.xlu0 %1703
      %1706 = vrot.lane.b32.xlu0 %v1667, 102
      %v1707 = vpop.permute.xlu0 %1706
      %1709 = vrot.lane.b32.xlu0 %v1667, 100
      %v1710 = vpop.permute.xlu0 %1709
      %1712 = vrot.lane.b32.xlu0 %v1667, 98
      %v1713 = vpop.permute.xlu0 %1712
      %1715 = vrot.lane.b32.xlu0 %v1667, 96
      %v1716 = vpop.permute.xlu0 %1715
      %1718 = vrot.lane.b32.xlu0 %v1667, 94
      %v1719 = vpop.permute.xlu0 %1718
      %1721 = vrot.lane.b32.xlu0 %v1667, 92
      %v1722 = vpop.permute.xlu0 %1721
      %1724 = vrot.lane.b32.xlu0 %v1667, 90
      %v1725 = vpop.permute.xlu0 %1724
      %1727 = vrot.lane.b32.xlu0 %v1667, 88
      %v1728 = vpop.permute.xlu0 %1727
      %1730 = vrot.lane.b32.xlu0 %v1667, 86
      %v1731 = vpop.permute.xlu0 %1730
      %1733 = vrot.lane.b32.xlu0 %v1667, 84
      %v1734 = vpop.permute.xlu0 %1733
      %1736 = vrot.lane.b32.xlu0 %v1667, 82
      %v1737 = vpop.permute.xlu0 %1736
      %1739 = vrot.lane.b32.xlu0 %v1667, 80
      %v1740 = vpop.permute.xlu0 %1739
      %1742 = vrot.lane.b32.xlu0 %v1667, 78
      %v1743 = vpop.permute.xlu0 %1742
      %1745 = vrot.lane.b32.xlu0 %v1667, 76
      %v1746 = vpop.permute.xlu0 %1745
      %1748 = vrot.lane.b32.xlu0 %v1667, 74
      %v1749 = vpop.permute.xlu0 %1748
      %1751 = vrot.lane.b32.xlu0 %v1667, 72
      %v1752 = vpop.permute.xlu0 %1751
      %1754 = vrot.lane.b32.xlu0 %v1667, 70
      %v1755 = vpop.permute.xlu0 %1754
      %1757 = vrot.lane.b32.xlu0 %v1667, 68
      %v1758 = vpop.permute.xlu0 %1757
      %1760 = vrot.lane.b32.xlu0 %v1667, 66
      %v1761 = vpop.permute.xlu0 %1760
      %1763 = vrot.lane.b32.xlu0 %v1667, 64
      %v1764 = vpop.permute.xlu0 %1763
      %1766 = vrot.lane.b32.xlu0 %v1667, 62
      %v1767 = vpop.permute.xlu0 %1766
      %1769 = vrot.lane.b32.xlu0 %v1667, 60
      %v1770 = vpop.permute.xlu0 %1769
      %1772 = vrot.lane.b32.xlu0 %v1667, 58
      %v1773 = vpop.permute.xlu0 %1772
      %1775 = vrot.lane.b32.xlu0 %v1667, 56
      %v1776 = vpop.permute.xlu0 %1775
      %1778 = vrot.lane.b32.xlu0 %v1667, 54
      %v1779 = vpop.permute.xlu0 %1778
      %1781 = vrot.lane.b32.xlu0 %v1667, 52
      %v1782 = vpop.permute.xlu0 %1781
      %1784 = vrot.lane.b32.xlu0 %v1667, 50
      %v1785 = vpop.permute.xlu0 %1784
      %1787 = vrot.lane.b32.xlu0 %v1667, 48
      %v1788 = vpop.permute.xlu0 %1787
      %1790 = vrot.lane.b32.xlu0 %v1667, 46
      %v1791 = vpop.permute.xlu0 %1790
      %1793 = vrot.lane.b32.xlu0 %v1667, 44
      %v1794 = vpop.permute.xlu0 %1793
      %1796 = vrot.lane.b32.xlu0 %v1667, 42
      %v1797 = vpop.permute.xlu0 %1796
      %1799 = vrot.lane.b32.xlu0 %v1667, 40
      %v1800 = vpop.permute.xlu0 %1799
      %1802 = vrot.lane.b32.xlu0 %v1667, 38
      %v1803 = vpop.permute.xlu0 %1802
      %1805 = vrot.lane.b32.xlu0 %v1667, 36
      %v1806 = vpop.permute.xlu0 %1805
      %1808 = vrot.lane.b32.xlu0 %v1667, 34
      %v1809 = vpop.permute.xlu0 %1808
      %1811 = vrot.lane.b32.xlu0 %v1667, 32
      %v1812 = vpop.permute.xlu0 %1811
      %1814 = vrot.lane.b32.xlu0 %v1667, 30
      %v1815 = vpop.permute.xlu0 %1814
      %1817 = vrot.lane.b32.xlu0 %v1667, 28
      %v1818 = vpop.permute.xlu0 %1817
      %1820 = vrot.lane.b32.xlu0 %v1667, 26
      %v1821 = vpop.permute.xlu0 %1820
      %1823 = vrot.lane.b32.xlu0 %v1667, 24
      %v1824 = vpop.permute.xlu0 %1823
      %1826 = vrot.lane.b32.xlu0 %v1667, 22
      %v1827 = vpop.permute.xlu0 %1826
      %1829 = vrot.lane.b32.xlu0 %v1667, 20
      %v1830 = vpop.permute.xlu0 %1829
      %1832 = vrot.lane.b32.xlu0 %v1667, 18
      %v1833 = vpop.permute.xlu0 %1832
      %1835 = vrot.lane.b32.xlu0 %v1667, 16
      %v1836 = vpop.permute.xlu0 %1835
      %1838 = vrot.lane.b32.xlu0 %v1667, 14
      %v1839 = vpop.permute.xlu0 %1838
      %1841 = vrot.lane.b32.xlu0 %v1667, 12
      %v1842 = vpop.permute.xlu0 %1841
      %1844 = vrot.lane.b32.xlu0 %v1667, 10
      %v1845 = vpop.permute.xlu0 %1844
      %1847 = vrot.lane.b32.xlu0 %v1667, 8
      %v1848 = vpop.permute.xlu0 %1847
      %1850 = vrot.lane.b32.xlu0 %v1667, 6
      %v1851 = vpop.permute.xlu0 %1850
      %1853 = vrot.lane.b32.xlu0 %v1667, 4
      %v1854 = vpop.permute.xlu0 %1853
      %1856 = vrot.lane.b32.xlu0 %v1667, 2
      %v1857 = vpop.permute.xlu0 %1856
      %1860 = vrot.lane.b32.xlu0 %v1668, 126
      %v1861 = vpop.permute.xlu0 %1860
      %1863 = vrot.lane.b32.xlu0 %v1668, 124
      %v1864 = vpop.permute.xlu0 %1863
      %1866 = vrot.lane.b32.xlu0 %v1668, 122
      %v1867 = vpop.permute.xlu0 %1866
      %1869 = vrot.lane.b32.xlu0 %v1668, 120
      %v1870 = vpop.permute.xlu0 %1869
      %1872 = vrot.lane.b32.xlu0 %v1668, 118
      %v1873 = vpop.permute.xlu0 %1872
      %1875 = vrot.lane.b32.xlu0 %v1668, 116
      %v1876 = vpop.permute.xlu0 %1875
      %1878 = vrot.lane.b32.xlu0 %v1668, 114
      %v1879 = vpop.permute.xlu0 %1878
      %1881 = vrot.lane.b32.xlu0 %v1668, 112
      %v1882 = vpop.permute.xlu0 %1881
      %1884 = vrot.lane.b32.xlu0 %v1668, 110
      %v1885 = vpop.permute.xlu0 %1884
      %1887 = vrot.lane.b32.xlu0 %v1668, 108
      %v1888 = vpop.permute.xlu0 %1887
      %1890 = vrot.lane.b32.xlu0 %v1668, 106
      %v1891 = vpop.permute.xlu0 %1890
      %1893 = vrot.lane.b32.xlu0 %v1668, 104
      %v1894 = vpop.permute.xlu0 %1893
      %1896 = vrot.lane.b32.xlu0 %v1668, 102
      %v1897 = vpop.permute.xlu0 %1896
      %1899 = vrot.lane.b32.xlu0 %v1668, 100
      %v1900 = vpop.permute.xlu0 %1899
      %1902 = vrot.lane.b32.xlu0 %v1668, 98
      %v1903 = vpop.permute.xlu0 %1902
      %1905 = vrot.lane.b32.xlu0 %v1668, 96
      %v1906 = vpop.permute.xlu0 %1905
      %1908 = vrot.lane.b32.xlu0 %v1668, 94
      %v1909 = vpop.permute.xlu0 %1908
      %1911 = vrot.lane.b32.xlu0 %v1668, 92
      %v1912 = vpop.permute.xlu0 %1911
      %1914 = vrot.lane.b32.xlu0 %v1668, 90
      %v1915 = vpop.permute.xlu0 %1914
      %1917 = vrot.lane.b32.xlu0 %v1668, 88
      %v1918 = vpop.permute.xlu0 %1917
      %1920 = vrot.lane.b32.xlu0 %v1668, 86
      %v1921 = vpop.permute.xlu0 %1920
      %1923 = vrot.lane.b32.xlu0 %v1668, 84
      %v1924 = vpop.permute.xlu0 %1923
      %1926 = vrot.lane.b32.xlu0 %v1668, 82
      %v1927 = vpop.permute.xlu0 %1926
      %1929 = vrot.lane.b32.xlu0 %v1668, 80
      %v1930 = vpop.permute.xlu0 %1929
      %1932 = vrot.lane.b32.xlu0 %v1668, 78
      %v1933 = vpop.permute.xlu0 %1932
      %1935 = vrot.lane.b32.xlu0 %v1668, 76
      %v1936 = vpop.permute.xlu0 %1935
      %1938 = vrot.lane.b32.xlu0 %v1668, 74
      %v1939 = vpop.permute.xlu0 %1938
      %1941 = vrot.lane.b32.xlu0 %v1668, 72
      %v1942 = vpop.permute.xlu0 %1941
      %1944 = vrot.lane.b32.xlu0 %v1668, 70
      %v1945 = vpop.permute.xlu0 %1944
      %1947 = vrot.lane.b32.xlu0 %v1668, 68
      %v1948 = vpop.permute.xlu0 %1947
      %1950 = vrot.lane.b32.xlu0 %v1668, 66
      %v1951 = vpop.permute.xlu0 %1950
      %1953 = vrot.lane.b32.xlu0 %v1668, 64
      %v1954 = vpop.permute.xlu0 %1953
      %1956 = vrot.lane.b32.xlu0 %v1668, 62
      %v1957 = vpop.permute.xlu0 %1956
      %1959 = vrot.lane.b32.xlu0 %v1668, 60
      %v1960 = vpop.permute.xlu0 %1959
      %1962 = vrot.lane.b32.xlu0 %v1668, 58
      %v1963 = vpop.permute.xlu0 %1962
      %1965 = vrot.lane.b32.xlu0 %v1668, 56
      %v1966 = vpop.permute.xlu0 %1965
      %1968 = vrot.lane.b32.xlu0 %v1668, 54
      %v1969 = vpop.permute.xlu0 %1968
      %1971 = vrot.lane.b32.xlu0 %v1668, 52
      %v1972 = vpop.permute.xlu0 %1971
      %1974 = vrot.lane.b32.xlu0 %v1668, 50
      %v1975 = vpop.permute.xlu0 %1974
      %1977 = vrot.lane.b32.xlu0 %v1668, 48
      %v1978 = vpop.permute.xlu0 %1977
      %1980 = vrot.lane.b32.xlu0 %v1668, 46
      %v1981 = vpop.permute.xlu0 %1980
      %1983 = vrot.lane.b32.xlu0 %v1668, 44
      %v1984 = vpop.permute.xlu0 %1983
      %1986 = vrot.lane.b32.xlu0 %v1668, 42
      %v1987 = vpop.permute.xlu0 %1986
      %1989 = vrot.lane.b32.xlu0 %v1668, 40
      %v1990 = vpop.permute.xlu0 %1989
      %1992 = vrot.lane.b32.xlu0 %v1668, 38
      %v1993 = vpop.permute.xlu0 %1992
      %1995 = vrot.lane.b32.xlu0 %v1668, 36
      %v1996 = vpop.permute.xlu0 %1995
      %1998 = vrot.lane.b32.xlu0 %v1668, 34
      %v1999 = vpop.permute.xlu0 %1998
      %2001 = vrot.lane.b32.xlu0 %v1668, 32
      %v2002 = vpop.permute.xlu0 %2001
      %2004 = vrot.lane.b32.xlu0 %v1668, 30
      %v2005 = vpop.permute.xlu0 %2004
      %2007 = vrot.lane.b32.xlu0 %v1668, 28
      %v2008 = vpop.permute.xlu0 %2007
      %2010 = vrot.lane.b32.xlu0 %v1668, 26
      %v2011 = vpop.permute.xlu0 %2010
      %2013 = vrot.lane.b32.xlu0 %v1668, 24
      %v2014 = vpop.permute.xlu0 %2013
      %2016 = vrot.lane.b32.xlu0 %v1668, 22
      %v2017 = vpop.permute.xlu0 %2016
      %2019 = vrot.lane.b32.xlu0 %v1668, 20
      %v2020 = vpop.permute.xlu0 %2019
      %2022 = vrot.lane.b32.xlu0 %v1668, 18
      %v2023 = vpop.permute.xlu0 %2022
      %2025 = vrot.lane.b32.xlu0 %v1668, 16
      %v2026 = vpop.permute.xlu0 %2025
      %2028 = vrot.lane.b32.xlu0 %v1668, 14
      %v2029 = vpop.permute.xlu0 %2028
      %2031 = vrot.lane.b32.xlu0 %v1668, 12
      %v2032 = vpop.permute.xlu0 %2031
      %2034 = vrot.lane.b32.xlu0 %v1668, 10
      %v2035 = vpop.permute.xlu0 %2034
      %2037 = vrot.lane.b32.xlu0 %v1668, 8
      %v2038 = vpop.permute.xlu0 %2037
      %2040 = vrot.lane.b32.xlu0 %v1668, 6
      %v2041 = vpop.permute.xlu0 %2040
      %2043 = vrot.lane.b32.xlu0 %v1668, 4
      %v2044 = vpop.permute.xlu0 %2043
      %2046 = vrot.lane.b32.xlu0 %v1668, 2
      %v2047 = vpop.permute.xlu0 %2046
      %v2049 = vcombine.low %v1667, %v1674
      %v2050 = vcombine.high %v1667, %v1674
      %v2052 = vunpack.c.l.s4 1983009808
      %v2053 = vunpack.c.0.s8 %v2052
      %v2054 = vlaneseq
      %v2055 = vshrl.u32 %v2054, 7
      %v2056 = vsub.s32 %v2053, %v2055
      %v2057 = vrot.slane %v2049, %v2056
      %v2059 = vunpack.c.l.s4 1983009808
      %v2060 = vunpack.c.0.s8 %v2059
      %v2061 = vlaneseq
      %v2062 = vshrl.u32 %v2061, 7
      %v2063 = vsub.s32 %v2060, %v2062
      %v2064 = vrot.slane %v2050, %v2063
      %v2065 = vcombine.low %v1671, %v1677
      %v2066 = vcombine.high %v1671, %v1677
      %v2068 = vunpack.c.l.s4 1983009808
      %v2069 = vunpack.c.0.s8 %v2068
      %v2070 = vlaneseq
      %v2071 = vshrl.u32 %v2070, 7
      %v2072 = vsub.s32 %v2069, %v2071
      %v2073 = vrot.slane %v2065, %v2072
      %v2075 = vunpack.c.l.s4 1983009808
      %v2076 = vunpack.c.0.s8 %v2075
      %v2077 = vlaneseq
      %v2078 = vshrl.u32 %v2077, 7
      %v2079 = vsub.s32 %v2076, %v2078
      %v2080 = vrot.slane %v2066, %v2079
      %v2081 = vcombine.low %v1680, %v1686
      %v2082 = vcombine.high %v1680, %v1686
      %v2084 = vunpack.c.l.s4 1983009808
      %v2085 = vunpack.c.0.s8 %v2084
      %v2086 = vlaneseq
      %v2087 = vshrl.u32 %v2086, 7
      %v2088 = vsub.s32 %v2085, %v2087
      %v2089 = vrot.slane %v2081, %v2088
      %v2091 = vunpack.c.l.s4 1983009808
      %v2092 = vunpack.c.0.s8 %v2091
      %v2093 = vlaneseq
      %v2094 = vshrl.u32 %v2093, 7
      %v2095 = vsub.s32 %v2092, %v2094
      %v2096 = vrot.slane %v2082, %v2095
      %v2097 = vcombine.low %v1683, %v1689
      %v2098 = vcombine.high %v1683, %v1689
      %v2100 = vunpack.c.l.s4 1983009808
      %v2101 = vunpack.c.0.s8 %v2100
      %v2102 = vlaneseq
      %v2103 = vshrl.u32 %v2102, 7
      %v2104 = vsub.s32 %v2101, %v2103
      %v2105 = vrot.slane %v2097, %v2104
      %v2107 = vunpack.c.l.s4 1983009808
      %v2108 = vunpack.c.0.s8 %v2107
      %v2109 = vlaneseq
      %v2110 = vshrl.u32 %v2109, 7
      %v2111 = vsub.s32 %v2108, %v2110
      %v2112 = vrot.slane %v2098, %v2111
      %v2113 = vcombine.low %v2057, %v2073
      %v2114 = vcombine.high %v2057, %v2073
      %v2116 = vunpack.c.l.s4 1934713408
      %v2117 = vunpack.c.0.s8 %v2116
      %v2118 = vlaneseq
      %v2119 = vshrl.u32 %v2118, 7
      %v2120 = vsub.s32 %v2117, %v2119
      %v2121 = vrot.slane %v2113, %v2120
      %v2123 = vunpack.c.l.s4 1934713408
      %v2124 = vunpack.c.0.s8 %v2123
      %v2125 = vlaneseq
      %v2126 = vshrl.u32 %v2125, 7
      %v2127 = vsub.s32 %v2124, %v2126
      %v2128 = vrot.slane %v2114, %v2127
      %v2129 = vcombine.low %v2064, %v2080
      %v2130 = vcombine.high %v2064, %v2080
      %v2132 = vunpack.c.l.s4 1934713408
      %v2133 = vunpack.c.0.s8 %v2132
      %v2134 = vlaneseq
      %v2135 = vshrl.u32 %v2134, 7
      %v2136 = vsub.s32 %v2133, %v2135
      %v2137 = vrot.slane %v2129, %v2136
      %v2139 = vunpack.c.l.s4 1934713408
      %v2140 = vunpack.c.0.s8 %v2139
      %v2141 = vlaneseq
      %v2142 = vshrl.u32 %v2141, 7
      %v2143 = vsub.s32 %v2140, %v2142
      %v2144 = vrot.slane %v2130, %v2143
      %v2145 = vcombine.low %v2089, %v2105
      %v2146 = vcombine.high %v2089, %v2105
      %v2148 = vunpack.c.l.s4 1934713408
      %v2149 = vunpack.c.0.s8 %v2148
      %v2150 = vlaneseq
      %v2151 = vshrl.u32 %v2150, 7
      %v2152 = vsub.s32 %v2149, %v2151
      %v2153 = vrot.slane %v2145, %v2152
      %v2155 = vunpack.c.l.s4 1934713408
      %v2156 = vunpack.c.0.s8 %v2155
      %v2157 = vlaneseq
      %v2158 = vshrl.u32 %v2157, 7
      %v2159 = vsub.s32 %v2156, %v2158
      %v2160 = vrot.slane %v2146, %v2159
      %v2161 = vcombine.low %v2096, %v2112
      %v2162 = vcombine.high %v2096, %v2112
      %v2164 = vunpack.c.l.s4 1934713408
      %v2165 = vunpack.c.0.s8 %v2164
      %v2166 = vlaneseq
      %v2167 = vshrl.u32 %v2166, 7
      %v2168 = vsub.s32 %v2165, %v2167
      %v2169 = vrot.slane %v2161, %v2168
      %v2171 = vunpack.c.l.s4 1934713408
      %v2172 = vunpack.c.0.s8 %v2171
      %v2173 = vlaneseq
      %v2174 = vshrl.u32 %v2173, 7
      %v2175 = vsub.s32 %v2172, %v2174
      %v2176 = vrot.slane %v2162, %v2175
      %v2177 = vcombine.low %v2121, %v2153
      %v2178 = vcombine.high %v2121, %v2153
      %v2179 = vcombine.low %v2128, %v2160
      %v2180 = vcombine.high %v2128, %v2160
      %v2181 = vcombine.low %v2137, %v2169
      %v2182 = vcombine.high %v2137, %v2169
      %v2183 = vcombine.low %v2144, %v2176
      %v2184 = vcombine.high %v2144, %v2176
      %v2185 = vcombine.low %v1692, %v1698
      %v2186 = vcombine.high %v1692, %v1698
      %v2188 = vunpack.c.l.s4 1983009808
      %v2189 = vunpack.c.0.s8 %v2188
      %v2190 = vlaneseq
      %v2191 = vshrl.u32 %v2190, 7
      %v2192 = vsub.s32 %v2189, %v2191
      %v2193 = vrot.slane %v2185, %v2192
      %v2195 = vunpack.c.l.s4 1983009808
      %v2196 = vunpack.c.0.s8 %v2195
      %v2197 = vlaneseq
      %v2198 = vshrl.u32 %v2197, 7
      %v2199 = vsub.s32 %v2196, %v2198
      %v2200 = vrot.slane %v2186, %v2199
      %v2201 = vcombine.low %v1695, %v1701
      %v2202 = vcombine.high %v1695, %v1701
      %v2204 = vunpack.c.l.s4 1983009808
      %v2205 = vunpack.c.0.s8 %v2204
      %v2206 = vlaneseq
      %v2207 = vshrl.u32 %v2206, 7
      %v2208 = vsub.s32 %v2205, %v2207
      %v2209 = vrot.slane %v2201, %v2208
      %v2211 = vunpack.c.l.s4 1983009808
      %v2212 = vunpack.c.0.s8 %v2211
      %v2213 = vlaneseq
      %v2214 = vshrl.u32 %v2213, 7
      %v2215 = vsub.s32 %v2212, %v2214
      %v2216 = vrot.slane %v2202, %v2215
      %v2217 = vcombine.low %v1704, %v1710
      %v2218 = vcombine.high %v1704, %v1710
      %v2220 = vunpack.c.l.s4 1983009808
      %v2221 = vunpack.c.0.s8 %v2220
      %v2222 = vlaneseq
      %v2223 = vshrl.u32 %v2222, 7
      %v2224 = vsub.s32 %v2221, %v2223
      %v2225 = vrot.slane %v2217, %v2224
      %v2227 = vunpack.c.l.s4 1983009808
      %v2228 = vunpack.c.0.s8 %v2227
      %v2229 = vlaneseq
      %v2230 = vshrl.u32 %v2229, 7
      %v2231 = vsub.s32 %v2228, %v2230
      %v2232 = vrot.slane %v2218, %v2231
      %v2233 = vcombine.low %v1707, %v1713
      %v2234 = vcombine.high %v1707, %v1713
      %v2236 = vunpack.c.l.s4 1983009808
      %v2237 = vunpack.c.0.s8 %v2236
      %v2238 = vlaneseq
      %v2239 = vshrl.u32 %v2238, 7
      %v2240 = vsub.s32 %v2237, %v2239
      %v2241 = vrot.slane %v2233, %v2240
      %v2243 = vunpack.c.l.s4 1983009808
      %v2244 = vunpack.c.0.s8 %v2243
      %v2245 = vlaneseq
      %v2246 = vshrl.u32 %v2245, 7
      %v2247 = vsub.s32 %v2244, %v2246
      %v2248 = vrot.slane %v2234, %v2247
      %v2249 = vcombine.low %v2193, %v2209
      %v2250 = vcombine.high %v2193, %v2209
      %v2252 = vunpack.c.l.s4 1934713408
      %v2253 = vunpack.c.0.s8 %v2252
      %v2254 = vlaneseq
      %v2255 = vshrl.u32 %v2254, 7
      %v2256 = vsub.s32 %v2253, %v2255
      %v2257 = vrot.slane %v2249, %v2256
      %v2259 = vunpack.c.l.s4 1934713408
      %v2260 = vunpack.c.0.s8 %v2259
      %v2261 = vlaneseq
      %v2262 = vshrl.u32 %v2261, 7
      %v2263 = vsub.s32 %v2260, %v2262
      %v2264 = vrot.slane %v2250, %v2263
      %v2265 = vcombine.low %v2200, %v2216
      %v2266 = vcombine.high %v2200, %v2216
      %v2268 = vunpack.c.l.s4 1934713408
      %v2269 = vunpack.c.0.s8 %v2268
      %v2270 = vlaneseq
      %v2271 = vshrl.u32 %v2270, 7
      %v2272 = vsub.s32 %v2269, %v2271
      %v2273 = vrot.slane %v2265, %v2272
      %v2275 = vunpack.c.l.s4 1934713408
      %v2276 = vunpack.c.0.s8 %v2275
      %v2277 = vlaneseq
      %v2278 = vshrl.u32 %v2277, 7
      %v2279 = vsub.s32 %v2276, %v2278
      %v2280 = vrot.slane %v2266, %v2279
      %v2281 = vcombine.low %v2225, %v2241
      %v2282 = vcombine.high %v2225, %v2241
      %v2284 = vunpack.c.l.s4 1934713408
      %v2285 = vunpack.c.0.s8 %v2284
      %v2286 = vlaneseq
      %v2287 = vshrl.u32 %v2286, 7
      %v2288 = vsub.s32 %v2285, %v2287
      %v2289 = vrot.slane %v2281, %v2288
      %v2291 = vunpack.c.l.s4 1934713408
      %v2292 = vunpack.c.0.s8 %v2291
      %v2293 = vlaneseq
      %v2294 = vshrl.u32 %v2293, 7
      %v2295 = vsub.s32 %v2292, %v2294
      %v2296 = vrot.slane %v2282, %v2295
      %v2297 = vcombine.low %v2232, %v2248
      %v2298 = vcombine.high %v2232, %v2248
      %v2300 = vunpack.c.l.s4 1934713408
      %v2301 = vunpack.c.0.s8 %v2300
      %v2302 = vlaneseq
      %v2303 = vshrl.u32 %v2302, 7
      %v2304 = vsub.s32 %v2301, %v2303
      %v2305 = vrot.slane %v2297, %v2304
      %v2307 = vunpack.c.l.s4 1934713408
      %v2308 = vunpack.c.0.s8 %v2307
      %v2309 = vlaneseq
      %v2310 = vshrl.u32 %v2309, 7
      %v2311 = vsub.s32 %v2308, %v2310
      %v2312 = vrot.slane %v2298, %v2311
      %v2313 = vcombine.low %v2257, %v2289
      %v2314 = vcombine.high %v2257, %v2289
      %v2315 = vcombine.low %v2264, %v2296
      %v2316 = vcombine.high %v2264, %v2296
      %v2317 = vcombine.low %v2273, %v2305
      %v2318 = vcombine.high %v2273, %v2305
      %v2319 = vcombine.low %v2280, %v2312
      %v2320 = vcombine.high %v2280, %v2312
      %v2321 = vcombine.low %v1716, %v1722
      %v2322 = vcombine.high %v1716, %v1722
      %v2324 = vunpack.c.l.s4 1983009808
      %v2325 = vunpack.c.0.s8 %v2324
      %v2326 = vlaneseq
      %v2327 = vshrl.u32 %v2326, 7
      %v2328 = vsub.s32 %v2325, %v2327
      %v2329 = vrot.slane %v2321, %v2328
      %v2331 = vunpack.c.l.s4 1983009808
      %v2332 = vunpack.c.0.s8 %v2331
      %v2333 = vlaneseq
      %v2334 = vshrl.u32 %v2333, 7
      %v2335 = vsub.s32 %v2332, %v2334
      %v2336 = vrot.slane %v2322, %v2335
      %v2337 = vcombine.low %v1719, %v1725
      %v2338 = vcombine.high %v1719, %v1725
      %v2340 = vunpack.c.l.s4 1983009808
      %v2341 = vunpack.c.0.s8 %v2340
      %v2342 = vlaneseq
      %v2343 = vshrl.u32 %v2342, 7
      %v2344 = vsub.s32 %v2341, %v2343
      %v2345 = vrot.slane %v2337, %v2344
      %v2347 = vunpack.c.l.s4 1983009808
      %v2348 = vunpack.c.0.s8 %v2347
      %v2349 = vlaneseq
      %v2350 = vshrl.u32 %v2349, 7
      %v2351 = vsub.s32 %v2348, %v2350
      %v2352 = vrot.slane %v2338, %v2351
      %v2353 = vcombine.low %v1728, %v1734
      %v2354 = vcombine.high %v1728, %v1734
      %v2356 = vunpack.c.l.s4 1983009808
      %v2357 = vunpack.c.0.s8 %v2356
      %v2358 = vlaneseq
      %v2359 = vshrl.u32 %v2358, 7
      %v2360 = vsub.s32 %v2357, %v2359
      %v2361 = vrot.slane %v2353, %v2360
      %v2363 = vunpack.c.l.s4 1983009808
      %v2364 = vunpack.c.0.s8 %v2363
      %v2365 = vlaneseq
      %v2366 = vshrl.u32 %v2365, 7
      %v2367 = vsub.s32 %v2364, %v2366
      %v2368 = vrot.slane %v2354, %v2367
      %v2369 = vcombine.low %v1731, %v1737
      %v2370 = vcombine.high %v1731, %v1737
      %v2372 = vunpack.c.l.s4 1983009808
      %v2373 = vunpack.c.0.s8 %v2372
      %v2374 = vlaneseq
      %v2375 = vshrl.u32 %v2374, 7
      %v2376 = vsub.s32 %v2373, %v2375
      %v2377 = vrot.slane %v2369, %v2376
      %v2379 = vunpack.c.l.s4 1983009808
      %v2380 = vunpack.c.0.s8 %v2379
      %v2381 = vlaneseq
      %v2382 = vshrl.u32 %v2381, 7
      %v2383 = vsub.s32 %v2380, %v2382
      %v2384 = vrot.slane %v2370, %v2383
      %v2385 = vcombine.low %v2329, %v2345
      %v2386 = vcombine.high %v2329, %v2345
      %v2388 = vunpack.c.l.s4 1934713408
      %v2389 = vunpack.c.0.s8 %v2388
      %v2390 = vlaneseq
      %v2391 = vshrl.u32 %v2390, 7
      %v2392 = vsub.s32 %v2389, %v2391
      %v2393 = vrot.slane %v2385, %v2392
      %v2395 = vunpack.c.l.s4 1934713408
      %v2396 = vunpack.c.0.s8 %v2395
      %v2397 = vlaneseq
      %v2398 = vshrl.u32 %v2397, 7
      %v2399 = vsub.s32 %v2396, %v2398
      %v2400 = vrot.slane %v2386, %v2399
      %v2401 = vcombine.low %v2336, %v2352
      %v2402 = vcombine.high %v2336, %v2352
      %v2404 = vunpack.c.l.s4 1934713408
      %v2405 = vunpack.c.0.s8 %v2404
      %v2406 = vlaneseq
      %v2407 = vshrl.u32 %v2406, 7
      %v2408 = vsub.s32 %v2405, %v2407
      %v2409 = vrot.slane %v2401, %v2408
      %v2411 = vunpack.c.l.s4 1934713408
      %v2412 = vunpack.c.0.s8 %v2411
      %v2413 = vlaneseq
      %v2414 = vshrl.u32 %v2413, 7
      %v2415 = vsub.s32 %v2412, %v2414
      %v2416 = vrot.slane %v2402, %v2415
      %v2417 = vcombine.low %v2361, %v2377
      %v2418 = vcombine.high %v2361, %v2377
      %v2420 = vunpack.c.l.s4 1934713408
      %v2421 = vunpack.c.0.s8 %v2420
      %v2422 = vlaneseq
      %v2423 = vshrl.u32 %v2422, 7
      %v2424 = vsub.s32 %v2421, %v2423
      %v2425 = vrot.slane %v2417, %v2424
      %v2427 = vunpack.c.l.s4 1934713408
      %v2428 = vunpack.c.0.s8 %v2427
      %v2429 = vlaneseq
      %v2430 = vshrl.u32 %v2429, 7
      %v2431 = vsub.s32 %v2428, %v2430
      %v2432 = vrot.slane %v2418, %v2431
      %v2433 = vcombine.low %v2368, %v2384
      %v2434 = vcombine.high %v2368, %v2384
      %v2436 = vunpack.c.l.s4 1934713408
      %v2437 = vunpack.c.0.s8 %v2436
      %v2438 = vlaneseq
      %v2439 = vshrl.u32 %v2438, 7
      %v2440 = vsub.s32 %v2437, %v2439
      %v2441 = vrot.slane %v2433, %v2440
      %v2443 = vunpack.c.l.s4 1934713408
      %v2444 = vunpack.c.0.s8 %v2443
      %v2445 = vlaneseq
      %v2446 = vshrl.u32 %v2445, 7
      %v2447 = vsub.s32 %v2444, %v2446
      %v2448 = vrot.slane %v2434, %v2447
      %v2449 = vcombine.low %v2393, %v2425
      %v2450 = vcombine.high %v2393, %v2425
      %v2451 = vcombine.low %v2400, %v2432
      %v2452 = vcombine.high %v2400, %v2432
      %v2453 = vcombine.low %v2409, %v2441
      %v2454 = vcombine.high %v2409, %v2441
      %v2455 = vcombine.low %v2416, %v2448
      %v2456 = vcombine.high %v2416, %v2448
      %v2457 = vcombine.low %v1740, %v1746
      %v2458 = vcombine.high %v1740, %v1746
      %v2460 = vunpack.c.l.s4 1983009808
      %v2461 = vunpack.c.0.s8 %v2460
      %v2462 = vlaneseq
      %v2463 = vshrl.u32 %v2462, 7
      %v2464 = vsub.s32 %v2461, %v2463
      %v2465 = vrot.slane %v2457, %v2464
      %v2467 = vunpack.c.l.s4 1983009808
      %v2468 = vunpack.c.0.s8 %v2467
      %v2469 = vlaneseq
      %v2470 = vshrl.u32 %v2469, 7
      %v2471 = vsub.s32 %v2468, %v2470
      %v2472 = vrot.slane %v2458, %v2471
      %v2473 = vcombine.low %v1743, %v1749
      %v2474 = vcombine.high %v1743, %v1749
      %v2476 = vunpack.c.l.s4 1983009808
      %v2477 = vunpack.c.0.s8 %v2476
      %v2478 = vlaneseq
      %v2479 = vshrl.u32 %v2478, 7
      %v2480 = vsub.s32 %v2477, %v2479
      %v2481 = vrot.slane %v2473, %v2480
      %v2483 = vunpack.c.l.s4 1983009808
      %v2484 = vunpack.c.0.s8 %v2483
      %v2485 = vlaneseq
      %v2486 = vshrl.u32 %v2485, 7
      %v2487 = vsub.s32 %v2484, %v2486
      %v2488 = vrot.slane %v2474, %v2487
      %v2489 = vcombine.low %v1752, %v1758
      %v2490 = vcombine.high %v1752, %v1758
      %v2492 = vunpack.c.l.s4 1983009808
      %v2493 = vunpack.c.0.s8 %v2492
      %v2494 = vlaneseq
      %v2495 = vshrl.u32 %v2494, 7
      %v2496 = vsub.s32 %v2493, %v2495
      %v2497 = vrot.slane %v2489, %v2496
      %v2499 = vunpack.c.l.s4 1983009808
      %v2500 = vunpack.c.0.s8 %v2499
      %v2501 = vlaneseq
      %v2502 = vshrl.u32 %v2501, 7
      %v2503 = vsub.s32 %v2500, %v2502
      %v2504 = vrot.slane %v2490, %v2503
      %v2505 = vcombine.low %v1755, %v1761
      %v2506 = vcombine.high %v1755, %v1761
      %v2508 = vunpack.c.l.s4 1983009808
      %v2509 = vunpack.c.0.s8 %v2508
      %v2510 = vlaneseq
      %v2511 = vshrl.u32 %v2510, 7
      %v2512 = vsub.s32 %v2509, %v2511
      %v2513 = vrot.slane %v2505, %v2512
      %v2515 = vunpack.c.l.s4 1983009808
      %v2516 = vunpack.c.0.s8 %v2515
      %v2517 = vlaneseq
      %v2518 = vshrl.u32 %v2517, 7
      %v2519 = vsub.s32 %v2516, %v2518
      %v2520 = vrot.slane %v2506, %v2519
      %v2521 = vcombine.low %v2465, %v2481
      %v2522 = vcombine.high %v2465, %v2481
      %v2524 = vunpack.c.l.s4 1934713408
      %v2525 = vunpack.c.0.s8 %v2524
      %v2526 = vlaneseq
      %v2527 = vshrl.u32 %v2526, 7
      %v2528 = vsub.s32 %v2525, %v2527
      %v2529 = vrot.slane %v2521, %v2528
      %v2531 = vunpack.c.l.s4 1934713408
      %v2532 = vunpack.c.0.s8 %v2531
      %v2533 = vlaneseq
      %v2534 = vshrl.u32 %v2533, 7
      %v2535 = vsub.s32 %v2532, %v2534
      %v2536 = vrot.slane %v2522, %v2535
      %v2537 = vcombine.low %v2472, %v2488
      %v2538 = vcombine.high %v2472, %v2488
      %v2540 = vunpack.c.l.s4 1934713408
      %v2541 = vunpack.c.0.s8 %v2540
      %v2542 = vlaneseq
      %v2543 = vshrl.u32 %v2542, 7
      %v2544 = vsub.s32 %v2541, %v2543
      %v2545 = vrot.slane %v2537, %v2544
      %v2547 = vunpack.c.l.s4 1934713408
      %v2548 = vunpack.c.0.s8 %v2547
      %v2549 = vlaneseq
      %v2550 = vshrl.u32 %v2549, 7
      %v2551 = vsub.s32 %v2548, %v2550
      %v2552 = vrot.slane %v2538, %v2551
      %v2553 = vcombine.low %v2497, %v2513
      %v2554 = vcombine.high %v2497, %v2513
      %v2556 = vunpack.c.l.s4 1934713408
      %v2557 = vunpack.c.0.s8 %v2556
      %v2558 = vlaneseq
      %v2559 = vshrl.u32 %v2558, 7
      %v2560 = vsub.s32 %v2557, %v2559
      %v2561 = vrot.slane %v2553, %v2560
      %v2563 = vunpack.c.l.s4 1934713408
      %v2564 = vunpack.c.0.s8 %v2563
      %v2565 = vlaneseq
      %v2566 = vshrl.u32 %v2565, 7
      %v2567 = vsub.s32 %v2564, %v2566
      %v2568 = vrot.slane %v2554, %v2567
      %v2569 = vcombine.low %v2504, %v2520
      %v2570 = vcombine.high %v2504, %v2520
      %v2572 = vunpack.c.l.s4 1934713408
      %v2573 = vunpack.c.0.s8 %v2572
      %v2574 = vlaneseq
      %v2575 = vshrl.u32 %v2574, 7
      %v2576 = vsub.s32 %v2573, %v2575
      %v2577 = vrot.slane %v2569, %v2576
      %v2579 = vunpack.c.l.s4 1934713408
      %v2580 = vunpack.c.0.s8 %v2579
      %v2581 = vlaneseq
      %v2582 = vshrl.u32 %v2581, 7
      %v2583 = vsub.s32 %v2580, %v2582
      %v2584 = vrot.slane %v2570, %v2583
      %v2585 = vcombine.low %v2529, %v2561
      %v2586 = vcombine.high %v2529, %v2561
      %v2587 = vcombine.low %v2536, %v2568
      %v2588 = vcombine.high %v2536, %v2568
      %v2589 = vcombine.low %v2545, %v2577
      %v2590 = vcombine.high %v2545, %v2577
      %v2591 = vcombine.low %v2552, %v2584
      %v2592 = vcombine.high %v2552, %v2584
      %v2593 = vcombine.low %v1764, %v1770
      %v2594 = vcombine.high %v1764, %v1770
      %v2596 = vunpack.c.l.s4 1983009808
      %v2597 = vunpack.c.0.s8 %v2596
      %v2598 = vlaneseq
      %v2599 = vshrl.u32 %v2598, 7
      %v2600 = vsub.s32 %v2597, %v2599
      %v2601 = vrot.slane %v2593, %v2600
      %v2603 = vunpack.c.l.s4 1983009808
      %v2604 = vunpack.c.0.s8 %v2603
      %v2605 = vlaneseq
      %v2606 = vshrl.u32 %v2605, 7
      %v2607 = vsub.s32 %v2604, %v2606
      %v2608 = vrot.slane %v2594, %v2607
      %v2609 = vcombine.low %v1767, %v1773
      %v2610 = vcombine.high %v1767, %v1773
      %v2612 = vunpack.c.l.s4 1983009808
      %v2613 = vunpack.c.0.s8 %v2612
      %v2614 = vlaneseq
      %v2615 = vshrl.u32 %v2614, 7
      %v2616 = vsub.s32 %v2613, %v2615
      %v2617 = vrot.slane %v2609, %v2616
      %v2619 = vunpack.c.l.s4 1983009808
      %v2620 = vunpack.c.0.s8 %v2619
      %v2621 = vlaneseq
      %v2622 = vshrl.u32 %v2621, 7
      %v2623 = vsub.s32 %v2620, %v2622
      %v2624 = vrot.slane %v2610, %v2623
      %v2625 = vcombine.low %v1776, %v1782
      %v2626 = vcombine.high %v1776, %v1782
      %v2628 = vunpack.c.l.s4 1983009808
      %v2629 = vunpack.c.0.s8 %v2628
      %v2630 = vlaneseq
      %v2631 = vshrl.u32 %v2630, 7
      %v2632 = vsub.s32 %v2629, %v2631
      %v2633 = vrot.slane %v2625, %v2632
      %v2635 = vunpack.c.l.s4 1983009808
      %v2636 = vunpack.c.0.s8 %v2635
      %v2637 = vlaneseq
      %v2638 = vshrl.u32 %v2637, 7
      %v2639 = vsub.s32 %v2636, %v2638
      %v2640 = vrot.slane %v2626, %v2639
      %v2641 = vcombine.low %v1779, %v1785
      %v2642 = vcombine.high %v1779, %v1785
      %v2644 = vunpack.c.l.s4 1983009808
      %v2645 = vunpack.c.0.s8 %v2644
      %v2646 = vlaneseq
      %v2647 = vshrl.u32 %v2646, 7
      %v2648 = vsub.s32 %v2645, %v2647
      %v2649 = vrot.slane %v2641, %v2648
      %v2651 = vunpack.c.l.s4 1983009808
      %v2652 = vunpack.c.0.s8 %v2651
      %v2653 = vlaneseq
      %v2654 = vshrl.u32 %v2653, 7
      %v2655 = vsub.s32 %v2652, %v2654
      %v2656 = vrot.slane %v2642, %v2655
      %v2657 = vcombine.low %v2601, %v2617
      %v2658 = vcombine.high %v2601, %v2617
      %v2660 = vunpack.c.l.s4 1934713408
      %v2661 = vunpack.c.0.s8 %v2660
      %v2662 = vlaneseq
      %v2663 = vshrl.u32 %v2662, 7
      %v2664 = vsub.s32 %v2661, %v2663
      %v2665 = vrot.slane %v2657, %v2664
      %v2667 = vunpack.c.l.s4 1934713408
      %v2668 = vunpack.c.0.s8 %v2667
      %v2669 = vlaneseq
      %v2670 = vshrl.u32 %v2669, 7
      %v2671 = vsub.s32 %v2668, %v2670
      %v2672 = vrot.slane %v2658, %v2671
      %v2673 = vcombine.low %v2608, %v2624
      %v2674 = vcombine.high %v2608, %v2624
      %v2676 = vunpack.c.l.s4 1934713408
      %v2677 = vunpack.c.0.s8 %v2676
      %v2678 = vlaneseq
      %v2679 = vshrl.u32 %v2678, 7
      %v2680 = vsub.s32 %v2677, %v2679
      %v2681 = vrot.slane %v2673, %v2680
      %v2683 = vunpack.c.l.s4 1934713408
      %v2684 = vunpack.c.0.s8 %v2683
      %v2685 = vlaneseq
      %v2686 = vshrl.u32 %v2685, 7
      %v2687 = vsub.s32 %v2684, %v2686
      %v2688 = vrot.slane %v2674, %v2687
      %v2689 = vcombine.low %v2633, %v2649
      %v2690 = vcombine.high %v2633, %v2649
      %v2692 = vunpack.c.l.s4 1934713408
      %v2693 = vunpack.c.0.s8 %v2692
      %v2694 = vlaneseq
      %v2695 = vshrl.u32 %v2694, 7
      %v2696 = vsub.s32 %v2693, %v2695
      %v2697 = vrot.slane %v2689, %v2696
      %v2699 = vunpack.c.l.s4 1934713408
      %v2700 = vunpack.c.0.s8 %v2699
      %v2701 = vlaneseq
      %v2702 = vshrl.u32 %v2701, 7
      %v2703 = vsub.s32 %v2700, %v2702
      %v2704 = vrot.slane %v2690, %v2703
      %v2705 = vcombine.low %v2640, %v2656
      %v2706 = vcombine.high %v2640, %v2656
      %v2708 = vunpack.c.l.s4 1934713408
      %v2709 = vunpack.c.0.s8 %v2708
      %v2710 = vlaneseq
      %v2711 = vshrl.u32 %v2710, 7
      %v2712 = vsub.s32 %v2709, %v2711
      %v2713 = vrot.slane %v2705, %v2712
      %v2715 = vunpack.c.l.s4 1934713408
      %v2716 = vunpack.c.0.s8 %v2715
      %v2717 = vlaneseq
      %v2718 = vshrl.u32 %v2717, 7
      %v2719 = vsub.s32 %v2716, %v2718
      %v2720 = vrot.slane %v2706, %v2719
      %v2721 = vcombine.low %v2665, %v2697
      %v2722 = vcombine.high %v2665, %v2697
      %v2723 = vcombine.low %v2672, %v2704
      %v2724 = vcombine.high %v2672, %v2704
      %v2725 = vcombine.low %v2681, %v2713
      %v2726 = vcombine.high %v2681, %v2713
      %v2727 = vcombine.low %v2688, %v2720
      %v2728 = vcombine.high %v2688, %v2720
      %v2729 = vcombine.low %v1788, %v1794
      %v2730 = vcombine.high %v1788, %v1794
      %v2732 = vunpack.c.l.s4 1983009808
      %v2733 = vunpack.c.0.s8 %v2732
      %v2734 = vlaneseq
      %v2735 = vshrl.u32 %v2734, 7
      %v2736 = vsub.s32 %v2733, %v2735
      %v2737 = vrot.slane %v2729, %v2736
      %v2739 = vunpack.c.l.s4 1983009808
      %v2740 = vunpack.c.0.s8 %v2739
      %v2741 = vlaneseq
      %v2742 = vshrl.u32 %v2741, 7
      %v2743 = vsub.s32 %v2740, %v2742
      %v2744 = vrot.slane %v2730, %v2743
      %v2745 = vcombine.low %v1791, %v1797
      %v2746 = vcombine.high %v1791, %v1797
      %v2748 = vunpack.c.l.s4 1983009808
      %v2749 = vunpack.c.0.s8 %v2748
      %v2750 = vlaneseq
      %v2751 = vshrl.u32 %v2750, 7
      %v2752 = vsub.s32 %v2749, %v2751
      %v2753 = vrot.slane %v2745, %v2752
      %v2755 = vunpack.c.l.s4 1983009808
      %v2756 = vunpack.c.0.s8 %v2755
      %v2757 = vlaneseq
      %v2758 = vshrl.u32 %v2757, 7
      %v2759 = vsub.s32 %v2756, %v2758
      %v2760 = vrot.slane %v2746, %v2759
      %v2761 = vcombine.low %v1800, %v1806
      %v2762 = vcombine.high %v1800, %v1806
      %v2764 = vunpack.c.l.s4 1983009808
      %v2765 = vunpack.c.0.s8 %v2764
      %v2766 = vlaneseq
      %v2767 = vshrl.u32 %v2766, 7
      %v2768 = vsub.s32 %v2765, %v2767
      %v2769 = vrot.slane %v2761, %v2768
      %v2771 = vunpack.c.l.s4 1983009808
      %v2772 = vunpack.c.0.s8 %v2771
      %v2773 = vlaneseq
      %v2774 = vshrl.u32 %v2773, 7
      %v2775 = vsub.s32 %v2772, %v2774
      %v2776 = vrot.slane %v2762, %v2775
      %v2777 = vcombine.low %v1803, %v1809
      %v2778 = vcombine.high %v1803, %v1809
      %v2780 = vunpack.c.l.s4 1983009808
      %v2781 = vunpack.c.0.s8 %v2780
      %v2782 = vlaneseq
      %v2783 = vshrl.u32 %v2782, 7
      %v2784 = vsub.s32 %v2781, %v2783
      %v2785 = vrot.slane %v2777, %v2784
      %v2787 = vunpack.c.l.s4 1983009808
      %v2788 = vunpack.c.0.s8 %v2787
      %v2789 = vlaneseq
      %v2790 = vshrl.u32 %v2789, 7
      %v2791 = vsub.s32 %v2788, %v2790
      %v2792 = vrot.slane %v2778, %v2791
      %v2793 = vcombine.low %v2737, %v2753
      %v2794 = vcombine.high %v2737, %v2753
      %v2796 = vunpack.c.l.s4 1934713408
      %v2797 = vunpack.c.0.s8 %v2796
      %v2798 = vlaneseq
      %v2799 = vshrl.u32 %v2798, 7
      %v2800 = vsub.s32 %v2797, %v2799
      %v2801 = vrot.slane %v2793, %v2800
      %v2803 = vunpack.c.l.s4 1934713408
      %v2804 = vunpack.c.0.s8 %v2803
      %v2805 = vlaneseq
      %v2806 = vshrl.u32 %v2805, 7
      %v2807 = vsub.s32 %v2804, %v2806
      %v2808 = vrot.slane %v2794, %v2807
      %v2809 = vcombine.low %v2744, %v2760
      %v2810 = vcombine.high %v2744, %v2760
      %v2812 = vunpack.c.l.s4 1934713408
      %v2813 = vunpack.c.0.s8 %v2812
      %v2814 = vlaneseq
      %v2815 = vshrl.u32 %v2814, 7
      %v2816 = vsub.s32 %v2813, %v2815
      %v2817 = vrot.slane %v2809, %v2816
      %v2819 = vunpack.c.l.s4 1934713408
      %v2820 = vunpack.c.0.s8 %v2819
      %v2821 = vlaneseq
      %v2822 = vshrl.u32 %v2821, 7
      %v2823 = vsub.s32 %v2820, %v2822
      %v2824 = vrot.slane %v2810, %v2823
      %v2825 = vcombine.low %v2769, %v2785
      %v2826 = vcombine.high %v2769, %v2785
      %v2828 = vunpack.c.l.s4 1934713408
      %v2829 = vunpack.c.0.s8 %v2828
      %v2830 = vlaneseq
      %v2831 = vshrl.u32 %v2830, 7
      %v2832 = vsub.s32 %v2829, %v2831
      %v2833 = vrot.slane %v2825, %v2832
      %v2835 = vunpack.c.l.s4 1934713408
      %v2836 = vunpack.c.0.s8 %v2835
      %v2837 = vlaneseq
      %v2838 = vshrl.u32 %v2837, 7
      %v2839 = vsub.s32 %v2836, %v2838
      %v2840 = vrot.slane %v2826, %v2839
      %v2841 = vcombine.low %v2776, %v2792
      %v2842 = vcombine.high %v2776, %v2792
      %v2844 = vunpack.c.l.s4 1934713408
      %v2845 = vunpack.c.0.s8 %v2844
      %v2846 = vlaneseq
      %v2847 = vshrl.u32 %v2846, 7
      %v2848 = vsub.s32 %v2845, %v2847
      %v2849 = vrot.slane %v2841, %v2848
      %v2851 = vunpack.c.l.s4 1934713408
      %v2852 = vunpack.c.0.s8 %v2851
      %v2853 = vlaneseq
      %v2854 = vshrl.u32 %v2853, 7
      %v2855 = vsub.s32 %v2852, %v2854
      %v2856 = vrot.slane %v2842, %v2855
      %v2857 = vcombine.low %v2801, %v2833
      %v2858 = vcombine.high %v2801, %v2833
      %v2859 = vcombine.low %v2808, %v2840
      %v2860 = vcombine.high %v2808, %v2840
      %v2861 = vcombine.low %v2817, %v2849
      %v2862 = vcombine.high %v2817, %v2849
      %v2863 = vcombine.low %v2824, %v2856
      %v2864 = vcombine.high %v2824, %v2856
      %v2865 = vcombine.low %v1812, %v1818
      %v2866 = vcombine.high %v1812, %v1818
      %v2868 = vunpack.c.l.s4 1983009808
      %v2869 = vunpack.c.0.s8 %v2868
      %v2870 = vlaneseq
      %v2871 = vshrl.u32 %v2870, 7
      %v2872 = vsub.s32 %v2869, %v2871
      %v2873 = vrot.slane %v2865, %v2872
      %v2875 = vunpack.c.l.s4 1983009808
      %v2876 = vunpack.c.0.s8 %v2875
      %v2877 = vlaneseq
      %v2878 = vshrl.u32 %v2877, 7
      %v2879 = vsub.s32 %v2876, %v2878
      %v2880 = vrot.slane %v2866, %v2879
      %v2881 = vcombine.low %v1815, %v1821
      %v2882 = vcombine.high %v1815, %v1821
      %v2884 = vunpack.c.l.s4 1983009808
      %v2885 = vunpack.c.0.s8 %v2884
      %v2886 = vlaneseq
      %v2887 = vshrl.u32 %v2886, 7
      %v2888 = vsub.s32 %v2885, %v2887
      %v2889 = vrot.slane %v2881, %v2888
      %v2891 = vunpack.c.l.s4 1983009808
      %v2892 = vunpack.c.0.s8 %v2891
      %v2893 = vlaneseq
      %v2894 = vshrl.u32 %v2893, 7
      %v2895 = vsub.s32 %v2892, %v2894
      %v2896 = vrot.slane %v2882, %v2895
      %v2897 = vcombine.low %v1824, %v1830
      %v2898 = vcombine.high %v1824, %v1830
      %v2900 = vunpack.c.l.s4 1983009808
      %v2901 = vunpack.c.0.s8 %v2900
      %v2902 = vlaneseq
      %v2903 = vshrl.u32 %v2902, 7
      %v2904 = vsub.s32 %v2901, %v2903
      %v2905 = vrot.slane %v2897, %v2904
      %v2907 = vunpack.c.l.s4 1983009808
      %v2908 = vunpack.c.0.s8 %v2907
      %v2909 = vlaneseq
      %v2910 = vshrl.u32 %v2909, 7
      %v2911 = vsub.s32 %v2908, %v2910
      %v2912 = vrot.slane %v2898, %v2911
      %v2913 = vcombine.low %v1827, %v1833
      %v2914 = vcombine.high %v1827, %v1833
      %v2916 = vunpack.c.l.s4 1983009808
      %v2917 = vunpack.c.0.s8 %v2916
      %v2918 = vlaneseq
      %v2919 = vshrl.u32 %v2918, 7
      %v2920 = vsub.s32 %v2917, %v2919
      %v2921 = vrot.slane %v2913, %v2920
      %v2923 = vunpack.c.l.s4 1983009808
      %v2924 = vunpack.c.0.s8 %v2923
      %v2925 = vlaneseq
      %v2926 = vshrl.u32 %v2925, 7
      %v2927 = vsub.s32 %v2924, %v2926
      %v2928 = vrot.slane %v2914, %v2927
      %v2929 = vcombine.low %v2873, %v2889
      %v2930 = vcombine.high %v2873, %v2889
      %v2932 = vunpack.c.l.s4 1934713408
      %v2933 = vunpack.c.0.s8 %v2932
      %v2934 = vlaneseq
      %v2935 = vshrl.u32 %v2934, 7
      %v2936 = vsub.s32 %v2933, %v2935
      %v2937 = vrot.slane %v2929, %v2936
      %v2939 = vunpack.c.l.s4 1934713408
      %v2940 = vunpack.c.0.s8 %v2939
      %v2941 = vlaneseq
      %v2942 = vshrl.u32 %v2941, 7
      %v2943 = vsub.s32 %v2940, %v2942
      %v2944 = vrot.slane %v2930, %v2943
      %v2945 = vcombine.low %v2880, %v2896
      %v2946 = vcombine.high %v2880, %v2896
      %v2948 = vunpack.c.l.s4 1934713408
      %v2949 = vunpack.c.0.s8 %v2948
      %v2950 = vlaneseq
      %v2951 = vshrl.u32 %v2950, 7
      %v2952 = vsub.s32 %v2949, %v2951
      %v2953 = vrot.slane %v2945, %v2952
      %v2955 = vunpack.c.l.s4 1934713408
      %v2956 = vunpack.c.0.s8 %v2955
      %v2957 = vlaneseq
      %v2958 = vshrl.u32 %v2957, 7
      %v2959 = vsub.s32 %v2956, %v2958
      %v2960 = vrot.slane %v2946, %v2959
      %v2961 = vcombine.low %v2905, %v2921
      %v2962 = vcombine.high %v2905, %v2921
      %v2964 = vunpack.c.l.s4 1934713408
      %v2965 = vunpack.c.0.s8 %v2964
      %v2966 = vlaneseq
      %v2967 = vshrl.u32 %v2966, 7
      %v2968 = vsub.s32 %v2965, %v2967
      %v2969 = vrot.slane %v2961, %v2968
      %v2971 = vunpack.c.l.s4 1934713408
      %v2972 = vunpack.c.0.s8 %v2971
      %v2973 = vlaneseq
      %v2974 = vshrl.u32 %v2973, 7
      %v2975 = vsub.s32 %v2972, %v2974
      %v2976 = vrot.slane %v2962, %v2975
      %v2977 = vcombine.low %v2912, %v2928
      %v2978 = vcombine.high %v2912, %v2928
      %v2980 = vunpack.c.l.s4 1934713408
      %v2981 = vunpack.c.0.s8 %v2980
      %v2982 = vlaneseq
      %v2983 = vshrl.u32 %v2982, 7
      %v2984 = vsub.s32 %v2981, %v2983
      %v2985 = vrot.slane %v2977, %v2984
      %v2987 = vunpack.c.l.s4 1934713408
      %v2988 = vunpack.c.0.s8 %v2987
      %v2989 = vlaneseq
      %v2990 = vshrl.u32 %v2989, 7
      %v2991 = vsub.s32 %v2988, %v2990
      %v2992 = vrot.slane %v2978, %v2991
      %v2993 = vcombine.low %v2937, %v2969
      %v2994 = vcombine.high %v2937, %v2969
      %v2995 = vcombine.low %v2944, %v2976
      %v2996 = vcombine.high %v2944, %v2976
      %v2997 = vcombine.low %v2953, %v2985
      %v2998 = vcombine.high %v2953, %v2985
      %v2999 = vcombine.low %v2960, %v2992
      %v3000 = vcombine.high %v2960, %v2992
      %v3001 = vcombine.low %v1836, %v1842
      %v3002 = vcombine.high %v1836, %v1842
      %v3004 = vunpack.c.l.s4 1983009808
      %v3005 = vunpack.c.0.s8 %v3004
      %v3006 = vlaneseq
      %v3007 = vshrl.u32 %v3006, 7
      %v3008 = vsub.s32 %v3005, %v3007
      %v3009 = vrot.slane %v3001, %v3008
      %v3011 = vunpack.c.l.s4 1983009808
      %v3012 = vunpack.c.0.s8 %v3011
      %v3013 = vlaneseq
      %v3014 = vshrl.u32 %v3013, 7
      %v3015 = vsub.s32 %v3012, %v3014
      %v3016 = vrot.slane %v3002, %v3015
      %v3017 = vcombine.low %v1839, %v1845
      %v3018 = vcombine.high %v1839, %v1845
      %v3020 = vunpack.c.l.s4 1983009808
      %v3021 = vunpack.c.0.s8 %v3020
      %v3022 = vlaneseq
      %v3023 = vshrl.u32 %v3022, 7
      %v3024 = vsub.s32 %v3021, %v3023
      %v3025 = vrot.slane %v3017, %v3024
      %v3027 = vunpack.c.l.s4 1983009808
      %v3028 = vunpack.c.0.s8 %v3027
      %v3029 = vlaneseq
      %v3030 = vshrl.u32 %v3029, 7
      %v3031 = vsub.s32 %v3028, %v3030
      %v3032 = vrot.slane %v3018, %v3031
      %v3033 = vcombine.low %v1848, %v1854
      %v3034 = vcombine.high %v1848, %v1854
      %v3036 = vunpack.c.l.s4 1983009808
      %v3037 = vunpack.c.0.s8 %v3036
      %v3038 = vlaneseq
      %v3039 = vshrl.u32 %v3038, 7
      %v3040 = vsub.s32 %v3037, %v3039
      %v3041 = vrot.slane %v3033, %v3040
      %v3043 = vunpack.c.l.s4 1983009808
      %v3044 = vunpack.c.0.s8 %v3043
      %v3045 = vlaneseq
      %v3046 = vshrl.u32 %v3045, 7
      %v3047 = vsub.s32 %v3044, %v3046
      %v3048 = vrot.slane %v3034, %v3047
      %v3049 = vcombine.low %v1851, %v1857
      %v3050 = vcombine.high %v1851, %v1857
      %v3052 = vunpack.c.l.s4 1983009808
      %v3053 = vunpack.c.0.s8 %v3052
      %v3054 = vlaneseq
      %v3055 = vshrl.u32 %v3054, 7
      %v3056 = vsub.s32 %v3053, %v3055
      %v3057 = vrot.slane %v3049, %v3056
      %v3059 = vunpack.c.l.s4 1983009808
      %v3060 = vunpack.c.0.s8 %v3059
      %v3061 = vlaneseq
      %v3062 = vshrl.u32 %v3061, 7
      %v3063 = vsub.s32 %v3060, %v3062
      %v3064 = vrot.slane %v3050, %v3063
      %v3065 = vcombine.low %v3009, %v3025
      %v3066 = vcombine.high %v3009, %v3025
      %v3068 = vunpack.c.l.s4 1934713408
      %v3069 = vunpack.c.0.s8 %v3068
      %v3070 = vlaneseq
      %v3071 = vshrl.u32 %v3070, 7
      %v3072 = vsub.s32 %v3069, %v3071
      %v3073 = vrot.slane %v3065, %v3072
      %v3075 = vunpack.c.l.s4 1934713408
      %v3076 = vunpack.c.0.s8 %v3075
      %v3077 = vlaneseq
      %v3078 = vshrl.u32 %v3077, 7
      %v3079 = vsub.s32 %v3076, %v3078
      %v3080 = vrot.slane %v3066, %v3079
      %v3081 = vcombine.low %v3016, %v3032
      %v3082 = vcombine.high %v3016, %v3032
      %v3084 = vunpack.c.l.s4 1934713408
      %v3085 = vunpack.c.0.s8 %v3084
      %v3086 = vlaneseq
      %v3087 = vshrl.u32 %v3086, 7
      %v3088 = vsub.s32 %v3085, %v3087
      %v3089 = vrot.slane %v3081, %v3088
      %v3091 = vunpack.c.l.s4 1934713408
      %v3092 = vunpack.c.0.s8 %v3091
      %v3093 = vlaneseq
      %v3094 = vshrl.u32 %v3093, 7
      %v3095 = vsub.s32 %v3092, %v3094
      %v3096 = vrot.slane %v3082, %v3095
      %v3097 = vcombine.low %v3041, %v3057
      %v3098 = vcombine.high %v3041, %v3057
      %v3100 = vunpack.c.l.s4 1934713408
      %v3101 = vunpack.c.0.s8 %v3100
      %v3102 = vlaneseq
      %v3103 = vshrl.u32 %v3102, 7
      %v3104 = vsub.s32 %v3101, %v3103
      %v3105 = vrot.slane %v3097, %v3104
      %v3107 = vunpack.c.l.s4 1934713408
      %v3108 = vunpack.c.0.s8 %v3107
      %v3109 = vlaneseq
      %v3110 = vshrl.u32 %v3109, 7
      %v3111 = vsub.s32 %v3108, %v3110
      %v3112 = vrot.slane %v3098, %v3111
      %v3113 = vcombine.low %v3048, %v3064
      %v3114 = vcombine.high %v3048, %v3064
      %v3116 = vunpack.c.l.s4 1934713408
      %v3117 = vunpack.c.0.s8 %v3116
      %v3118 = vlaneseq
      %v3119 = vshrl.u32 %v3118, 7
      %v3120 = vsub.s32 %v3117, %v3119
      %v3121 = vrot.slane %v3113, %v3120
      %v3123 = vunpack.c.l.s4 1934713408
      %v3124 = vunpack.c.0.s8 %v3123
      %v3125 = vlaneseq
      %v3126 = vshrl.u32 %v3125, 7
      %v3127 = vsub.s32 %v3124, %v3126
      %v3128 = vrot.slane %v3114, %v3127
      %v3129 = vcombine.low %v3073, %v3105
      %v3130 = vcombine.high %v3073, %v3105
      %v3131 = vcombine.low %v3080, %v3112
      %v3132 = vcombine.high %v3080, %v3112
      %v3133 = vcombine.low %v3089, %v3121
      %v3134 = vcombine.high %v3089, %v3121
      %v3135 = vcombine.low %v3096, %v3128
      %v3136 = vcombine.high %v3096, %v3128
      %v3137 = vcombine.low %v1668, %v1864
      %v3138 = vcombine.high %v1668, %v1864
      %v3140 = vunpack.c.l.s4 1983009808
      %v3141 = vunpack.c.0.s8 %v3140
      %v3142 = vlaneseq
      %v3143 = vshrl.u32 %v3142, 7
      %v3144 = vsub.s32 %v3141, %v3143
      %v3145 = vrot.slane %v3137, %v3144
      %v3147 = vunpack.c.l.s4 1983009808
      %v3148 = vunpack.c.0.s8 %v3147
      %v3149 = vlaneseq
      %v3150 = vshrl.u32 %v3149, 7
      %v3151 = vsub.s32 %v3148, %v3150
      %v3152 = vrot.slane %v3138, %v3151
      %v3153 = vcombine.low %v1861, %v1867
      %v3154 = vcombine.high %v1861, %v1867
      %v3156 = vunpack.c.l.s4 1983009808
      %v3157 = vunpack.c.0.s8 %v3156
      %v3158 = vlaneseq
      %v3159 = vshrl.u32 %v3158, 7
      %v3160 = vsub.s32 %v3157, %v3159
      %v3161 = vrot.slane %v3153, %v3160
      %v3163 = vunpack.c.l.s4 1983009808
      %v3164 = vunpack.c.0.s8 %v3163
      %v3165 = vlaneseq
      %v3166 = vshrl.u32 %v3165, 7
      %v3167 = vsub.s32 %v3164, %v3166
      %v3168 = vrot.slane %v3154, %v3167
      %v3169 = vcombine.low %v1870, %v1876
      %v3170 = vcombine.high %v1870, %v1876
      %v3172 = vunpack.c.l.s4 1983009808
      %v3173 = vunpack.c.0.s8 %v3172
      %v3174 = vlaneseq
      %v3175 = vshrl.u32 %v3174, 7
      %v3176 = vsub.s32 %v3173, %v3175
      %v3177 = vrot.slane %v3169, %v3176
      %v3179 = vunpack.c.l.s4 1983009808
      %v3180 = vunpack.c.0.s8 %v3179
      %v3181 = vlaneseq
      %v3182 = vshrl.u32 %v3181, 7
      %v3183 = vsub.s32 %v3180, %v3182
      %v3184 = vrot.slane %v3170, %v3183
      %v3185 = vcombine.low %v1873, %v1879
      %v3186 = vcombine.high %v1873, %v1879
      %v3188 = vunpack.c.l.s4 1983009808
      %v3189 = vunpack.c.0.s8 %v3188
      %v3190 = vlaneseq
      %v3191 = vshrl.u32 %v3190, 7
      %v3192 = vsub.s32 %v3189, %v3191
      %v3193 = vrot.slane %v3185, %v3192
      %v3195 = vunpack.c.l.s4 1983009808
      %v3196 = vunpack.c.0.s8 %v3195
      %v3197 = vlaneseq
      %v3198 = vshrl.u32 %v3197, 7
      %v3199 = vsub.s32 %v3196, %v3198
      %v3200 = vrot.slane %v3186, %v3199
      %v3201 = vcombine.low %v3145, %v3161
      %v3202 = vcombine.high %v3145, %v3161
      %v3204 = vunpack.c.l.s4 1934713408
      %v3205 = vunpack.c.0.s8 %v3204
      %v3206 = vlaneseq
      %v3207 = vshrl.u32 %v3206, 7
      %v3208 = vsub.s32 %v3205, %v3207
      %v3209 = vrot.slane %v3201, %v3208
      %v3211 = vunpack.c.l.s4 1934713408
      %v3212 = vunpack.c.0.s8 %v3211
      %v3213 = vlaneseq
      %v3214 = vshrl.u32 %v3213, 7
      %v3215 = vsub.s32 %v3212, %v3214
      %v3216 = vrot.slane %v3202, %v3215
      %v3217 = vcombine.low %v3152, %v3168
      %v3218 = vcombine.high %v3152, %v3168
      %v3220 = vunpack.c.l.s4 1934713408
      %v3221 = vunpack.c.0.s8 %v3220
      %v3222 = vlaneseq
      %v3223 = vshrl.u32 %v3222, 7
      %v3224 = vsub.s32 %v3221, %v3223
      %v3225 = vrot.slane %v3217, %v3224
      %v3227 = vunpack.c.l.s4 1934713408
      %v3228 = vunpack.c.0.s8 %v3227
      %v3229 = vlaneseq
      %v3230 = vshrl.u32 %v3229, 7
      %v3231 = vsub.s32 %v3228, %v3230
      %v3232 = vrot.slane %v3218, %v3231
      %v3233 = vcombine.low %v3177, %v3193
      %v3234 = vcombine.high %v3177, %v3193
      %v3236 = vunpack.c.l.s4 1934713408
      %v3237 = vunpack.c.0.s8 %v3236
      %v3238 = vlaneseq
      %v3239 = vshrl.u32 %v3238, 7
      %v3240 = vsub.s32 %v3237, %v3239
      %v3241 = vrot.slane %v3233, %v3240
      %v3243 = vunpack.c.l.s4 1934713408
      %v3244 = vunpack.c.0.s8 %v3243
      %v3245 = vlaneseq
      %v3246 = vshrl.u32 %v3245, 7
      %v3247 = vsub.s32 %v3244, %v3246
      %v3248 = vrot.slane %v3234, %v3247
      %v3249 = vcombine.low %v3184, %v3200
      %v3250 = vcombine.high %v3184, %v3200
      %v3252 = vunpack.c.l.s4 1934713408
      %v3253 = vunpack.c.0.s8 %v3252
      %v3254 = vlaneseq
      %v3255 = vshrl.u32 %v3254, 7
      %v3256 = vsub.s32 %v3253, %v3255
      %v3257 = vrot.slane %v3249, %v3256
      %v3259 = vunpack.c.l.s4 1934713408
      %v3260 = vunpack.c.0.s8 %v3259
      %v3261 = vlaneseq
      %v3262 = vshrl.u32 %v3261, 7
      %v3263 = vsub.s32 %v3260, %v3262
      %v3264 = vrot.slane %v3250, %v3263
      %v3265 = vcombine.low %v3209, %v3241
      %v3266 = vcombine.high %v3209, %v3241
      %v3267 = vcombine.low %v3216, %v3248
      %v3268 = vcombine.high %v3216, %v3248
      %v3269 = vcombine.low %v3225, %v3257
      %v3270 = vcombine.high %v3225, %v3257
      %v3271 = vcombine.low %v3232, %v3264
      %v3272 = vcombine.high %v3232, %v3264
      %v3273 = vcombine.low %v1882, %v1888
      %v3274 = vcombine.high %v1882, %v1888
      %v3276 = vunpack.c.l.s4 1983009808
      %v3277 = vunpack.c.0.s8 %v3276
      %v3278 = vlaneseq
      %v3279 = vshrl.u32 %v3278, 7
      %v3280 = vsub.s32 %v3277, %v3279
      %v3281 = vrot.slane %v3273, %v3280
      %v3283 = vunpack.c.l.s4 1983009808
      %v3284 = vunpack.c.0.s8 %v3283
      %v3285 = vlaneseq
      %v3286 = vshrl.u32 %v3285, 7
      %v3287 = vsub.s32 %v3284, %v3286
      %v3288 = vrot.slane %v3274, %v3287
      %v3289 = vcombine.low %v1885, %v1891
      %v3290 = vcombine.high %v1885, %v1891
      %v3292 = vunpack.c.l.s4 1983009808
      %v3293 = vunpack.c.0.s8 %v3292
      %v3294 = vlaneseq
      %v3295 = vshrl.u32 %v3294, 7
      %v3296 = vsub.s32 %v3293, %v3295
      %v3297 = vrot.slane %v3289, %v3296
      %v3299 = vunpack.c.l.s4 1983009808
      %v3300 = vunpack.c.0.s8 %v3299
      %v3301 = vlaneseq
      %v3302 = vshrl.u32 %v3301, 7
      %v3303 = vsub.s32 %v3300, %v3302
      %v3304 = vrot.slane %v3290, %v3303
      %v3305 = vcombine.low %v1894, %v1900
      %v3306 = vcombine.high %v1894, %v1900
      %v3308 = vunpack.c.l.s4 1983009808
      %v3309 = vunpack.c.0.s8 %v3308
      %v3310 = vlaneseq
      %v3311 = vshrl.u32 %v3310, 7
      %v3312 = vsub.s32 %v3309, %v3311
      %v3313 = vrot.slane %v3305, %v3312
      %v3315 = vunpack.c.l.s4 1983009808
      %v3316 = vunpack.c.0.s8 %v3315
      %v3317 = vlaneseq
      %v3318 = vshrl.u32 %v3317, 7
      %v3319 = vsub.s32 %v3316, %v3318
      %v3320 = vrot.slane %v3306, %v3319
      %v3321 = vcombine.low %v1897, %v1903
      %v3322 = vcombine.high %v1897, %v1903
      %v3324 = vunpack.c.l.s4 1983009808
      %v3325 = vunpack.c.0.s8 %v3324
      %v3326 = vlaneseq
      %v3327 = vshrl.u32 %v3326, 7
      %v3328 = vsub.s32 %v3325, %v3327
      %v3329 = vrot.slane %v3321, %v3328
      %v3331 = vunpack.c.l.s4 1983009808
      %v3332 = vunpack.c.0.s8 %v3331
      %v3333 = vlaneseq
      %v3334 = vshrl.u32 %v3333, 7
      %v3335 = vsub.s32 %v3332, %v3334
      %v3336 = vrot.slane %v3322, %v3335
      %v3337 = vcombine.low %v3281, %v3297
      %v3338 = vcombine.high %v3281, %v3297
      %v3340 = vunpack.c.l.s4 1934713408
      %v3341 = vunpack.c.0.s8 %v3340
      %v3342 = vlaneseq
      %v3343 = vshrl.u32 %v3342, 7
      %v3344 = vsub.s32 %v3341, %v3343
      %v3345 = vrot.slane %v3337, %v3344
      %v3347 = vunpack.c.l.s4 1934713408
      %v3348 = vunpack.c.0.s8 %v3347
      %v3349 = vlaneseq
      %v3350 = vshrl.u32 %v3349, 7
      %v3351 = vsub.s32 %v3348, %v3350
      %v3352 = vrot.slane %v3338, %v3351
      %v3353 = vcombine.low %v3288, %v3304
      %v3354 = vcombine.high %v3288, %v3304
      %v3356 = vunpack.c.l.s4 1934713408
      %v3357 = vunpack.c.0.s8 %v3356
      %v3358 = vlaneseq
      %v3359 = vshrl.u32 %v3358, 7
      %v3360 = vsub.s32 %v3357, %v3359
      %v3361 = vrot.slane %v3353, %v3360
      %v3363 = vunpack.c.l.s4 1934713408
      %v3364 = vunpack.c.0.s8 %v3363
      %v3365 = vlaneseq
      %v3366 = vshrl.u32 %v3365, 7
      %v3367 = vsub.s32 %v3364, %v3366
      %v3368 = vrot.slane %v3354, %v3367
      %v3369 = vcombine.low %v3313, %v3329
      %v3370 = vcombine.high %v3313, %v3329
      %v3372 = vunpack.c.l.s4 1934713408
      %v3373 = vunpack.c.0.s8 %v3372
      %v3374 = vlaneseq
      %v3375 = vshrl.u32 %v3374, 7
      %v3376 = vsub.s32 %v3373, %v3375
      %v3377 = vrot.slane %v3369, %v3376
      %v3379 = vunpack.c.l.s4 1934713408
      %v3380 = vunpack.c.0.s8 %v3379
      %v3381 = vlaneseq
      %v3382 = vshrl.u32 %v3381, 7
      %v3383 = vsub.s32 %v3380, %v3382
      %v3384 = vrot.slane %v3370, %v3383
      %v3385 = vcombine.low %v3320, %v3336
      %v3386 = vcombine.high %v3320, %v3336
      %v3388 = vunpack.c.l.s4 1934713408
      %v3389 = vunpack.c.0.s8 %v3388
      %v3390 = vlaneseq
      %v3391 = vshrl.u32 %v3390, 7
      %v3392 = vsub.s32 %v3389, %v3391
      %v3393 = vrot.slane %v3385, %v3392
      %v3395 = vunpack.c.l.s4 1934713408
      %v3396 = vunpack.c.0.s8 %v3395
      %v3397 = vlaneseq
      %v3398 = vshrl.u32 %v3397, 7
      %v3399 = vsub.s32 %v3396, %v3398
      %v3400 = vrot.slane %v3386, %v3399
      %v3401 = vcombine.low %v3345, %v3377
      %v3402 = vcombine.high %v3345, %v3377
      %v3403 = vcombine.low %v3352, %v3384
      %v3404 = vcombine.high %v3352, %v3384
      %v3405 = vcombine.low %v3361, %v3393
      %v3406 = vcombine.high %v3361, %v3393
      %v3407 = vcombine.low %v3368, %v3400
      %v3408 = vcombine.high %v3368, %v3400
      %v3409 = vcombine.low %v1906, %v1912
      %v3410 = vcombine.high %v1906, %v1912
      %v3412 = vunpack.c.l.s4 1983009808
      %v3413 = vunpack.c.0.s8 %v3412
      %v3414 = vlaneseq
      %v3415 = vshrl.u32 %v3414, 7
      %v3416 = vsub.s32 %v3413, %v3415
      %v3417 = vrot.slane %v3409, %v3416
      %v3419 = vunpack.c.l.s4 1983009808
      %v3420 = vunpack.c.0.s8 %v3419
      %v3421 = vlaneseq
      %v3422 = vshrl.u32 %v3421, 7
      %v3423 = vsub.s32 %v3420, %v3422
      %v3424 = vrot.slane %v3410, %v3423
      %v3425 = vcombine.low %v1909, %v1915
      %v3426 = vcombine.high %v1909, %v1915
      %v3428 = vunpack.c.l.s4 1983009808
      %v3429 = vunpack.c.0.s8 %v3428
      %v3430 = vlaneseq
      %v3431 = vshrl.u32 %v3430, 7
      %v3432 = vsub.s32 %v3429, %v3431
      %v3433 = vrot.slane %v3425, %v3432
      %v3435 = vunpack.c.l.s4 1983009808
      %v3436 = vunpack.c.0.s8 %v3435
      %v3437 = vlaneseq
      %v3438 = vshrl.u32 %v3437, 7
      %v3439 = vsub.s32 %v3436, %v3438
      %v3440 = vrot.slane %v3426, %v3439
      %v3441 = vcombine.low %v1918, %v1924
      %v3442 = vcombine.high %v1918, %v1924
      %v3444 = vunpack.c.l.s4 1983009808
      %v3445 = vunpack.c.0.s8 %v3444
      %v3446 = vlaneseq
      %v3447 = vshrl.u32 %v3446, 7
      %v3448 = vsub.s32 %v3445, %v3447
      %v3449 = vrot.slane %v3441, %v3448
      %v3451 = vunpack.c.l.s4 1983009808
      %v3452 = vunpack.c.0.s8 %v3451
      %v3453 = vlaneseq
      %v3454 = vshrl.u32 %v3453, 7
      %v3455 = vsub.s32 %v3452, %v3454
      %v3456 = vrot.slane %v3442, %v3455
      %v3457 = vcombine.low %v1921, %v1927
      %v3458 = vcombine.high %v1921, %v1927
      %v3460 = vunpack.c.l.s4 1983009808
      %v3461 = vunpack.c.0.s8 %v3460
      %v3462 = vlaneseq
      %v3463 = vshrl.u32 %v3462, 7
      %v3464 = vsub.s32 %v3461, %v3463
      %v3465 = vrot.slane %v3457, %v3464
      %v3467 = vunpack.c.l.s4 1983009808
      %v3468 = vunpack.c.0.s8 %v3467
      %v3469 = vlaneseq
      %v3470 = vshrl.u32 %v3469, 7
      %v3471 = vsub.s32 %v3468, %v3470
      %v3472 = vrot.slane %v3458, %v3471
      %v3473 = vcombine.low %v3417, %v3433
      %v3474 = vcombine.high %v3417, %v3433
      %v3476 = vunpack.c.l.s4 1934713408
      %v3477 = vunpack.c.0.s8 %v3476
      %v3478 = vlaneseq
      %v3479 = vshrl.u32 %v3478, 7
      %v3480 = vsub.s32 %v3477, %v3479
      %v3481 = vrot.slane %v3473, %v3480
      %v3483 = vunpack.c.l.s4 1934713408
      %v3484 = vunpack.c.0.s8 %v3483
      %v3485 = vlaneseq
      %v3486 = vshrl.u32 %v3485, 7
      %v3487 = vsub.s32 %v3484, %v3486
      %v3488 = vrot.slane %v3474, %v3487
      %v3489 = vcombine.low %v3424, %v3440
      %v3490 = vcombine.high %v3424, %v3440
      %v3492 = vunpack.c.l.s4 1934713408
      %v3493 = vunpack.c.0.s8 %v3492
      %v3494 = vlaneseq
      %v3495 = vshrl.u32 %v3494, 7
      %v3496 = vsub.s32 %v3493, %v3495
      %v3497 = vrot.slane %v3489, %v3496
      %v3499 = vunpack.c.l.s4 1934713408
      %v3500 = vunpack.c.0.s8 %v3499
      %v3501 = vlaneseq
      %v3502 = vshrl.u32 %v3501, 7
      %v3503 = vsub.s32 %v3500, %v3502
      %v3504 = vrot.slane %v3490, %v3503
      %v3505 = vcombine.low %v3449, %v3465
      %v3506 = vcombine.high %v3449, %v3465
      %v3508 = vunpack.c.l.s4 1934713408
      %v3509 = vunpack.c.0.s8 %v3508
      %v3510 = vlaneseq
      %v3511 = vshrl.u32 %v3510, 7
      %v3512 = vsub.s32 %v3509, %v3511
      %v3513 = vrot.slane %v3505, %v3512
      %v3515 = vunpack.c.l.s4 1934713408
      %v3516 = vunpack.c.0.s8 %v3515
      %v3517 = vlaneseq
      %v3518 = vshrl.u32 %v3517, 7
      %v3519 = vsub.s32 %v3516, %v3518
      %v3520 = vrot.slane %v3506, %v3519
      %v3521 = vcombine.low %v3456, %v3472
      %v3522 = vcombine.high %v3456, %v3472
      %v3524 = vunpack.c.l.s4 1934713408
      %v3525 = vunpack.c.0.s8 %v3524
      %v3526 = vlaneseq
      %v3527 = vshrl.u32 %v3526, 7
      %v3528 = vsub.s32 %v3525, %v3527
      %v3529 = vrot.slane %v3521, %v3528
      %v3531 = vunpack.c.l.s4 1934713408
      %v3532 = vunpack.c.0.s8 %v3531
      %v3533 = vlaneseq
      %v3534 = vshrl.u32 %v3533, 7
      %v3535 = vsub.s32 %v3532, %v3534
      %v3536 = vrot.slane %v3522, %v3535
      %v3537 = vcombine.low %v3481, %v3513
      %v3538 = vcombine.high %v3481, %v3513
      %v3539 = vcombine.low %v3488, %v3520
      %v3540 = vcombine.high %v3488, %v3520
      %v3541 = vcombine.low %v3497, %v3529
      %v3542 = vcombine.high %v3497, %v3529
      %v3543 = vcombine.low %v3504, %v3536
      %v3544 = vcombine.high %v3504, %v3536
      %v3545 = vcombine.low %v1930, %v1936
      %v3546 = vcombine.high %v1930, %v1936
      %v3548 = vunpack.c.l.s4 1983009808
      %v3549 = vunpack.c.0.s8 %v3548
      %v3550 = vlaneseq
      %v3551 = vshrl.u32 %v3550, 7
      %v3552 = vsub.s32 %v3549, %v3551
      %v3553 = vrot.slane %v3545, %v3552
      %v3555 = vunpack.c.l.s4 1983009808
      %v3556 = vunpack.c.0.s8 %v3555
      %v3557 = vlaneseq
      %v3558 = vshrl.u32 %v3557, 7
      %v3559 = vsub.s32 %v3556, %v3558
      %v3560 = vrot.slane %v3546, %v3559
      %v3561 = vcombine.low %v1933, %v1939
      %v3562 = vcombine.high %v1933, %v1939
      %v3564 = vunpack.c.l.s4 1983009808
      %v3565 = vunpack.c.0.s8 %v3564
      %v3566 = vlaneseq
      %v3567 = vshrl.u32 %v3566, 7
      %v3568 = vsub.s32 %v3565, %v3567
      %v3569 = vrot.slane %v3561, %v3568
      %v3571 = vunpack.c.l.s4 1983009808
      %v3572 = vunpack.c.0.s8 %v3571
      %v3573 = vlaneseq
      %v3574 = vshrl.u32 %v3573, 7
      %v3575 = vsub.s32 %v3572, %v3574
      %v3576 = vrot.slane %v3562, %v3575
      %v3577 = vcombine.low %v1942, %v1948
      %v3578 = vcombine.high %v1942, %v1948
      %v3580 = vunpack.c.l.s4 1983009808
      %v3581 = vunpack.c.0.s8 %v3580
      %v3582 = vlaneseq
      %v3583 = vshrl.u32 %v3582, 7
      %v3584 = vsub.s32 %v3581, %v3583
      %v3585 = vrot.slane %v3577, %v3584
      %v3587 = vunpack.c.l.s4 1983009808
      %v3588 = vunpack.c.0.s8 %v3587
      %v3589 = vlaneseq
      %v3590 = vshrl.u32 %v3589, 7
      %v3591 = vsub.s32 %v3588, %v3590
      %v3592 = vrot.slane %v3578, %v3591
      %v3593 = vcombine.low %v1945, %v1951
      %v3594 = vcombine.high %v1945, %v1951
      %v3596 = vunpack.c.l.s4 1983009808
      %v3597 = vunpack.c.0.s8 %v3596
      %v3598 = vlaneseq
      %v3599 = vshrl.u32 %v3598, 7
      %v3600 = vsub.s32 %v3597, %v3599
      %v3601 = vrot.slane %v3593, %v3600
      %v3603 = vunpack.c.l.s4 1983009808
      %v3604 = vunpack.c.0.s8 %v3603
      %v3605 = vlaneseq
      %v3606 = vshrl.u32 %v3605, 7
      %v3607 = vsub.s32 %v3604, %v3606
      %v3608 = vrot.slane %v3594, %v3607
      %v3609 = vcombine.low %v3553, %v3569
      %v3610 = vcombine.high %v3553, %v3569
      %v3612 = vunpack.c.l.s4 1934713408
      %v3613 = vunpack.c.0.s8 %v3612
      %v3614 = vlaneseq
      %v3615 = vshrl.u32 %v3614, 7
      %v3616 = vsub.s32 %v3613, %v3615
      %v3617 = vrot.slane %v3609, %v3616
      %v3619 = vunpack.c.l.s4 1934713408
      %v3620 = vunpack.c.0.s8 %v3619
      %v3621 = vlaneseq
      %v3622 = vshrl.u32 %v3621, 7
      %v3623 = vsub.s32 %v3620, %v3622
      %v3624 = vrot.slane %v3610, %v3623
      %v3625 = vcombine.low %v3560, %v3576
      %v3626 = vcombine.high %v3560, %v3576
      %v3628 = vunpack.c.l.s4 1934713408
      %v3629 = vunpack.c.0.s8 %v3628
      %v3630 = vlaneseq
      %v3631 = vshrl.u32 %v3630, 7
      %v3632 = vsub.s32 %v3629, %v3631
      %v3633 = vrot.slane %v3625, %v3632
      %v3635 = vunpack.c.l.s4 1934713408
      %v3636 = vunpack.c.0.s8 %v3635
      %v3637 = vlaneseq
      %v3638 = vshrl.u32 %v3637, 7
      %v3639 = vsub.s32 %v3636, %v3638
      %v3640 = vrot.slane %v3626, %v3639
      %v3641 = vcombine.low %v3585, %v3601
      %v3642 = vcombine.high %v3585, %v3601
      %v3644 = vunpack.c.l.s4 1934713408
      %v3645 = vunpack.c.0.s8 %v3644
      %v3646 = vlaneseq
      %v3647 = vshrl.u32 %v3646, 7
      %v3648 = vsub.s32 %v3645, %v3647
      %v3649 = vrot.slane %v3641, %v3648
      %v3651 = vunpack.c.l.s4 1934713408
      %v3652 = vunpack.c.0.s8 %v3651
      %v3653 = vlaneseq
      %v3654 = vshrl.u32 %v3653, 7
      %v3655 = vsub.s32 %v3652, %v3654
      %v3656 = vrot.slane %v3642, %v3655
      %v3657 = vcombine.low %v3592, %v3608
      %v3658 = vcombine.high %v3592, %v3608
      %v3660 = vunpack.c.l.s4 1934713408
      %v3661 = vunpack.c.0.s8 %v3660
      %v3662 = vlaneseq
      %v3663 = vshrl.u32 %v3662, 7
      %v3664 = vsub.s32 %v3661, %v3663
      %v3665 = vrot.slane %v3657, %v3664
      %v3667 = vunpack.c.l.s4 1934713408
      %v3668 = vunpack.c.0.s8 %v3667
      %v3669 = vlaneseq
      %v3670 = vshrl.u32 %v3669, 7
      %v3671 = vsub.s32 %v3668, %v3670
      %v3672 = vrot.slane %v3658, %v3671
      %v3673 = vcombine.low %v3617, %v3649
      %v3674 = vcombine.high %v3617, %v3649
      %v3675 = vcombine.low %v3624, %v3656
      %v3676 = vcombine.high %v3624, %v3656
      %v3677 = vcombine.low %v3633, %v3665
      %v3678 = vcombine.high %v3633, %v3665
      %v3679 = vcombine.low %v3640, %v3672
      %v3680 = vcombine.high %v3640, %v3672
      %v3681 = vcombine.low %v1954, %v1960
      %v3682 = vcombine.high %v1954, %v1960
      %v3684 = vunpack.c.l.s4 1983009808
      %v3685 = vunpack.c.0.s8 %v3684
      %v3686 = vlaneseq
      %v3687 = vshrl.u32 %v3686, 7
      %v3688 = vsub.s32 %v3685, %v3687
      %v3689 = vrot.slane %v3681, %v3688
      %v3691 = vunpack.c.l.s4 1983009808
      %v3692 = vunpack.c.0.s8 %v3691
      %v3693 = vlaneseq
      %v3694 = vshrl.u32 %v3693, 7
      %v3695 = vsub.s32 %v3692, %v3694
      %v3696 = vrot.slane %v3682, %v3695
      %v3697 = vcombine.low %v1957, %v1963
      %v3698 = vcombine.high %v1957, %v1963
      %v3700 = vunpack.c.l.s4 1983009808
      %v3701 = vunpack.c.0.s8 %v3700
      %v3702 = vlaneseq
      %v3703 = vshrl.u32 %v3702, 7
      %v3704 = vsub.s32 %v3701, %v3703
      %v3705 = vrot.slane %v3697, %v3704
      %v3707 = vunpack.c.l.s4 1983009808
      %v3708 = vunpack.c.0.s8 %v3707
      %v3709 = vlaneseq
      %v3710 = vshrl.u32 %v3709, 7
      %v3711 = vsub.s32 %v3708, %v3710
      %v3712 = vrot.slane %v3698, %v3711
      %v3713 = vcombine.low %v1966, %v1972
      %v3714 = vcombine.high %v1966, %v1972
      %v3716 = vunpack.c.l.s4 1983009808
      %v3717 = vunpack.c.0.s8 %v3716
      %v3718 = vlaneseq
      %v3719 = vshrl.u32 %v3718, 7
      %v3720 = vsub.s32 %v3717, %v3719
      %v3721 = vrot.slane %v3713, %v3720
      %v3723 = vunpack.c.l.s4 1983009808
      %v3724 = vunpack.c.0.s8 %v3723
      %v3725 = vlaneseq
      %v3726 = vshrl.u32 %v3725, 7
      %v3727 = vsub.s32 %v3724, %v3726
      %v3728 = vrot.slane %v3714, %v3727
      %v3729 = vcombine.low %v1969, %v1975
      %v3730 = vcombine.high %v1969, %v1975
      %v3732 = vunpack.c.l.s4 1983009808
      %v3733 = vunpack.c.0.s8 %v3732
      %v3734 = vlaneseq
      %v3735 = vshrl.u32 %v3734, 7
      %v3736 = vsub.s32 %v3733, %v3735
      %v3737 = vrot.slane %v3729, %v3736
      %v3739 = vunpack.c.l.s4 1983009808
      %v3740 = vunpack.c.0.s8 %v3739
      %v3741 = vlaneseq
      %v3742 = vshrl.u32 %v3741, 7
      %v3743 = vsub.s32 %v3740, %v3742
      %v3744 = vrot.slane %v3730, %v3743
      %v3745 = vcombine.low %v3689, %v3705
      %v3746 = vcombine.high %v3689, %v3705
      %v3748 = vunpack.c.l.s4 1934713408
      %v3749 = vunpack.c.0.s8 %v3748
      %v3750 = vlaneseq
      %v3751 = vshrl.u32 %v3750, 7
      %v3752 = vsub.s32 %v3749, %v3751
      %v3753 = vrot.slane %v3745, %v3752
      %v3755 = vunpack.c.l.s4 1934713408
      %v3756 = vunpack.c.0.s8 %v3755
      %v3757 = vlaneseq
      %v3758 = vshrl.u32 %v3757, 7
      %v3759 = vsub.s32 %v3756, %v3758
      %v3760 = vrot.slane %v3746, %v3759
      %v3761 = vcombine.low %v3696, %v3712
      %v3762 = vcombine.high %v3696, %v3712
      %v3764 = vunpack.c.l.s4 1934713408
      %v3765 = vunpack.c.0.s8 %v3764
      %v3766 = vlaneseq
      %v3767 = vshrl.u32 %v3766, 7
      %v3768 = vsub.s32 %v3765, %v3767
      %v3769 = vrot.slane %v3761, %v3768
      %v3771 = vunpack.c.l.s4 1934713408
      %v3772 = vunpack.c.0.s8 %v3771
      %v3773 = vlaneseq
      %v3774 = vshrl.u32 %v3773, 7
      %v3775 = vsub.s32 %v3772, %v3774
      %v3776 = vrot.slane %v3762, %v3775
      %v3777 = vcombine.low %v3721, %v3737
      %v3778 = vcombine.high %v3721, %v3737
      %v3780 = vunpack.c.l.s4 1934713408
      %v3781 = vunpack.c.0.s8 %v3780
      %v3782 = vlaneseq
      %v3783 = vshrl.u32 %v3782, 7
      %v3784 = vsub.s32 %v3781, %v3783
      %v3785 = vrot.slane %v3777, %v3784
      %v3787 = vunpack.c.l.s4 1934713408
      %v3788 = vunpack.c.0.s8 %v3787
      %v3789 = vlaneseq
      %v3790 = vshrl.u32 %v3789, 7
      %v3791 = vsub.s32 %v3788, %v3790
      %v3792 = vrot.slane %v3778, %v3791
      %v3793 = vcombine.low %v3728, %v3744
      %v3794 = vcombine.high %v3728, %v3744
      %v3796 = vunpack.c.l.s4 1934713408
      %v3797 = vunpack.c.0.s8 %v3796
      %v3798 = vlaneseq
      %v3799 = vshrl.u32 %v3798, 7
      %v3800 = vsub.s32 %v3797, %v3799
      %v3801 = vrot.slane %v3793, %v3800
      %v3803 = vunpack.c.l.s4 1934713408
      %v3804 = vunpack.c.0.s8 %v3803
      %v3805 = vlaneseq
      %v3806 = vshrl.u32 %v3805, 7
      %v3807 = vsub.s32 %v3804, %v3806
      %v3808 = vrot.slane %v3794, %v3807
      %v3809 = vcombine.low %v3753, %v3785
      %v3810 = vcombine.high %v3753, %v3785
      %v3811 = vcombine.low %v3760, %v3792
      %v3812 = vcombine.high %v3760, %v3792
      %v3813 = vcombine.low %v3769, %v3801
      %v3814 = vcombine.high %v3769, %v3801
      %v3815 = vcombine.low %v3776, %v3808
      %v3816 = vcombine.high %v3776, %v3808
      %v3817 = vcombine.low %v1978, %v1984
      %v3818 = vcombine.high %v1978, %v1984
      %v3820 = vunpack.c.l.s4 1983009808
      %v3821 = vunpack.c.0.s8 %v3820
      %v3822 = vlaneseq
      %v3823 = vshrl.u32 %v3822, 7
      %v3824 = vsub.s32 %v3821, %v3823
      %v3825 = vrot.slane %v3817, %v3824
      %v3827 = vunpack.c.l.s4 1983009808
      %v3828 = vunpack.c.0.s8 %v3827
      %v3829 = vlaneseq
      %v3830 = vshrl.u32 %v3829, 7
      %v3831 = vsub.s32 %v3828, %v3830
      %v3832 = vrot.slane %v3818, %v3831
      %v3833 = vcombine.low %v1981, %v1987
      %v3834 = vcombine.high %v1981, %v1987
      %v3836 = vunpack.c.l.s4 1983009808
      %v3837 = vunpack.c.0.s8 %v3836
      %v3838 = vlaneseq
      %v3839 = vshrl.u32 %v3838, 7
      %v3840 = vsub.s32 %v3837, %v3839
      %v3841 = vrot.slane %v3833, %v3840
      %v3843 = vunpack.c.l.s4 1983009808
      %v3844 = vunpack.c.0.s8 %v3843
      %v3845 = vlaneseq
      %v3846 = vshrl.u32 %v3845, 7
      %v3847 = vsub.s32 %v3844, %v3846
      %v3848 = vrot.slane %v3834, %v3847
      %v3849 = vcombine.low %v1990, %v1996
      %v3850 = vcombine.high %v1990, %v1996
      %v3852 = vunpack.c.l.s4 1983009808
      %v3853 = vunpack.c.0.s8 %v3852
      %v3854 = vlaneseq
      %v3855 = vshrl.u32 %v3854, 7
      %v3856 = vsub.s32 %v3853, %v3855
      %v3857 = vrot.slane %v3849, %v3856
      %v3859 = vunpack.c.l.s4 1983009808
      %v3860 = vunpack.c.0.s8 %v3859
      %v3861 = vlaneseq
      %v3862 = vshrl.u32 %v3861, 7
      %v3863 = vsub.s32 %v3860, %v3862
      %v3864 = vrot.slane %v3850, %v3863
      %v3865 = vcombine.low %v1993, %v1999
      %v3866 = vcombine.high %v1993, %v1999
      %v3868 = vunpack.c.l.s4 1983009808
      %v3869 = vunpack.c.0.s8 %v3868
      %v3870 = vlaneseq
      %v3871 = vshrl.u32 %v3870, 7
      %v3872 = vsub.s32 %v3869, %v3871
      %v3873 = vrot.slane %v3865, %v3872
      %v3875 = vunpack.c.l.s4 1983009808
      %v3876 = vunpack.c.0.s8 %v3875
      %v3877 = vlaneseq
      %v3878 = vshrl.u32 %v3877, 7
      %v3879 = vsub.s32 %v3876, %v3878
      %v3880 = vrot.slane %v3866, %v3879
      %v3881 = vcombine.low %v3825, %v3841
      %v3882 = vcombine.high %v3825, %v3841
      %v3884 = vunpack.c.l.s4 1934713408
      %v3885 = vunpack.c.0.s8 %v3884
      %v3886 = vlaneseq
      %v3887 = vshrl.u32 %v3886, 7
      %v3888 = vsub.s32 %v3885, %v3887
      %v3889 = vrot.slane %v3881, %v3888
      %v3891 = vunpack.c.l.s4 1934713408
      %v3892 = vunpack.c.0.s8 %v3891
      %v3893 = vlaneseq
      %v3894 = vshrl.u32 %v3893, 7
      %v3895 = vsub.s32 %v3892, %v3894
      %v3896 = vrot.slane %v3882, %v3895
      %v3897 = vcombine.low %v3832, %v3848
      %v3898 = vcombine.high %v3832, %v3848
      %v3900 = vunpack.c.l.s4 1934713408
      %v3901 = vunpack.c.0.s8 %v3900
      %v3902 = vlaneseq
      %v3903 = vshrl.u32 %v3902, 7
      %v3904 = vsub.s32 %v3901, %v3903
      %v3905 = vrot.slane %v3897, %v3904
      %v3907 = vunpack.c.l.s4 1934713408
      %v3908 = vunpack.c.0.s8 %v3907
      %v3909 = vlaneseq
      %v3910 = vshrl.u32 %v3909, 7
      %v3911 = vsub.s32 %v3908, %v3910
      %v3912 = vrot.slane %v3898, %v3911
      %v3913 = vcombine.low %v3857, %v3873
      %v3914 = vcombine.high %v3857, %v3873
      %v3916 = vunpack.c.l.s4 1934713408
      %v3917 = vunpack.c.0.s8 %v3916
      %v3918 = vlaneseq
      %v3919 = vshrl.u32 %v3918, 7
      %v3920 = vsub.s32 %v3917, %v3919
      %v3921 = vrot.slane %v3913, %v3920
      %v3923 = vunpack.c.l.s4 1934713408
      %v3924 = vunpack.c.0.s8 %v3923
      %v3925 = vlaneseq
      %v3926 = vshrl.u32 %v3925, 7
      %v3927 = vsub.s32 %v3924, %v3926
      %v3928 = vrot.slane %v3914, %v3927
      %v3929 = vcombine.low %v3864, %v3880
      %v3930 = vcombine.high %v3864, %v3880
      %v3932 = vunpack.c.l.s4 1934713408
      %v3933 = vunpack.c.0.s8 %v3932
      %v3934 = vlaneseq
      %v3935 = vshrl.u32 %v3934, 7
      %v3936 = vsub.s32 %v3933, %v3935
      %v3937 = vrot.slane %v3929, %v3936
      %v3939 = vunpack.c.l.s4 1934713408
      %v3940 = vunpack.c.0.s8 %v3939
      %v3941 = vlaneseq
      %v3942 = vshrl.u32 %v3941, 7
      %v3943 = vsub.s32 %v3940, %v3942
      %v3944 = vrot.slane %v3930, %v3943
      %v3945 = vcombine.low %v3889, %v3921
      %v3946 = vcombine.high %v3889, %v3921
      %v3947 = vcombine.low %v3896, %v3928
      %v3948 = vcombine.high %v3896, %v3928
      %v3949 = vcombine.low %v3905, %v3937
      %v3950 = vcombine.high %v3905, %v3937
      %v3951 = vcombine.low %v3912, %v3944
      %v3952 = vcombine.high %v3912, %v3944
      %v3953 = vcombine.low %v2002, %v2008
      %v3954 = vcombine.high %v2002, %v2008
      %v3956 = vunpack.c.l.s4 1983009808
      %v3957 = vunpack.c.0.s8 %v3956
      %v3958 = vlaneseq
      %v3959 = vshrl.u32 %v3958, 7
      %v3960 = vsub.s32 %v3957, %v3959
      %v3961 = vrot.slane %v3953, %v3960
      %v3963 = vunpack.c.l.s4 1983009808
      %v3964 = vunpack.c.0.s8 %v3963
      %v3965 = vlaneseq
      %v3966 = vshrl.u32 %v3965, 7
      %v3967 = vsub.s32 %v3964, %v3966
      %v3968 = vrot.slane %v3954, %v3967
      %v3969 = vcombine.low %v2005, %v2011
      %v3970 = vcombine.high %v2005, %v2011
      %v3972 = vunpack.c.l.s4 1983009808
      %v3973 = vunpack.c.0.s8 %v3972
      %v3974 = vlaneseq
      %v3975 = vshrl.u32 %v3974, 7
      %v3976 = vsub.s32 %v3973, %v3975
      %v3977 = vrot.slane %v3969, %v3976
      %v3979 = vunpack.c.l.s4 1983009808
      %v3980 = vunpack.c.0.s8 %v3979
      %v3981 = vlaneseq
      %v3982 = vshrl.u32 %v3981, 7
      %v3983 = vsub.s32 %v3980, %v3982
      %v3984 = vrot.slane %v3970, %v3983
      %v3985 = vcombine.low %v2014, %v2020
      %v3986 = vcombine.high %v2014, %v2020
      %v3988 = vunpack.c.l.s4 1983009808
      %v3989 = vunpack.c.0.s8 %v3988
      %v3990 = vlaneseq
      %v3991 = vshrl.u32 %v3990, 7
      %v3992 = vsub.s32 %v3989, %v3991
      %v3993 = vrot.slane %v3985, %v3992
      %v3995 = vunpack.c.l.s4 1983009808
      %v3996 = vunpack.c.0.s8 %v3995
      %v3997 = vlaneseq
      %v3998 = vshrl.u32 %v3997, 7
      %v3999 = vsub.s32 %v3996, %v3998
      %v4000 = vrot.slane %v3986, %v3999
      %v4001 = vcombine.low %v2017, %v2023
      %v4002 = vcombine.high %v2017, %v2023
      %v4004 = vunpack.c.l.s4 1983009808
      %v4005 = vunpack.c.0.s8 %v4004
      %v4006 = vlaneseq
      %v4007 = vshrl.u32 %v4006, 7
      %v4008 = vsub.s32 %v4005, %v4007
      %v4009 = vrot.slane %v4001, %v4008
      %v4011 = vunpack.c.l.s4 1983009808
      %v4012 = vunpack.c.0.s8 %v4011
      %v4013 = vlaneseq
      %v4014 = vshrl.u32 %v4013, 7
      %v4015 = vsub.s32 %v4012, %v4014
      %v4016 = vrot.slane %v4002, %v4015
      %v4017 = vcombine.low %v3961, %v3977
      %v4018 = vcombine.high %v3961, %v3977
      %v4020 = vunpack.c.l.s4 1934713408
      %v4021 = vunpack.c.0.s8 %v4020
      %v4022 = vlaneseq
      %v4023 = vshrl.u32 %v4022, 7
      %v4024 = vsub.s32 %v4021, %v4023
      %v4025 = vrot.slane %v4017, %v4024
      %v4027 = vunpack.c.l.s4 1934713408
      %v4028 = vunpack.c.0.s8 %v4027
      %v4029 = vlaneseq
      %v4030 = vshrl.u32 %v4029, 7
      %v4031 = vsub.s32 %v4028, %v4030
      %v4032 = vrot.slane %v4018, %v4031
      %v4033 = vcombine.low %v3968, %v3984
      %v4034 = vcombine.high %v3968, %v3984
      %v4036 = vunpack.c.l.s4 1934713408
      %v4037 = vunpack.c.0.s8 %v4036
      %v4038 = vlaneseq
      %v4039 = vshrl.u32 %v4038, 7
      %v4040 = vsub.s32 %v4037, %v4039
      %v4041 = vrot.slane %v4033, %v4040
      %v4043 = vunpack.c.l.s4 1934713408
      %v4044 = vunpack.c.0.s8 %v4043
      %v4045 = vlaneseq
      %v4046 = vshrl.u32 %v4045, 7
      %v4047 = vsub.s32 %v4044, %v4046
      %v4048 = vrot.slane %v4034, %v4047
      %v4049 = vcombine.low %v3993, %v4009
      %v4050 = vcombine.high %v3993, %v4009
      %v4052 = vunpack.c.l.s4 1934713408
      %v4053 = vunpack.c.0.s8 %v4052
      %v4054 = vlaneseq
      %v4055 = vshrl.u32 %v4054, 7
      %v4056 = vsub.s32 %v4053, %v4055
      %v4057 = vrot.slane %v4049, %v4056
      %v4059 = vunpack.c.l.s4 1934713408
      %v4060 = vunpack.c.0.s8 %v4059
      %v4061 = vlaneseq
      %v4062 = vshrl.u32 %v4061, 7
      %v4063 = vsub.s32 %v4060, %v4062
      %v4064 = vrot.slane %v4050, %v4063
      %v4065 = vcombine.low %v4000, %v4016
      %v4066 = vcombine.high %v4000, %v4016
      %v4068 = vunpack.c.l.s4 1934713408
      %v4069 = vunpack.c.0.s8 %v4068
      %v4070 = vlaneseq
      %v4071 = vshrl.u32 %v4070, 7
      %v4072 = vsub.s32 %v4069, %v4071
      %v4073 = vrot.slane %v4065, %v4072
      %v4075 = vunpack.c.l.s4 1934713408
      %v4076 = vunpack.c.0.s8 %v4075
      %v4077 = vlaneseq
      %v4078 = vshrl.u32 %v4077, 7
      %v4079 = vsub.s32 %v4076, %v4078
      %v4080 = vrot.slane %v4066, %v4079
      %v4081 = vcombine.low %v4025, %v4057
      %v4082 = vcombine.high %v4025, %v4057
      %v4083 = vcombine.low %v4032, %v4064
      %v4084 = vcombine.high %v4032, %v4064
      %v4085 = vcombine.low %v4041, %v4073
      %v4086 = vcombine.high %v4041, %v4073
      %v4087 = vcombine.low %v4048, %v4080
      %v4088 = vcombine.high %v4048, %v4080
      %v4089 = vcombine.low %v2026, %v2032
      %v4090 = vcombine.high %v2026, %v2032
      %v4092 = vunpack.c.l.s4 1983009808
      %v4093 = vunpack.c.0.s8 %v4092
      %v4094 = vlaneseq
      %v4095 = vshrl.u32 %v4094, 7
      %v4096 = vsub.s32 %v4093, %v4095
      %v4097 = vrot.slane %v4089, %v4096
      %v4099 = vunpack.c.l.s4 1983009808
      %v4100 = vunpack.c.0.s8 %v4099
      %v4101 = vlaneseq
      %v4102 = vshrl.u32 %v4101, 7
      %v4103 = vsub.s32 %v4100, %v4102
      %v4104 = vrot.slane %v4090, %v4103
      %v4105 = vcombine.low %v2029, %v2035
      %v4106 = vcombine.high %v2029, %v2035
      %v4108 = vunpack.c.l.s4 1983009808
      %v4109 = vunpack.c.0.s8 %v4108
      %v4110 = vlaneseq
      %v4111 = vshrl.u32 %v4110, 7
      %v4112 = vsub.s32 %v4109, %v4111
      %v4113 = vrot.slane %v4105, %v4112
      %v4115 = vunpack.c.l.s4 1983009808
      %v4116 = vunpack.c.0.s8 %v4115
      %v4117 = vlaneseq
      %v4118 = vshrl.u32 %v4117, 7
      %v4119 = vsub.s32 %v4116, %v4118
      %v4120 = vrot.slane %v4106, %v4119
      %v4121 = vcombine.low %v2038, %v2044
      %v4122 = vcombine.high %v2038, %v2044
      %v4124 = vunpack.c.l.s4 1983009808
      %v4125 = vunpack.c.0.s8 %v4124
      %v4126 = vlaneseq
      %v4127 = vshrl.u32 %v4126, 7
      %v4128 = vsub.s32 %v4125, %v4127
      %v4129 = vrot.slane %v4121, %v4128
      %v4131 = vunpack.c.l.s4 1983009808
      %v4132 = vunpack.c.0.s8 %v4131
      %v4133 = vlaneseq
      %v4134 = vshrl.u32 %v4133, 7
      %v4135 = vsub.s32 %v4132, %v4134
      %v4136 = vrot.slane %v4122, %v4135
      %v4137 = vcombine.low %v2041, %v2047
      %v4138 = vcombine.high %v2041, %v2047
      %v4140 = vunpack.c.l.s4 1983009808
      %v4141 = vunpack.c.0.s8 %v4140
      %v4142 = vlaneseq
      %v4143 = vshrl.u32 %v4142, 7
      %v4144 = vsub.s32 %v4141, %v4143
      %v4145 = vrot.slane %v4137, %v4144
      %v4147 = vunpack.c.l.s4 1983009808
      %v4148 = vunpack.c.0.s8 %v4147
      %v4149 = vlaneseq
      %v4150 = vshrl.u32 %v4149, 7
      %v4151 = vsub.s32 %v4148, %v4150
      %v4152 = vrot.slane %v4138, %v4151
      %v4153 = vcombine.low %v4097, %v4113
      %v4154 = vcombine.high %v4097, %v4113
      %v4156 = vunpack.c.l.s4 1934713408
      %v4157 = vunpack.c.0.s8 %v4156
      %v4158 = vlaneseq
      %v4159 = vshrl.u32 %v4158, 7
      %v4160 = vsub.s32 %v4157, %v4159
      %v4161 = vrot.slane %v4153, %v4160
      %v4163 = vunpack.c.l.s4 1934713408
      %v4164 = vunpack.c.0.s8 %v4163
      %v4165 = vlaneseq
      %v4166 = vshrl.u32 %v4165, 7
      %v4167 = vsub.s32 %v4164, %v4166
      %v4168 = vrot.slane %v4154, %v4167
      %v4169 = vcombine.low %v4104, %v4120
      %v4170 = vcombine.high %v4104, %v4120
      %v4172 = vunpack.c.l.s4 1934713408
      %v4173 = vunpack.c.0.s8 %v4172
      %v4174 = vlaneseq
      %v4175 = vshrl.u32 %v4174, 7
      %v4176 = vsub.s32 %v4173, %v4175
      %v4177 = vrot.slane %v4169, %v4176
      %v4179 = vunpack.c.l.s4 1934713408
      %v4180 = vunpack.c.0.s8 %v4179
      %v4181 = vlaneseq
      %v4182 = vshrl.u32 %v4181, 7
      %v4183 = vsub.s32 %v4180, %v4182
      %v4184 = vrot.slane %v4170, %v4183
      %v4185 = vcombine.low %v4129, %v4145
      %v4186 = vcombine.high %v4129, %v4145
      %v4188 = vunpack.c.l.s4 1934713408
      %v4189 = vunpack.c.0.s8 %v4188
      %v4190 = vlaneseq
      %v4191 = vshrl.u32 %v4190, 7
      %v4192 = vsub.s32 %v4189, %v4191
      %v4193 = vrot.slane %v4185, %v4192
      %v4195 = vunpack.c.l.s4 1934713408
      %v4196 = vunpack.c.0.s8 %v4195
      %v4197 = vlaneseq
      %v4198 = vshrl.u32 %v4197, 7
      %v4199 = vsub.s32 %v4196, %v4198
      %v4200 = vrot.slane %v4186, %v4199
      %v4201 = vcombine.low %v4136, %v4152
      %v4202 = vcombine.high %v4136, %v4152
      %v4204 = vunpack.c.l.s4 1934713408
      %v4205 = vunpack.c.0.s8 %v4204
      %v4206 = vlaneseq
      %v4207 = vshrl.u32 %v4206, 7
      %v4208 = vsub.s32 %v4205, %v4207
      %v4209 = vrot.slane %v4201, %v4208
      %v4211 = vunpack.c.l.s4 1934713408
      %v4212 = vunpack.c.0.s8 %v4211
      %v4213 = vlaneseq
      %v4214 = vshrl.u32 %v4213, 7
      %v4215 = vsub.s32 %v4212, %v4214
      %v4216 = vrot.slane %v4202, %v4215
      %v4217 = vcombine.low %v4161, %v4193
      %v4218 = vcombine.high %v4161, %v4193
      %v4219 = vcombine.low %v4168, %v4200
      %v4220 = vcombine.high %v4168, %v4200
      %v4221 = vcombine.low %v4177, %v4209
      %v4222 = vcombine.high %v4177, %v4209
      %v4223 = vcombine.low %v4184, %v4216
      %v4224 = vcombine.high %v4184, %v4216
      %vm4225 = vcmask 15360
      %v4226 = vsel %vm4225, %v2177, -inf
      %4227 = vmax.xlane.f32.xlu0 %v4226
      %v4228 = vpop.xlane.xlu0 %4227
      %v4229 = vsel %vm4225, %v2313, -inf
      %4230 = vmax.xlane.f32.xlu0 %v4229
      %v4231 = vpop.xlane.xlu0 %4230
      %v4232 = vsel %vm4225, %v2449, -inf
      %4233 = vmax.xlane.f32.xlu0 %v4232
      %v4234 = vpop.xlane.xlu0 %4233
      %v4235 = vsel %vm4225, %v2585, -inf
      %4236 = vmax.xlane.f32.xlu0 %v4235
      %v4237 = vpop.xlane.xlu0 %4236
      %v4238 = vsel %vm4225, %v2721, -inf
      %4239 = vmax.xlane.f32.xlu0 %v4238
      %v4240 = vpop.xlane.xlu0 %4239
      %v4241 = vsel %vm4225, %v2857, -inf
      %4242 = vmax.xlane.f32.xlu0 %v4241
      %v4243 = vpop.xlane.xlu0 %4242
      %v4244 = vsel %vm4225, %v2993, -inf
      %4245 = vmax.xlane.f32.xlu0 %v4244
      %v4246 = vpop.xlane.xlu0 %4245
      %v4247 = vsel %vm4225, %v3129, -inf
      %4248 = vmax.xlane.f32.xlu0 %v4247
      %v4249 = vpop.xlane.xlu0 %4248
      %v4250 = vsel %vm4225, %v3265, -inf
      %4251 = vmax.xlane.f32.xlu0 %v4250
      %v4252 = vpop.xlane.xlu0 %4251
      %v4253 = vsel %vm4225, %v3401, -inf
      %4254 = vmax.xlane.f32.xlu0 %v4253
      %v4255 = vpop.xlane.xlu0 %4254
      %v4256 = vsel %vm4225, %v3537, -inf
      %4257 = vmax.xlane.f32.xlu0 %v4256
      %v4258 = vpop.xlane.xlu0 %4257
      %v4259 = vsel %vm4225, %v3673, -inf
      %4260 = vmax.xlane.f32.xlu0 %v4259
      %v4261 = vpop.xlane.xlu0 %4260
      %v4262 = vsel %vm4225, %v3809, -inf
      %4263 = vmax.xlane.f32.xlu0 %v4262
      %v4264 = vpop.xlane.xlu0 %4263
      %v4265 = vsel %vm4225, %v3945, -inf
      %4266 = vmax.xlane.f32.xlu0 %v4265
      %v4267 = vpop.xlane.xlu0 %4266
      %v4268 = vsel %vm4225, %v4081, -inf
      %4269 = vmax.xlane.f32.xlu0 %v4268
      %v4270 = vpop.xlane.xlu0 %4269
      %v4271 = vsel %vm4225, %v4217, -inf
      %4272 = vmax.xlane.f32.xlu0 %v4271
      %v4273 = vpop.xlane.xlu0 %4272
      %v4274 = vsel %vm4225, %v2178, -inf
      %4275 = vmax.xlane.f32.xlu0 %v4274
      %v4276 = vpop.xlane.xlu0 %4275
      %v4277 = vsel %vm4225, %v2314, -inf
      %4278 = vmax.xlane.f32.xlu0 %v4277
      %v4279 = vpop.xlane.xlu0 %4278
      %v4280 = vsel %vm4225, %v2450, -inf
      %4281 = vmax.xlane.f32.xlu0 %v4280
      %v4282 = vpop.xlane.xlu0 %4281
      %v4283 = vsel %vm4225, %v2586, -inf
      %4284 = vmax.xlane.f32.xlu0 %v4283
      %v4285 = vpop.xlane.xlu0 %4284
      %v4286 = vsel %vm4225, %v2722, -inf
      %4287 = vmax.xlane.f32.xlu0 %v4286
      %v4288 = vpop.xlane.xlu0 %4287
      %v4289 = vsel %vm4225, %v2858, -inf
      %4290 = vmax.xlane.f32.xlu0 %v4289
      %v4291 = vpop.xlane.xlu0 %4290
      %v4292 = vsel %vm4225, %v2994, -inf
      %4293 = vmax.xlane.f32.xlu0 %v4292
      %v4294 = vpop.xlane.xlu0 %4293
      %v4295 = vsel %vm4225, %v3130, -inf
      %4296 = vmax.xlane.f32.xlu0 %v4295
      %v4297 = vpop.xlane.xlu0 %4296
      %v4298 = vsel %vm4225, %v3266, -inf
      %4299 = vmax.xlane.f32.xlu0 %v4298
      %v4300 = vpop.xlane.xlu0 %4299
      %v4301 = vsel %vm4225, %v3402, -inf
      %4302 = vmax.xlane.f32.xlu0 %v4301
      %v4303 = vpop.xlane.xlu0 %4302
      %v4304 = vsel %vm4225, %v3538, -inf
      %4305 = vmax.xlane.f32.xlu0 %v4304
      %v4306 = vpop.xlane.xlu0 %4305
      %v4307 = vsel %vm4225, %v3674, -inf
      %4308 = vmax.xlane.f32.xlu0 %v4307
      %v4309 = vpop.xlane.xlu0 %4308
      %v4310 = vsel %vm4225, %v3810, -inf
      %4311 = vmax.xlane.f32.xlu0 %v4310
      %v4312 = vpop.xlane.xlu0 %4311
      %v4313 = vsel %vm4225, %v3946, -inf
      %4314 = vmax.xlane.f32.xlu0 %v4313
      %v4315 = vpop.xlane.xlu0 %4314
      %v4316 = vsel %vm4225, %v4082, -inf
      %4317 = vmax.xlane.f32.xlu0 %v4316
      %v4318 = vpop.xlane.xlu0 %4317
      %v4319 = vsel %vm4225, %v4218, -inf
      %4320 = vmax.xlane.f32.xlu0 %v4319
      %v4321 = vpop.xlane.xlu0 %4320
      %v4322 = vsel %vm4225, %v2179, -inf
      %4323 = vmax.xlane.f32.xlu0 %v4322
      %v4324 = vpop.xlane.xlu0 %4323
      %v4325 = vsel %vm4225, %v2315, -inf
      %4326 = vmax.xlane.f32.xlu0 %v4325
      %v4327 = vpop.xlane.xlu0 %4326
      %v4328 = vsel %vm4225, %v2451, -inf
      %4329 = vmax.xlane.f32.xlu0 %v4328
      %v4330 = vpop.xlane.xlu0 %4329
      %v4331 = vsel %vm4225, %v2587, -inf
      %4332 = vmax.xlane.f32.xlu0 %v4331
      %v4333 = vpop.xlane.xlu0 %4332
      %v4334 = vsel %vm4225, %v2723, -inf
      %4335 = vmax.xlane.f32.xlu0 %v4334
      %v4336 = vpop.xlane.xlu0 %4335
      %v4337 = vsel %vm4225, %v2859, -inf
      %4338 = vmax.xlane.f32.xlu0 %v4337
      %v4339 = vpop.xlane.xlu0 %4338
      %v4340 = vsel %vm4225, %v2995, -inf
      %4341 = vmax.xlane.f32.xlu0 %v4340
      %v4342 = vpop.xlane.xlu0 %4341
      %v4343 = vsel %vm4225, %v3131, -inf
      %4344 = vmax.xlane.f32.xlu0 %v4343
      %v4345 = vpop.xlane.xlu0 %4344
      %v4346 = vsel %vm4225, %v3267, -inf
      %4347 = vmax.xlane.f32.xlu0 %v4346
      %v4348 = vpop.xlane.xlu0 %4347
      %v4349 = vsel %vm4225, %v3403, -inf
      %4350 = vmax.xlane.f32.xlu0 %v4349
      %v4351 = vpop.xlane.xlu0 %4350
      %v4352 = vsel %vm4225, %v3539, -inf
      %4353 = vmax.xlane.f32.xlu0 %v4352
      %v4354 = vpop.xlane.xlu0 %4353
      %v4355 = vsel %vm4225, %v3675, -inf
      %4356 = vmax.xlane.f32.xlu0 %v4355
      %v4357 = vpop.xlane.xlu0 %4356
      %v4358 = vsel %vm4225, %v3811, -inf
      %4359 = vmax.xlane.f32.xlu0 %v4358
      %v4360 = vpop.xlane.xlu0 %4359
      %v4361 = vsel %vm4225, %v3947, -inf
      %4362 = vmax.xlane.f32.xlu0 %v4361
      %v4363 = vpop.xlane.xlu0 %4362
      %v4364 = vsel %vm4225, %v4083, -inf
      %4365 = vmax.xlane.f32.xlu0 %v4364
      %v4366 = vpop.xlane.xlu0 %4365
      %v4367 = vsel %vm4225, %v4219, -inf
      %4368 = vmax.xlane.f32.xlu0 %v4367
      %v4369 = vpop.xlane.xlu0 %4368
      %v4370 = vsel %vm4225, %v2180, -inf
      %4371 = vmax.xlane.f32.xlu0 %v4370
      %v4372 = vpop.xlane.xlu0 %4371
      %v4373 = vsel %vm4225, %v2316, -inf
      %4374 = vmax.xlane.f32.xlu0 %v4373
      %v4375 = vpop.xlane.xlu0 %4374
      %v4376 = vsel %vm4225, %v2452, -inf
      %4377 = vmax.xlane.f32.xlu0 %v4376
      %v4378 = vpop.xlane.xlu0 %4377
      %v4379 = vsel %vm4225, %v2588, -inf
      %4380 = vmax.xlane.f32.xlu0 %v4379
      %v4381 = vpop.xlane.xlu0 %4380
      %v4382 = vsel %vm4225, %v2724, -inf
      %4383 = vmax.xlane.f32.xlu0 %v4382
      %v4384 = vpop.xlane.xlu0 %4383
      %v4385 = vsel %vm4225, %v2860, -inf
      %4386 = vmax.xlane.f32.xlu0 %v4385
      %v4387 = vpop.xlane.xlu0 %4386
      %v4388 = vsel %vm4225, %v2996, -inf
      %4389 = vmax.xlane.f32.xlu0 %v4388
      %v4390 = vpop.xlane.xlu0 %4389
      %v4391 = vsel %vm4225, %v3132, -inf
      %4392 = vmax.xlane.f32.xlu0 %v4391
      %v4393 = vpop.xlane.xlu0 %4392
      %v4394 = vsel %vm4225, %v3268, -inf
      %4395 = vmax.xlane.f32.xlu0 %v4394
      %v4396 = vpop.xlane.xlu0 %4395
      %v4397 = vsel %vm4225, %v3404, -inf
      %4398 = vmax.xlane.f32.xlu0 %v4397
      %v4399 = vpop.xlane.xlu0 %4398
      %v4400 = vsel %vm4225, %v3540, -inf
      %4401 = vmax.xlane.f32.xlu0 %v4400
      %v4402 = vpop.xlane.xlu0 %4401
      %v4403 = vsel %vm4225, %v3676, -inf
      %4404 = vmax.xlane.f32.xlu0 %v4403
      %v4405 = vpop.xlane.xlu0 %4404
      %v4406 = vsel %vm4225, %v3812, -inf
      %4407 = vmax.xlane.f32.xlu0 %v4406
      %v4408 = vpop.xlane.xlu0 %4407
      %v4409 = vsel %vm4225, %v3948, -inf
      %4410 = vmax.xlane.f32.xlu0 %v4409
      %v4411 = vpop.xlane.xlu0 %4410
      %v4412 = vsel %vm4225, %v4084, -inf
      %4413 = vmax.xlane.f32.xlu0 %v4412
      %v4414 = vpop.xlane.xlu0 %4413
      %v4415 = vsel %vm4225, %v4220, -inf
      %4416 = vmax.xlane.f32.xlu0 %v4415
      %v4417 = vpop.xlane.xlu0 %4416
      %v4418 = vsel %vm4225, %v2181, -inf
      %4419 = vmax.xlane.f32.xlu0 %v4418
      %v4420 = vpop.xlane.xlu0 %4419
      %v4421 = vsel %vm4225, %v2317, -inf
      %4422 = vmax.xlane.f32.xlu0 %v4421
      %v4423 = vpop.xlane.xlu0 %4422
      %v4424 = vsel %vm4225, %v2453, -inf
      %4425 = vmax.xlane.f32.xlu0 %v4424
      %v4426 = vpop.xlane.xlu0 %4425
      %v4427 = vsel %vm4225, %v2589, -inf
      %4428 = vmax.xlane.f32.xlu0 %v4427
      %v4429 = vpop.xlane.xlu0 %4428
      %v4430 = vsel %vm4225, %v2725, -inf
      %4431 = vmax.xlane.f32.xlu0 %v4430
      %v4432 = vpop.xlane.xlu0 %4431
      %v4433 = vsel %vm4225, %v2861, -inf
      %4434 = vmax.xlane.f32.xlu0 %v4433
      %v4435 = vpop.xlane.xlu0 %4434
      %v4436 = vsel %vm4225, %v2997, -inf
      %4437 = vmax.xlane.f32.xlu0 %v4436
      %v4438 = vpop.xlane.xlu0 %4437
      %v4439 = vsel %vm4225, %v3133, -inf
      %4440 = vmax.xlane.f32.xlu0 %v4439
      %v4441 = vpop.xlane.xlu0 %4440
      %v4442 = vsel %vm4225, %v3269, -inf
      %4443 = vmax.xlane.f32.xlu0 %v4442
      %v4444 = vpop.xlane.xlu0 %4443
      %v4445 = vsel %vm4225, %v3405, -inf
      %4446 = vmax.xlane.f32.xlu0 %v4445
      %v4447 = vpop.xlane.xlu0 %4446
      %v4448 = vsel %vm4225, %v3541, -inf
      %4449 = vmax.xlane.f32.xlu0 %v4448
      %v4450 = vpop.xlane.xlu0 %4449
      %v4451 = vsel %vm4225, %v3677, -inf
      %4452 = vmax.xlane.f32.xlu0 %v4451
      %v4453 = vpop.xlane.xlu0 %4452
      %v4454 = vsel %vm4225, %v3813, -inf
      %4455 = vmax.xlane.f32.xlu0 %v4454
      %v4456 = vpop.xlane.xlu0 %4455
      %v4457 = vsel %vm4225, %v3949, -inf
      %4458 = vmax.xlane.f32.xlu0 %v4457
      %v4459 = vpop.xlane.xlu0 %4458
      %v4460 = vsel %vm4225, %v4085, -inf
      %4461 = vmax.xlane.f32.xlu0 %v4460
      %v4462 = vpop.xlane.xlu0 %4461
      %v4463 = vsel %vm4225, %v4221, -inf
      %4464 = vmax.xlane.f32.xlu0 %v4463
      %v4465 = vpop.xlane.xlu0 %4464
      %v4466 = vsel %vm4225, %v2182, -inf
      %4467 = vmax.xlane.f32.xlu0 %v4466
      %v4468 = vpop.xlane.xlu0 %4467
      %v4469 = vsel %vm4225, %v2318, -inf
      %4470 = vmax.xlane.f32.xlu0 %v4469
      %v4471 = vpop.xlane.xlu0 %4470
      %v4472 = vsel %vm4225, %v2454, -inf
      %4473 = vmax.xlane.f32.xlu0 %v4472
      %v4474 = vpop.xlane.xlu0 %4473
      %v4475 = vsel %vm4225, %v2590, -inf
      %4476 = vmax.xlane.f32.xlu0 %v4475
      %v4477 = vpop.xlane.xlu0 %4476
      %v4478 = vsel %vm4225, %v2726, -inf
      %4479 = vmax.xlane.f32.xlu0 %v4478
      %v4480 = vpop.xlane.xlu0 %4479
      %v4481 = vsel %vm4225, %v2862, -inf
      %4482 = vmax.xlane.f32.xlu0 %v4481
      %v4483 = vpop.xlane.xlu0 %4482
      %v4484 = vsel %vm4225, %v2998, -inf
      %4485 = vmax.xlane.f32.xlu0 %v4484
      %v4486 = vpop.xlane.xlu0 %4485
      %v4487 = vsel %vm4225, %v3134, -inf
      %4488 = vmax.xlane.f32.xlu0 %v4487
      %v4489 = vpop.xlane.xlu0 %4488
      %v4490 = vsel %vm4225, %v3270, -inf
      %4491 = vmax.xlane.f32.xlu0 %v4490
      %v4492 = vpop.xlane.xlu0 %4491
      %v4493 = vsel %vm4225, %v3406, -inf
      %4494 = vmax.xlane.f32.xlu0 %v4493
      %v4495 = vpop.xlane.xlu0 %4494
      %v4496 = vsel %vm4225, %v3542, -inf
      %4497 = vmax.xlane.f32.xlu0 %v4496
      %v4498 = vpop.xlane.xlu0 %4497
      %v4499 = vsel %vm4225, %v3678, -inf
      %4500 = vmax.xlane.f32.xlu0 %v4499
      %v4501 = vpop.xlane.xlu0 %4500
      %v4502 = vsel %vm4225, %v3814, -inf
      %4503 = vmax.xlane.f32.xlu0 %v4502
      %v4504 = vpop.xlane.xlu0 %4503
      %v4505 = vsel %vm4225, %v3950, -inf
      %4506 = vmax.xlane.f32.xlu0 %v4505
      %v4507 = vpop.xlane.xlu0 %4506
      %v4508 = vsel %vm4225, %v4086, -inf
      %4509 = vmax.xlane.f32.xlu0 %v4508
      %v4510 = vpop.xlane.xlu0 %4509
      %v4511 = vsel %vm4225, %v4222, -inf
      %4512 = vmax.xlane.f32.xlu0 %v4511
      %v4513 = vpop.xlane.xlu0 %4512
      %v4514 = vsel %vm4225, %v2183, -inf
      %4515 = vmax.xlane.f32.xlu0 %v4514
      %v4516 = vpop.xlane.xlu0 %4515
      %v4517 = vsel %vm4225, %v2319, -inf
      %4518 = vmax.xlane.f32.xlu0 %v4517
      %v4519 = vpop.xlane.xlu0 %4518
      %v4520 = vsel %vm4225, %v2455, -inf
      %4521 = vmax.xlane.f32.xlu0 %v4520
      %v4522 = vpop.xlane.xlu0 %4521
      %v4523 = vsel %vm4225, %v2591, -inf
      %4524 = vmax.xlane.f32.xlu0 %v4523
      %v4525 = vpop.xlane.xlu0 %4524
      %v4526 = vsel %vm4225, %v2727, -inf
      %4527 = vmax.xlane.f32.xlu0 %v4526
      %v4528 = vpop.xlane.xlu0 %4527
      %v4529 = vsel %vm4225, %v2863, -inf
      %4530 = vmax.xlane.f32.xlu0 %v4529
      %v4531 = vpop.xlane.xlu0 %4530
      %v4532 = vsel %vm4225, %v2999, -inf
      %4533 = vmax.xlane.f32.xlu0 %v4532
      %v4534 = vpop.xlane.xlu0 %4533
      %v4535 = vsel %vm4225, %v3135, -inf
      %4536 = vmax.xlane.f32.xlu0 %v4535
      %v4537 = vpop.xlane.xlu0 %4536
      %v4538 = vsel %vm4225, %v3271, -inf
      %4539 = vmax.xlane.f32.xlu0 %v4538
      %v4540 = vpop.xlane.xlu0 %4539
      %v4541 = vsel %vm4225, %v3407, -inf
      %4542 = vmax.xlane.f32.xlu0 %v4541
      %v4543 = vpop.xlane.xlu0 %4542
      %v4544 = vsel %vm4225, %v3543, -inf
      %4545 = vmax.xlane.f32.xlu0 %v4544
      %v4546 = vpop.xlane.xlu0 %4545
      %v4547 = vsel %vm4225, %v3679, -inf
      %4548 = vmax.xlane.f32.xlu0 %v4547
      %v4549 = vpop.xlane.xlu0 %4548
      %v4550 = vsel %vm4225, %v3815, -inf
      %4551 = vmax.xlane.f32.xlu0 %v4550
      %v4552 = vpop.xlane.xlu0 %4551
      %v4553 = vsel %vm4225, %v3951, -inf
      %4554 = vmax.xlane.f32.xlu0 %v4553
      %v4555 = vpop.xlane.xlu0 %4554
      %v4556 = vsel %vm4225, %v4087, -inf
      %4557 = vmax.xlane.f32.xlu0 %v4556
      %v4558 = vpop.xlane.xlu0 %4557
      %v4559 = vsel %vm4225, %v4223, -inf
      %4560 = vmax.xlane.f32.xlu0 %v4559
      %v4561 = vpop.xlane.xlu0 %4560
      %v4562 = vsel %vm4225, %v2184, -inf
      %4563 = vmax.xlane.f32.xlu0 %v4562
      %v4564 = vpop.xlane.xlu0 %4563
      %v4565 = vsel %vm4225, %v2320, -inf
      %4566 = vmax.xlane.f32.xlu0 %v4565
      %v4567 = vpop.xlane.xlu0 %4566
      %v4568 = vsel %vm4225, %v2456, -inf
      %4569 = vmax.xlane.f32.xlu0 %v4568
      %v4570 = vpop.xlane.xlu0 %4569
      %v4571 = vsel %vm4225, %v2592, -inf
      %4572 = vmax.xlane.f32.xlu0 %v4571
      %v4573 = vpop.xlane.xlu0 %4572
      %v4574 = vsel %vm4225, %v2728, -inf
      %4575 = vmax.xlane.f32.xlu0 %v4574
      %v4576 = vpop.xlane.xlu0 %4575
      %v4577 = vsel %vm4225, %v2864, -inf
      %4578 = vmax.xlane.f32.xlu0 %v4577
      %v4579 = vpop.xlane.xlu0 %4578
      %v4580 = vsel %vm4225, %v3000, -inf
      %4581 = vmax.xlane.f32.xlu0 %v4580
      %v4582 = vpop.xlane.xlu0 %4581
      %v4583 = vsel %vm4225, %v3136, -inf
      %4584 = vmax.xlane.f32.xlu0 %v4583
      %v4585 = vpop.xlane.xlu0 %4584
      %v4586 = vsel %vm4225, %v3272, -inf
      %4587 = vmax.xlane.f32.xlu0 %v4586
      %v4588 = vpop.xlane.xlu0 %4587
      %v4589 = vsel %vm4225, %v3408, -inf
      %4590 = vmax.xlane.f32.xlu0 %v4589
      %v4591 = vpop.xlane.xlu0 %4590
      %v4592 = vsel %vm4225, %v3544, -inf
      %4593 = vmax.xlane.f32.xlu0 %v4592
      %v4594 = vpop.xlane.xlu0 %4593
      %v4595 = vsel %vm4225, %v3680, -inf
      %4596 = vmax.xlane.f32.xlu0 %v4595
      %v4597 = vpop.xlane.xlu0 %4596
      %v4598 = vsel %vm4225, %v3816, -inf
      %4599 = vmax.xlane.f32.xlu0 %v4598
      %v4600 = vpop.xlane.xlu0 %4599
      %v4601 = vsel %vm4225, %v3952, -inf
      %4602 = vmax.xlane.f32.xlu0 %v4601
      %v4603 = vpop.xlane.xlu0 %4602
      %v4604 = vsel %vm4225, %v4088, -inf
      %4605 = vmax.xlane.f32.xlu0 %v4604
      %v4606 = vpop.xlane.xlu0 %4605
      %v4607 = vsel %vm4225, %v4224, -inf
      %4608 = vmax.xlane.f32.xlu0 %v4607
      %v4609 = vpop.xlane.xlu0 %4608
      %4738 = vset.pattern.permute.xlu0 0
      %4739 = vperm.xlu0 %4738, %v4228
      %v4740 = vpop.permute.xlu0 %4739
      %4741 = vset.pattern.permute.xlu0 0
      %4742 = vperm.xlu0 %4741, %v4231
      %v4743 = vpop.permute.xlu0 %4742
      %4744 = vset.pattern.permute.xlu0 0
      %4745 = vperm.xlu0 %4744, %v4276
      %v4746 = vpop.permute.xlu0 %4745
      %4747 = vset.pattern.permute.xlu0 0
      %4748 = vperm.xlu0 %4747, %v4279
      %v4749 = vpop.permute.xlu0 %4748
      %4750 = vset.pattern.permute.xlu0 0
      %4751 = vperm.xlu0 %4750, %v4324
      %v4752 = vpop.permute.xlu0 %4751
      %4753 = vset.pattern.permute.xlu0 0
      %4754 = vperm.xlu0 %4753, %v4327
      %v4755 = vpop.permute.xlu0 %4754
      %4756 = vset.pattern.permute.xlu0 0
      %4757 = vperm.xlu0 %4756, %v4372
      %v4758 = vpop.permute.xlu0 %4757
      %4759 = vset.pattern.permute.xlu0 0
      %4760 = vperm.xlu0 %4759, %v4375
      %v4761 = vpop.permute.xlu0 %4760
      %4762 = vset.pattern.permute.xlu0 0
      %4763 = vperm.xlu0 %4762, %v4420
      %v4764 = vpop.permute.xlu0 %4763
      %4765 = vset.pattern.permute.xlu0 0
      %4766 = vperm.xlu0 %4765, %v4423
      %v4767 = vpop.permute.xlu0 %4766
      %4768 = vset.pattern.permute.xlu0 0
      %4769 = vperm.xlu0 %4768, %v4468
      %v4770 = vpop.permute.xlu0 %4769
      %4771 = vset.pattern.permute.xlu0 0
      %4772 = vperm.xlu0 %4771, %v4471
      %v4773 = vpop.permute.xlu0 %4772
      %4774 = vset.pattern.permute.xlu0 0
      %4775 = vperm.xlu0 %4774, %v4516
      %v4776 = vpop.permute.xlu0 %4775
      %4777 = vset.pattern.permute.xlu0 0
      %4778 = vperm.xlu0 %4777, %v4519
      %v4779 = vpop.permute.xlu0 %4778
      %4780 = vset.pattern.permute.xlu0 0
      %4781 = vperm.xlu0 %4780, %v4564
      %v4782 = vpop.permute.xlu0 %4781
      %4783 = vset.pattern.permute.xlu0 0
      %4784 = vperm.xlu0 %4783, %v4567
      %v4785 = vpop.permute.xlu0 %4784
      %4786 = vset.pattern.permute.xlu0 0
      %4787 = vperm.xlu0 %4786, %v4234
      %v4788 = vpop.permute.xlu0 %4787
      %4789 = vset.pattern.permute.xlu0 0
      %4790 = vperm.xlu0 %4789, %v4237
      %v4791 = vpop.permute.xlu0 %4790
      %4792 = vset.pattern.permute.xlu0 0
      %4793 = vperm.xlu0 %4792, %v4282
      %v4794 = vpop.permute.xlu0 %4793
      %4795 = vset.pattern.permute.xlu0 0
      %4796 = vperm.xlu0 %4795, %v4285
      %v4797 = vpop.permute.xlu0 %4796
      %4798 = vset.pattern.permute.xlu0 0
      %4799 = vperm.xlu0 %4798, %v4330
      %v4800 = vpop.permute.xlu0 %4799
      %4801 = vset.pattern.permute.xlu0 0
      %4802 = vperm.xlu0 %4801, %v4333
      %v4803 = vpop.permute.xlu0 %4802
      %4804 = vset.pattern.permute.xlu0 0
      %4805 = vperm.xlu0 %4804, %v4378
      %v4806 = vpop.permute.xlu0 %4805
      %4807 = vset.pattern.permute.xlu0 0
      %4808 = vperm.xlu0 %4807, %v4381
      %v4809 = vpop.permute.xlu0 %4808
      %4810 = vset.pattern.permute.xlu0 0
      %4811 = vperm.xlu0 %4810, %v4426
      %v4812 = vpop.permute.xlu0 %4811
      %4813 = vset.pattern.permute.xlu0 0
      %4814 = vperm.xlu0 %4813, %v4429
      %v4815 = vpop.permute.xlu0 %4814
      %4816 = vset.pattern.permute.xlu0 0
      %4817 = vperm.xlu0 %4816, %v4474
      %v4818 = vpop.permute.xlu0 %4817
      %4819 = vset.pattern.permute.xlu0 0
      %4820 = vperm.xlu0 %4819, %v4477
      %v4821 = vpop.permute.xlu0 %4820
      %4822 = vset.pattern.permute.xlu0 0
      %4823 = vperm.xlu0 %4822, %v4522
      %v4824 = vpop.permute.xlu0 %4823
      %4825 = vset.pattern.permute.xlu0 0
      %4826 = vperm.xlu0 %4825, %v4525
      %v4827 = vpop.permute.xlu0 %4826
      %4828 = vset.pattern.permute.xlu0 0
      %4829 = vperm.xlu0 %4828, %v4570
      %v4830 = vpop.permute.xlu0 %4829
      %4831 = vset.pattern.permute.xlu0 0
      %4832 = vperm.xlu0 %4831, %v4573
      %v4833 = vpop.permute.xlu0 %4832
      %4834 = vset.pattern.permute.xlu0 0
      %4835 = vperm.xlu0 %4834, %v4240
      %v4836 = vpop.permute.xlu0 %4835
      %4837 = vset.pattern.permute.xlu0 0
      %4838 = vperm.xlu0 %4837, %v4243
      %v4839 = vpop.permute.xlu0 %4838
      %4840 = vset.pattern.permute.xlu0 0
      %4841 = vperm.xlu0 %4840, %v4288
      %v4842 = vpop.permute.xlu0 %4841
      %4843 = vset.pattern.permute.xlu0 0
      %4844 = vperm.xlu0 %4843, %v4291
      %v4845 = vpop.permute.xlu0 %4844
      %4846 = vset.pattern.permute.xlu0 0
      %4847 = vperm.xlu0 %4846, %v4336
      %v4848 = vpop.permute.xlu0 %4847
      %4849 = vset.pattern.permute.xlu0 0
      %4850 = vperm.xlu0 %4849, %v4339
      %v4851 = vpop.permute.xlu0 %4850
      %4852 = vset.pattern.permute.xlu0 0
      %4853 = vperm.xlu0 %4852, %v4384
      %v4854 = vpop.permute.xlu0 %4853
      %4855 = vset.pattern.permute.xlu0 0
      %4856 = vperm.xlu0 %4855, %v4387
      %v4857 = vpop.permute.xlu0 %4856
      %4858 = vset.pattern.permute.xlu0 0
      %4859 = vperm.xlu0 %4858, %v4432
      %v4860 = vpop.permute.xlu0 %4859
      %4861 = vset.pattern.permute.xlu0 0
      %4862 = vperm.xlu0 %4861, %v4435
      %v4863 = vpop.permute.xlu0 %4862
      %4864 = vset.pattern.permute.xlu0 0
      %4865 = vperm.xlu0 %4864, %v4480
      %v4866 = vpop.permute.xlu0 %4865
      %4867 = vset.pattern.permute.xlu0 0
      %4868 = vperm.xlu0 %4867, %v4483
      %v4869 = vpop.permute.xlu0 %4868
      %4870 = vset.pattern.permute.xlu0 0
      %4871 = vperm.xlu0 %4870, %v4528
      %v4872 = vpop.permute.xlu0 %4871
      %4873 = vset.pattern.permute.xlu0 0
      %4874 = vperm.xlu0 %4873, %v4531
      %v4875 = vpop.permute.xlu0 %4874
      %4876 = vset.pattern.permute.xlu0 0
      %4877 = vperm.xlu0 %4876, %v4576
      %v4878 = vpop.permute.xlu0 %4877
      %4879 = vset.pattern.permute.xlu0 0
      %4880 = vperm.xlu0 %4879, %v4579
      %v4881 = vpop.permute.xlu0 %4880
      %4882 = vset.pattern.permute.xlu0 0
      %4883 = vperm.xlu0 %4882, %v4246
      %v4884 = vpop.permute.xlu0 %4883
      %4885 = vset.pattern.permute.xlu0 0
      %4886 = vperm.xlu0 %4885, %v4249
      %v4887 = vpop.permute.xlu0 %4886
      %4888 = vset.pattern.permute.xlu0 0
      %4889 = vperm.xlu0 %4888, %v4294
      %v4890 = vpop.permute.xlu0 %4889
      %4891 = vset.pattern.permute.xlu0 0
      %4892 = vperm.xlu0 %4891, %v4297
      %v4893 = vpop.permute.xlu0 %4892
      %4894 = vset.pattern.permute.xlu0 0
      %4895 = vperm.xlu0 %4894, %v4342
      %v4896 = vpop.permute.xlu0 %4895
      %4897 = vset.pattern.permute.xlu0 0
      %4898 = vperm.xlu0 %4897, %v4345
      %v4899 = vpop.permute.xlu0 %4898
      %4900 = vset.pattern.permute.xlu0 0
      %4901 = vperm.xlu0 %4900, %v4390
      %v4902 = vpop.permute.xlu0 %4901
      %4903 = vset.pattern.permute.xlu0 0
      %4904 = vperm.xlu0 %4903, %v4393
      %v4905 = vpop.permute.xlu0 %4904
      %4906 = vset.pattern.permute.xlu0 0
      %4907 = vperm.xlu0 %4906, %v4438
      %v4908 = vpop.permute.xlu0 %4907
      %4909 = vset.pattern.permute.xlu0 0
      %4910 = vperm.xlu0 %4909, %v4441
      %v4911 = vpop.permute.xlu0 %4910
      %4912 = vset.pattern.permute.xlu0 0
      %4913 = vperm.xlu0 %4912, %v4486
      %v4914 = vpop.permute.xlu0 %4913
      %4915 = vset.pattern.permute.xlu0 0
      %4916 = vperm.xlu0 %4915, %v4489
      %v4917 = vpop.permute.xlu0 %4916
      %4918 = vset.pattern.permute.xlu0 0
      %4919 = vperm.xlu0 %4918, %v4534
      %v4920 = vpop.permute.xlu0 %4919
      %4921 = vset.pattern.permute.xlu0 0
      %4922 = vperm.xlu0 %4921, %v4537
      %v4923 = vpop.permute.xlu0 %4922
      %4924 = vset.pattern.permute.xlu0 0
      %4925 = vperm.xlu0 %4924, %v4582
      %v4926 = vpop.permute.xlu0 %4925
      %4927 = vset.pattern.permute.xlu0 0
      %4928 = vperm.xlu0 %4927, %v4585
      %v4929 = vpop.permute.xlu0 %4928
      %4930 = vset.pattern.permute.xlu0 0
      %4931 = vperm.xlu0 %4930, %v4252
      %v4932 = vpop.permute.xlu0 %4931
      %4933 = vset.pattern.permute.xlu0 0
      %4934 = vperm.xlu0 %4933, %v4255
      %v4935 = vpop.permute.xlu0 %4934
      %4936 = vset.pattern.permute.xlu0 0
      %4937 = vperm.xlu0 %4936, %v4300
      %v4938 = vpop.permute.xlu0 %4937
      %4939 = vset.pattern.permute.xlu0 0
      %4940 = vperm.xlu0 %4939, %v4303
      %v4941 = vpop.permute.xlu0 %4940
      %4942 = vset.pattern.permute.xlu0 0
      %4943 = vperm.xlu0 %4942, %v4348
      %v4944 = vpop.permute.xlu0 %4943
      %4945 = vset.pattern.permute.xlu0 0
      %4946 = vperm.xlu0 %4945, %v4351
      %v4947 = vpop.permute.xlu0 %4946
      %4948 = vset.pattern.permute.xlu0 0
      %4949 = vperm.xlu0 %4948, %v4396
      %v4950 = vpop.permute.xlu0 %4949
      %4951 = vset.pattern.permute.xlu0 0
      %4952 = vperm.xlu0 %4951, %v4399
      %v4953 = vpop.permute.xlu0 %4952
      %4954 = vset.pattern.permute.xlu0 0
      %4955 = vperm.xlu0 %4954, %v4444
      %v4956 = vpop.permute.xlu0 %4955
      %4957 = vset.pattern.permute.xlu0 0
      %4958 = vperm.xlu0 %4957, %v4447
      %v4959 = vpop.permute.xlu0 %4958
      %4960 = vset.pattern.permute.xlu0 0
      %4961 = vperm.xlu0 %4960, %v4492
      %v4962 = vpop.permute.xlu0 %4961
      %4963 = vset.pattern.permute.xlu0 0
      %4964 = vperm.xlu0 %4963, %v4495
      %v4965 = vpop.permute.xlu0 %4964
      %4966 = vset.pattern.permute.xlu0 0
      %4967 = vperm.xlu0 %4966, %v4540
      %v4968 = vpop.permute.xlu0 %4967
      %4969 = vset.pattern.permute.xlu0 0
      %4970 = vperm.xlu0 %4969, %v4543
      %v4971 = vpop.permute.xlu0 %4970
      %4972 = vset.pattern.permute.xlu0 0
      %4973 = vperm.xlu0 %4972, %v4588
      %v4974 = vpop.permute.xlu0 %4973
      %4975 = vset.pattern.permute.xlu0 0
      %4976 = vperm.xlu0 %4975, %v4591
      %v4977 = vpop.permute.xlu0 %4976
      %4978 = vset.pattern.permute.xlu0 0
      %4979 = vperm.xlu0 %4978, %v4258
      %v4980 = vpop.permute.xlu0 %4979
      %4981 = vset.pattern.permute.xlu0 0
      %4982 = vperm.xlu0 %4981, %v4261
      %v4983 = vpop.permute.xlu0 %4982
      %4984 = vset.pattern.permute.xlu0 0
      %4985 = vperm.xlu0 %4984, %v4306
      %v4986 = vpop.permute.xlu0 %4985
      %4987 = vset.pattern.permute.xlu0 0
      %4988 = vperm.xlu0 %4987, %v4309
      %v4989 = vpop.permute.xlu0 %4988
      %4990 = vset.pattern.permute.xlu0 0
      %4991 = vperm.xlu0 %4990, %v4354
      %v4992 = vpop.permute.xlu0 %4991
      %4993 = vset.pattern.permute.xlu0 0
      %4994 = vperm.xlu0 %4993, %v4357
      %v4995 = vpop.permute.xlu0 %4994
      %4996 = vset.pattern.permute.xlu0 0
      %4997 = vperm.xlu0 %4996, %v4402
      %v4998 = vpop.permute.xlu0 %4997
      %4999 = vset.pattern.permute.xlu0 0
      %5000 = vperm.xlu0 %4999, %v4405
      %v5001 = vpop.permute.xlu0 %5000
      %5002 = vset.pattern.permute.xlu0 0
      %5003 = vperm.xlu0 %5002, %v4450
      %v5004 = vpop.permute.xlu0 %5003
      %5005 = vset.pattern.permute.xlu0 0
      %5006 = vperm.xlu0 %5005, %v4453
      %v5007 = vpop.permute.xlu0 %5006
      %5008 = vset.pattern.permute.xlu0 0
      %5009 = vperm.xlu0 %5008, %v4498
      %v5010 = vpop.permute.xlu0 %5009
      %5011 = vset.pattern.permute.xlu0 0
      %5012 = vperm.xlu0 %5011, %v4501
      %v5013 = vpop.permute.xlu0 %5012
      %5014 = vset.pattern.permute.xlu0 0
      %5015 = vperm.xlu0 %5014, %v4546
      %v5016 = vpop.permute.xlu0 %5015
      %5017 = vset.pattern.permute.xlu0 0
      %5018 = vperm.xlu0 %5017, %v4549
      %v5019 = vpop.permute.xlu0 %5018
      %5020 = vset.pattern.permute.xlu0 0
      %5021 = vperm.xlu0 %5020, %v4594
      %v5022 = vpop.permute.xlu0 %5021
      %5023 = vset.pattern.permute.xlu0 0
      %5024 = vperm.xlu0 %5023, %v4597
      %v5025 = vpop.permute.xlu0 %5024
      %5026 = vset.pattern.permute.xlu0 0
      %5027 = vperm.xlu0 %5026, %v4264
      %v5028 = vpop.permute.xlu0 %5027
      %5029 = vset.pattern.permute.xlu0 0
      %5030 = vperm.xlu0 %5029, %v4267
      %v5031 = vpop.permute.xlu0 %5030
      %5032 = vset.pattern.permute.xlu0 0
      %5033 = vperm.xlu0 %5032, %v4312
      %v5034 = vpop.permute.xlu0 %5033
      %5035 = vset.pattern.permute.xlu0 0
      %5036 = vperm.xlu0 %5035, %v4315
      %v5037 = vpop.permute.xlu0 %5036
      %5038 = vset.pattern.permute.xlu0 0
      %5039 = vperm.xlu0 %5038, %v4360
      %v5040 = vpop.permute.xlu0 %5039
      %5041 = vset.pattern.permute.xlu0 0
      %5042 = vperm.xlu0 %5041, %v4363
      %v5043 = vpop.permute.xlu0 %5042
      %5044 = vset.pattern.permute.xlu0 0
      %5045 = vperm.xlu0 %5044, %v4408
      %v5046 = vpop.permute.xlu0 %5045
      %5047 = vset.pattern.permute.xlu0 0
      %5048 = vperm.xlu0 %5047, %v4411
      %v5049 = vpop.permute.xlu0 %5048
      %5050 = vset.pattern.permute.xlu0 0
      %5051 = vperm.xlu0 %5050, %v4456
      %v5052 = vpop.permute.xlu0 %5051
      %5053 = vset.pattern.permute.xlu0 0
      %5054 = vperm.xlu0 %5053, %v4459
      %v5055 = vpop.permute.xlu0 %5054
      %5056 = vset.pattern.permute.xlu0 0
      %5057 = vperm.xlu0 %5056, %v4504
      %v5058 = vpop.permute.xlu0 %5057
      %5059 = vset.pattern.permute.xlu0 0
      %5060 = vperm.xlu0 %5059, %v4507
      %v5061 = vpop.permute.xlu0 %5060
      %5062 = vset.pattern.permute.xlu0 0
      %5063 = vperm.xlu0 %5062, %v4552
      %v5064 = vpop.permute.xlu0 %5063
      %5065 = vset.pattern.permute.xlu0 0
      %5066 = vperm.xlu0 %5065, %v4555
      %v5067 = vpop.permute.xlu0 %5066
      %5068 = vset.pattern.permute.xlu0 0
      %5069 = vperm.xlu0 %5068, %v4600
      %v5070 = vpop.permute.xlu0 %5069
      %5071 = vset.pattern.permute.xlu0 0
      %5072 = vperm.xlu0 %5071, %v4603
      %v5073 = vpop.permute.xlu0 %5072
      %5074 = vset.pattern.permute.xlu0 0
      %5075 = vperm.xlu0 %5074, %v4270
      %v5076 = vpop.permute.xlu0 %5075
      %5077 = vset.pattern.permute.xlu0 0
      %5078 = vperm.xlu0 %5077, %v4273
      %v5079 = vpop.permute.xlu0 %5078
      %5080 = vset.pattern.permute.xlu0 0
      %5081 = vperm.xlu0 %5080, %v4318
      %v5082 = vpop.permute.xlu0 %5081
      %5083 = vset.pattern.permute.xlu0 0
      %5084 = vperm.xlu0 %5083, %v4321
      %v5085 = vpop.permute.xlu0 %5084
      %5086 = vset.pattern.permute.xlu0 0
      %5087 = vperm.xlu0 %5086, %v4366
      %v5088 = vpop.permute.xlu0 %5087
      %5089 = vset.pattern.permute.xlu0 0
      %5090 = vperm.xlu0 %5089, %v4369
      %v5091 = vpop.permute.xlu0 %5090
      %5092 = vset.pattern.permute.xlu0 0
      %5093 = vperm.xlu0 %5092, %v4414
      %v5094 = vpop.permute.xlu0 %5093
      %5095 = vset.pattern.permute.xlu0 0
      %5096 = vperm.xlu0 %5095, %v4417
      %v5097 = vpop.permute.xlu0 %5096
      %5098 = vset.pattern.permute.xlu0 0
      %5099 = vperm.xlu0 %5098, %v4462
      %v5100 = vpop.permute.xlu0 %5099
      %5101 = vset.pattern.permute.xlu0 0
      %5102 = vperm.xlu0 %5101, %v4465
      %v5103 = vpop.permute.xlu0 %5102
      %5104 = vset.pattern.permute.xlu0 0
      %5105 = vperm.xlu0 %5104, %v4510
      %v5106 = vpop.permute.xlu0 %5105
      %5107 = vset.pattern.permute.xlu0 0
      %5108 = vperm.xlu0 %5107, %v4513
      %v5109 = vpop.permute.xlu0 %5108
      %5110 = vset.pattern.permute.xlu0 0
      %5111 = vperm.xlu0 %5110, %v4558
      %v5112 = vpop.permute.xlu0 %5111
      %5113 = vset.pattern.permute.xlu0 0
      %5114 = vperm.xlu0 %5113, %v4561
      %v5115 = vpop.permute.xlu0 %5114
      %5116 = vset.pattern.permute.xlu0 0
      %5117 = vperm.xlu0 %5116, %v4606
      %v5118 = vpop.permute.xlu0 %5117
      %5119 = vset.pattern.permute.xlu0 0
      %5120 = vperm.xlu0 %5119, %v4609
      %v5121 = vpop.permute.xlu0 %5120
      %v5122 = vlaneseq
      %v5123 = vand.u32 %v5122, 127
      %v5124 = vlaneseq
      %v5125 = vshrl.u32 %v5124, 7
      %v5126 = vsub.s32 %v5123, %v5125
      %v5127 = vrot.slane %v4740, %v5126
      %v5128 = vadd.s32 %v5123, 4294967288
      %v5129 = vlaneseq
      %v5130 = vshrl.u32 %v5129, 7
      %v5131 = vsub.s32 %v5128, %v5130
      %v5132 = vrot.slane %v4743, %v5131
      %vm5133 = vcmask 130112
      %v5134 = vsel %vm5133, %v5132, %v5127
      %v5135 = vlaneseq
      %v5136 = vshrl.u32 %v5135, 7
      %v5137 = vsub.s32 %v5123, %v5136
      %v5138 = vrot.slane %v4746, %v5137
      %v5139 = vlaneseq
      %v5140 = vshrl.u32 %v5139, 7
      %v5141 = vsub.s32 %v5128, %v5140
      %v5142 = vrot.slane %v4749, %v5141
      %v5143 = vsel %vm5133, %v5142, %v5138
      %v5144 = vlaneseq
      %v5145 = vshrl.u32 %v5144, 7
      %v5146 = vsub.s32 %v5123, %v5145
      %v5147 = vrot.slane %v4752, %v5146
      %v5148 = vlaneseq
      %v5149 = vshrl.u32 %v5148, 7
      %v5150 = vsub.s32 %v5128, %v5149
      %v5151 = vrot.slane %v4755, %v5150
      %v5152 = vsel %vm5133, %v5151, %v5147
      %v5153 = vlaneseq
      %v5154 = vshrl.u32 %v5153, 7
      %v5155 = vsub.s32 %v5123, %v5154
      %v5156 = vrot.slane %v4758, %v5155
      %v5157 = vlaneseq
      %v5158 = vshrl.u32 %v5157, 7
      %v5159 = vsub.s32 %v5128, %v5158
      %v5160 = vrot.slane %v4761, %v5159
      %v5161 = vsel %vm5133, %v5160, %v5156
      %v5162 = vlaneseq
      %v5163 = vshrl.u32 %v5162, 7
      %v5164 = vsub.s32 %v5123, %v5163
      %v5165 = vrot.slane %v4764, %v5164
      %v5166 = vlaneseq
      %v5167 = vshrl.u32 %v5166, 7
      %v5168 = vsub.s32 %v5128, %v5167
      %v5169 = vrot.slane %v4767, %v5168
      %v5170 = vsel %vm5133, %v5169, %v5165
      %v5171 = vlaneseq
      %v5172 = vshrl.u32 %v5171, 7
      %v5173 = vsub.s32 %v5123, %v5172
      %v5174 = vrot.slane %v4770, %v5173
      %v5175 = vlaneseq
      %v5176 = vshrl.u32 %v5175, 7
      %v5177 = vsub.s32 %v5128, %v5176
      %v5178 = vrot.slane %v4773, %v5177
      %v5179 = vsel %vm5133, %v5178, %v5174
      %v5180 = vlaneseq
      %v5181 = vshrl.u32 %v5180, 7
      %v5182 = vsub.s32 %v5123, %v5181
      %v5183 = vrot.slane %v4776, %v5182
      %v5184 = vlaneseq
      %v5185 = vshrl.u32 %v5184, 7
      %v5186 = vsub.s32 %v5128, %v5185
      %v5187 = vrot.slane %v4779, %v5186
      %v5188 = vsel %vm5133, %v5187, %v5183
      %v5189 = vlaneseq
      %v5190 = vshrl.u32 %v5189, 7
      %v5191 = vsub.s32 %v5123, %v5190
      %v5192 = vrot.slane %v4782, %v5191
      %v5193 = vlaneseq
      %v5194 = vshrl.u32 %v5193, 7
      %v5195 = vsub.s32 %v5128, %v5194
      %v5196 = vrot.slane %v4785, %v5195
      %v5197 = vsel %vm5133, %v5196, %v5192
      %v5198 = vlaneseq
      %v5199 = vshrl.u32 %v5198, 7
      %v5200 = vsub.s32 %v5123, %v5199
      %v5201 = vrot.slane %v4788, %v5200
      %v5202 = vlaneseq
      %v5203 = vshrl.u32 %v5202, 7
      %v5204 = vsub.s32 %v5128, %v5203
      %v5205 = vrot.slane %v4791, %v5204
      %v5206 = vsel %vm5133, %v5205, %v5201
      %v5207 = vlaneseq
      %v5208 = vshrl.u32 %v5207, 7
      %v5209 = vsub.s32 %v5123, %v5208
      %v5210 = vrot.slane %v4794, %v5209
      %v5211 = vlaneseq
      %v5212 = vshrl.u32 %v5211, 7
      %v5213 = vsub.s32 %v5128, %v5212
      %v5214 = vrot.slane %v4797, %v5213
      %v5215 = vsel %vm5133, %v5214, %v5210
      %v5216 = vlaneseq
      %v5217 = vshrl.u32 %v5216, 7
      %v5218 = vsub.s32 %v5123, %v5217
      %v5219 = vrot.slane %v4800, %v5218
      %v5220 = vlaneseq
      %v5221 = vshrl.u32 %v5220, 7
      %v5222 = vsub.s32 %v5128, %v5221
      %v5223 = vrot.slane %v4803, %v5222
      %v5224 = vsel %vm5133, %v5223, %v5219
      %v5225 = vlaneseq
      %v5226 = vshrl.u32 %v5225, 7
      %v5227 = vsub.s32 %v5123, %v5226
      %v5228 = vrot.slane %v4806, %v5227
      %v5229 = vlaneseq
      %v5230 = vshrl.u32 %v5229, 7
      %v5231 = vsub.s32 %v5128, %v5230
      %v5232 = vrot.slane %v4809, %v5231
      %v5233 = vsel %vm5133, %v5232, %v5228
      %v5234 = vlaneseq
      %v5235 = vshrl.u32 %v5234, 7
      %v5236 = vsub.s32 %v5123, %v5235
      %v5237 = vrot.slane %v4812, %v5236
      %v5238 = vlaneseq
      %v5239 = vshrl.u32 %v5238, 7
      %v5240 = vsub.s32 %v5128, %v5239
      %v5241 = vrot.slane %v4815, %v5240
      %v5242 = vsel %vm5133, %v5241, %v5237
      %v5243 = vlaneseq
      %v5244 = vshrl.u32 %v5243, 7
      %v5245 = vsub.s32 %v5123, %v5244
      %v5246 = vrot.slane %v4818, %v5245
      %v5247 = vlaneseq
      %v5248 = vshrl.u32 %v5247, 7
      %v5249 = vsub.s32 %v5128, %v5248
      %v5250 = vrot.slane %v4821, %v5249
      %v5251 = vsel %vm5133, %v5250, %v5246
      %v5252 = vlaneseq
      %v5253 = vshrl.u32 %v5252, 7
      %v5254 = vsub.s32 %v5123, %v5253
      %v5255 = vrot.slane %v4824, %v5254
      %v5256 = vlaneseq
      %v5257 = vshrl.u32 %v5256, 7
      %v5258 = vsub.s32 %v5128, %v5257
      %v5259 = vrot.slane %v4827, %v5258
      %v5260 = vsel %vm5133, %v5259, %v5255
      %v5261 = vlaneseq
      %v5262 = vshrl.u32 %v5261, 7
      %v5263 = vsub.s32 %v5123, %v5262
      %v5264 = vrot.slane %v4830, %v5263
      %v5265 = vlaneseq
      %v5266 = vshrl.u32 %v5265, 7
      %v5267 = vsub.s32 %v5128, %v5266
      %v5268 = vrot.slane %v4833, %v5267
      %v5269 = vsel %vm5133, %v5268, %v5264
      %v5270 = vlaneseq
      %v5271 = vshrl.u32 %v5270, 7
      %v5272 = vsub.s32 %v5123, %v5271
      %v5273 = vrot.slane %v4836, %v5272
      %v5274 = vlaneseq
      %v5275 = vshrl.u32 %v5274, 7
      %v5276 = vsub.s32 %v5128, %v5275
      %v5277 = vrot.slane %v4839, %v5276
      %v5278 = vsel %vm5133, %v5277, %v5273
      %v5279 = vlaneseq
      %v5280 = vshrl.u32 %v5279, 7
      %v5281 = vsub.s32 %v5123, %v5280
      %v5282 = vrot.slane %v4842, %v5281
      %v5283 = vlaneseq
      %v5284 = vshrl.u32 %v5283, 7
      %v5285 = vsub.s32 %v5128, %v5284
      %v5286 = vrot.slane %v4845, %v5285
      %v5287 = vsel %vm5133, %v5286, %v5282
      %v5288 = vlaneseq
      %v5289 = vshrl.u32 %v5288, 7
      %v5290 = vsub.s32 %v5123, %v5289
      %v5291 = vrot.slane %v4848, %v5290
      %v5292 = vlaneseq
      %v5293 = vshrl.u32 %v5292, 7
      %v5294 = vsub.s32 %v5128, %v5293
      %v5295 = vrot.slane %v4851, %v5294
      %v5296 = vsel %vm5133, %v5295, %v5291
      %v5297 = vlaneseq
      %v5298 = vshrl.u32 %v5297, 7
      %v5299 = vsub.s32 %v5123, %v5298
      %v5300 = vrot.slane %v4854, %v5299
      %v5301 = vlaneseq
      %v5302 = vshrl.u32 %v5301, 7
      %v5303 = vsub.s32 %v5128, %v5302
      %v5304 = vrot.slane %v4857, %v5303
      %v5305 = vsel %vm5133, %v5304, %v5300
      %v5306 = vlaneseq
      %v5307 = vshrl.u32 %v5306, 7
      %v5308 = vsub.s32 %v5123, %v5307
      %v5309 = vrot.slane %v4860, %v5308
      %v5310 = vlaneseq
      %v5311 = vshrl.u32 %v5310, 7
      %v5312 = vsub.s32 %v5128, %v5311
      %v5313 = vrot.slane %v4863, %v5312
      %v5314 = vsel %vm5133, %v5313, %v5309
      %v5315 = vlaneseq
      %v5316 = vshrl.u32 %v5315, 7
      %v5317 = vsub.s32 %v5123, %v5316
      %v5318 = vrot.slane %v4866, %v5317
      %v5319 = vlaneseq
      %v5320 = vshrl.u32 %v5319, 7
      %v5321 = vsub.s32 %v5128, %v5320
      %v5322 = vrot.slane %v4869, %v5321
      %v5323 = vsel %vm5133, %v5322, %v5318
      %v5324 = vlaneseq
      %v5325 = vshrl.u32 %v5324, 7
      %v5326 = vsub.s32 %v5123, %v5325
      %v5327 = vrot.slane %v4872, %v5326
      %v5328 = vlaneseq
      %v5329 = vshrl.u32 %v5328, 7
      %v5330 = vsub.s32 %v5128, %v5329
      %v5331 = vrot.slane %v4875, %v5330
      %v5332 = vsel %vm5133, %v5331, %v5327
      %v5333 = vlaneseq
      %v5334 = vshrl.u32 %v5333, 7
      %v5335 = vsub.s32 %v5123, %v5334
      %v5336 = vrot.slane %v4878, %v5335
      %v5337 = vlaneseq
      %v5338 = vshrl.u32 %v5337, 7
      %v5339 = vsub.s32 %v5128, %v5338
      %v5340 = vrot.slane %v4881, %v5339
      %v5341 = vsel %vm5133, %v5340, %v5336
      %v5342 = vlaneseq
      %v5343 = vshrl.u32 %v5342, 7
      %v5344 = vsub.s32 %v5123, %v5343
      %v5345 = vrot.slane %v4884, %v5344
      %v5346 = vlaneseq
      %v5347 = vshrl.u32 %v5346, 7
      %v5348 = vsub.s32 %v5128, %v5347
      %v5349 = vrot.slane %v4887, %v5348
      %v5350 = vsel %vm5133, %v5349, %v5345
      %v5351 = vlaneseq
      %v5352 = vshrl.u32 %v5351, 7
      %v5353 = vsub.s32 %v5123, %v5352
      %v5354 = vrot.slane %v4890, %v5353
      %v5355 = vlaneseq
      %v5356 = vshrl.u32 %v5355, 7
      %v5357 = vsub.s32 %v5128, %v5356
      %v5358 = vrot.slane %v4893, %v5357
      %v5359 = vsel %vm5133, %v5358, %v5354
      %v5360 = vlaneseq
      %v5361 = vshrl.u32 %v5360, 7
      %v5362 = vsub.s32 %v5123, %v5361
      %v5363 = vrot.slane %v4896, %v5362
      %v5364 = vlaneseq
      %v5365 = vshrl.u32 %v5364, 7
      %v5366 = vsub.s32 %v5128, %v5365
      %v5367 = vrot.slane %v4899, %v5366
      %v5368 = vsel %vm5133, %v5367, %v5363
      %v5369 = vlaneseq
      %v5370 = vshrl.u32 %v5369, 7
      %v5371 = vsub.s32 %v5123, %v5370
      %v5372 = vrot.slane %v4902, %v5371
      %v5373 = vlaneseq
      %v5374 = vshrl.u32 %v5373, 7
      %v5375 = vsub.s32 %v5128, %v5374
      %v5376 = vrot.slane %v4905, %v5375
      %v5377 = vsel %vm5133, %v5376, %v5372
      %v5378 = vlaneseq
      %v5379 = vshrl.u32 %v5378, 7
      %v5380 = vsub.s32 %v5123, %v5379
      %v5381 = vrot.slane %v4908, %v5380
      %v5382 = vlaneseq
      %v5383 = vshrl.u32 %v5382, 7
      %v5384 = vsub.s32 %v5128, %v5383
      %v5385 = vrot.slane %v4911, %v5384
      %v5386 = vsel %vm5133, %v5385, %v5381
      %v5387 = vlaneseq
      %v5388 = vshrl.u32 %v5387, 7
      %v5389 = vsub.s32 %v5123, %v5388
      %v5390 = vrot.slane %v4914, %v5389
      %v5391 = vlaneseq
      %v5392 = vshrl.u32 %v5391, 7
      %v5393 = vsub.s32 %v5128, %v5392
      %v5394 = vrot.slane %v4917, %v5393
      %v5395 = vsel %vm5133, %v5394, %v5390
      %v5396 = vlaneseq
      %v5397 = vshrl.u32 %v5396, 7
      %v5398 = vsub.s32 %v5123, %v5397
      %v5399 = vrot.slane %v4920, %v5398
      %v5400 = vlaneseq
      %v5401 = vshrl.u32 %v5400, 7
      %v5402 = vsub.s32 %v5128, %v5401
      %v5403 = vrot.slane %v4923, %v5402
      %v5404 = vsel %vm5133, %v5403, %v5399
      %v5405 = vlaneseq
      %v5406 = vshrl.u32 %v5405, 7
      %v5407 = vsub.s32 %v5123, %v5406
      %v5408 = vrot.slane %v4926, %v5407
      %v5409 = vlaneseq
      %v5410 = vshrl.u32 %v5409, 7
      %v5411 = vsub.s32 %v5128, %v5410
      %v5412 = vrot.slane %v4929, %v5411
      %v5413 = vsel %vm5133, %v5412, %v5408
      %v5414 = vlaneseq
      %v5415 = vshrl.u32 %v5414, 7
      %v5416 = vsub.s32 %v5123, %v5415
      %v5417 = vrot.slane %v4932, %v5416
      %v5418 = vlaneseq
      %v5419 = vshrl.u32 %v5418, 7
      %v5420 = vsub.s32 %v5128, %v5419
      %v5421 = vrot.slane %v4935, %v5420
      %v5422 = vsel %vm5133, %v5421, %v5417
      %v5423 = vlaneseq
      %v5424 = vshrl.u32 %v5423, 7
      %v5425 = vsub.s32 %v5123, %v5424
      %v5426 = vrot.slane %v4938, %v5425
      %v5427 = vlaneseq
      %v5428 = vshrl.u32 %v5427, 7
      %v5429 = vsub.s32 %v5128, %v5428
      %v5430 = vrot.slane %v4941, %v5429
      %v5431 = vsel %vm5133, %v5430, %v5426
      %v5432 = vlaneseq
      %v5433 = vshrl.u32 %v5432, 7
      %v5434 = vsub.s32 %v5123, %v5433
      %v5435 = vrot.slane %v4944, %v5434
      %v5436 = vlaneseq
      %v5437 = vshrl.u32 %v5436, 7
      %v5438 = vsub.s32 %v5128, %v5437
      %v5439 = vrot.slane %v4947, %v5438
      %v5440 = vsel %vm5133, %v5439, %v5435
      %v5441 = vlaneseq
      %v5442 = vshrl.u32 %v5441, 7
      %v5443 = vsub.s32 %v5123, %v5442
      %v5444 = vrot.slane %v4950, %v5443
      %v5445 = vlaneseq
      %v5446 = vshrl.u32 %v5445, 7
      %v5447 = vsub.s32 %v5128, %v5446
      %v5448 = vrot.slane %v4953, %v5447
      %v5449 = vsel %vm5133, %v5448, %v5444
      %v5450 = vlaneseq
      %v5451 = vshrl.u32 %v5450, 7
      %v5452 = vsub.s32 %v5123, %v5451
      %v5453 = vrot.slane %v4956, %v5452
      %v5454 = vlaneseq
      %v5455 = vshrl.u32 %v5454, 7
      %v5456 = vsub.s32 %v5128, %v5455
      %v5457 = vrot.slane %v4959, %v5456
      %v5458 = vsel %vm5133, %v5457, %v5453
      %v5459 = vlaneseq
      %v5460 = vshrl.u32 %v5459, 7
      %v5461 = vsub.s32 %v5123, %v5460
      %v5462 = vrot.slane %v4962, %v5461
      %v5463 = vlaneseq
      %v5464 = vshrl.u32 %v5463, 7
      %v5465 = vsub.s32 %v5128, %v5464
      %v5466 = vrot.slane %v4965, %v5465
      %v5467 = vsel %vm5133, %v5466, %v5462
      %v5468 = vlaneseq
      %v5469 = vshrl.u32 %v5468, 7
      %v5470 = vsub.s32 %v5123, %v5469
      %v5471 = vrot.slane %v4968, %v5470
      %v5472 = vlaneseq
      %v5473 = vshrl.u32 %v5472, 7
      %v5474 = vsub.s32 %v5128, %v5473
      %v5475 = vrot.slane %v4971, %v5474
      %v5476 = vsel %vm5133, %v5475, %v5471
      %v5477 = vlaneseq
      %v5478 = vshrl.u32 %v5477, 7
      %v5479 = vsub.s32 %v5123, %v5478
      %v5480 = vrot.slane %v4974, %v5479
      %v5481 = vlaneseq
      %v5482 = vshrl.u32 %v5481, 7
      %v5483 = vsub.s32 %v5128, %v5482
      %v5484 = vrot.slane %v4977, %v5483
      %v5485 = vsel %vm5133, %v5484, %v5480
      %v5486 = vlaneseq
      %v5487 = vshrl.u32 %v5486, 7
      %v5488 = vsub.s32 %v5123, %v5487
      %v5489 = vrot.slane %v4980, %v5488
      %v5490 = vlaneseq
      %v5491 = vshrl.u32 %v5490, 7
      %v5492 = vsub.s32 %v5128, %v5491
      %v5493 = vrot.slane %v4983, %v5492
      %v5494 = vsel %vm5133, %v5493, %v5489
      %v5495 = vlaneseq
      %v5496 = vshrl.u32 %v5495, 7
      %v5497 = vsub.s32 %v5123, %v5496
      %v5498 = vrot.slane %v4986, %v5497
      %v5499 = vlaneseq
      %v5500 = vshrl.u32 %v5499, 7
      %v5501 = vsub.s32 %v5128, %v5500
      %v5502 = vrot.slane %v4989, %v5501
      %v5503 = vsel %vm5133, %v5502, %v5498
      %v5504 = vlaneseq
      %v5505 = vshrl.u32 %v5504, 7
      %v5506 = vsub.s32 %v5123, %v5505
      %v5507 = vrot.slane %v4992, %v5506
      %v5508 = vlaneseq
      %v5509 = vshrl.u32 %v5508, 7
      %v5510 = vsub.s32 %v5128, %v5509
      %v5511 = vrot.slane %v4995, %v5510
      %v5512 = vsel %vm5133, %v5511, %v5507
      %v5513 = vlaneseq
      %v5514 = vshrl.u32 %v5513, 7
      %v5515 = vsub.s32 %v5123, %v5514
      %v5516 = vrot.slane %v4998, %v5515
      %v5517 = vlaneseq
      %v5518 = vshrl.u32 %v5517, 7
      %v5519 = vsub.s32 %v5128, %v5518
      %v5520 = vrot.slane %v5001, %v5519
      %v5521 = vsel %vm5133, %v5520, %v5516
      %v5522 = vlaneseq
      %v5523 = vshrl.u32 %v5522, 7
      %v5524 = vsub.s32 %v5123, %v5523
      %v5525 = vrot.slane %v5004, %v5524
      %v5526 = vlaneseq
      %v5527 = vshrl.u32 %v5526, 7
      %v5528 = vsub.s32 %v5128, %v5527
      %v5529 = vrot.slane %v5007, %v5528
      %v5530 = vsel %vm5133, %v5529, %v5525
      %v5531 = vlaneseq
      %v5532 = vshrl.u32 %v5531, 7
      %v5533 = vsub.s32 %v5123, %v5532
      %v5534 = vrot.slane %v5010, %v5533
      %v5535 = vlaneseq
      %v5536 = vshrl.u32 %v5535, 7
      %v5537 = vsub.s32 %v5128, %v5536
      %v5538 = vrot.slane %v5013, %v5537
      %v5539 = vsel %vm5133, %v5538, %v5534
      %v5540 = vlaneseq
      %v5541 = vshrl.u32 %v5540, 7
      %v5542 = vsub.s32 %v5123, %v5541
      %v5543 = vrot.slane %v5016, %v5542
      %v5544 = vlaneseq
      %v5545 = vshrl.u32 %v5544, 7
      %v5546 = vsub.s32 %v5128, %v5545
      %v5547 = vrot.slane %v5019, %v5546
      %v5548 = vsel %vm5133, %v5547, %v5543
      %v5549 = vlaneseq
      %v5550 = vshrl.u32 %v5549, 7
      %v5551 = vsub.s32 %v5123, %v5550
      %v5552 = vrot.slane %v5022, %v5551
      %v5553 = vlaneseq
      %v5554 = vshrl.u32 %v5553, 7
      %v5555 = vsub.s32 %v5128, %v5554
      %v5556 = vrot.slane %v5025, %v5555
      %v5557 = vsel %vm5133, %v5556, %v5552
      %v5558 = vlaneseq
      %v5559 = vshrl.u32 %v5558, 7
      %v5560 = vsub.s32 %v5123, %v5559
      %v5561 = vrot.slane %v5028, %v5560
      %v5562 = vlaneseq
      %v5563 = vshrl.u32 %v5562, 7
      %v5564 = vsub.s32 %v5128, %v5563
      %v5565 = vrot.slane %v5031, %v5564
      %v5566 = vsel %vm5133, %v5565, %v5561
      %v5567 = vlaneseq
      %v5568 = vshrl.u32 %v5567, 7
      %v5569 = vsub.s32 %v5123, %v5568
      %v5570 = vrot.slane %v5034, %v5569
      %v5571 = vlaneseq
      %v5572 = vshrl.u32 %v5571, 7
      %v5573 = vsub.s32 %v5128, %v5572
      %v5574 = vrot.slane %v5037, %v5573
      %v5575 = vsel %vm5133, %v5574, %v5570
      %v5576 = vlaneseq
      %v5577 = vshrl.u32 %v5576, 7
      %v5578 = vsub.s32 %v5123, %v5577
      %v5579 = vrot.slane %v5040, %v5578
      %v5580 = vlaneseq
      %v5581 = vshrl.u32 %v5580, 7
      %v5582 = vsub.s32 %v5128, %v5581
      %v5583 = vrot.slane %v5043, %v5582
      %v5584 = vsel %vm5133, %v5583, %v5579
      %v5585 = vlaneseq
      %v5586 = vshrl.u32 %v5585, 7
      %v5587 = vsub.s32 %v5123, %v5586
      %v5588 = vrot.slane %v5046, %v5587
      %v5589 = vlaneseq
      %v5590 = vshrl.u32 %v5589, 7
      %v5591 = vsub.s32 %v5128, %v5590
      %v5592 = vrot.slane %v5049, %v5591
      %v5593 = vsel %vm5133, %v5592, %v5588
      %v5594 = vlaneseq
      %v5595 = vshrl.u32 %v5594, 7
      %v5596 = vsub.s32 %v5123, %v5595
      %v5597 = vrot.slane %v5052, %v5596
      %v5598 = vlaneseq
      %v5599 = vshrl.u32 %v5598, 7
      %v5600 = vsub.s32 %v5128, %v5599
      %v5601 = vrot.slane %v5055, %v5600
      %v5602 = vsel %vm5133, %v5601, %v5597
      %v5603 = vlaneseq
      %v5604 = vshrl.u32 %v5603, 7
      %v5605 = vsub.s32 %v5123, %v5604
      %v5606 = vrot.slane %v5058, %v5605
      %v5607 = vlaneseq
      %v5608 = vshrl.u32 %v5607, 7
      %v5609 = vsub.s32 %v5128, %v5608
      %v5610 = vrot.slane %v5061, %v5609
      %v5611 = vsel %vm5133, %v5610, %v5606
      %v5612 = vlaneseq
      %v5613 = vshrl.u32 %v5612, 7
      %v5614 = vsub.s32 %v5123, %v5613
      %v5615 = vrot.slane %v5064, %v5614
      %v5616 = vlaneseq
      %v5617 = vshrl.u32 %v5616, 7
      %v5618 = vsub.s32 %v5128, %v5617
      %v5619 = vrot.slane %v5067, %v5618
      %v5620 = vsel %vm5133, %v5619, %v5615
      %v5621 = vlaneseq
      %v5622 = vshrl.u32 %v5621, 7
      %v5623 = vsub.s32 %v5123, %v5622
      %v5624 = vrot.slane %v5070, %v5623
      %v5625 = vlaneseq
      %v5626 = vshrl.u32 %v5625, 7
      %v5627 = vsub.s32 %v5128, %v5626
      %v5628 = vrot.slane %v5073, %v5627
      %v5629 = vsel %vm5133, %v5628, %v5624
      %v5630 = vlaneseq
      %v5631 = vshrl.u32 %v5630, 7
      %v5632 = vsub.s32 %v5123, %v5631
      %v5633 = vrot.slane %v5076, %v5632
      %v5634 = vlaneseq
      %v5635 = vshrl.u32 %v5634, 7
      %v5636 = vsub.s32 %v5128, %v5635
      %v5637 = vrot.slane %v5079, %v5636
      %v5638 = vsel %vm5133, %v5637, %v5633
      %v5639 = vlaneseq
      %v5640 = vshrl.u32 %v5639, 7
      %v5641 = vsub.s32 %v5123, %v5640
      %v5642 = vrot.slane %v5082, %v5641
      %v5643 = vlaneseq
      %v5644 = vshrl.u32 %v5643, 7
      %v5645 = vsub.s32 %v5128, %v5644
      %v5646 = vrot.slane %v5085, %v5645
      %v5647 = vsel %vm5133, %v5646, %v5642
      %v5648 = vlaneseq
      %v5649 = vshrl.u32 %v5648, 7
      %v5650 = vsub.s32 %v5123, %v5649
      %v5651 = vrot.slane %v5088, %v5650
      %v5652 = vlaneseq
      %v5653 = vshrl.u32 %v5652, 7
      %v5654 = vsub.s32 %v5128, %v5653
      %v5655 = vrot.slane %v5091, %v5654
      %v5656 = vsel %vm5133, %v5655, %v5651
      %v5657 = vlaneseq
      %v5658 = vshrl.u32 %v5657, 7
      %v5659 = vsub.s32 %v5123, %v5658
      %v5660 = vrot.slane %v5094, %v5659
      %v5661 = vlaneseq
      %v5662 = vshrl.u32 %v5661, 7
      %v5663 = vsub.s32 %v5128, %v5662
      %v5664 = vrot.slane %v5097, %v5663
      %v5665 = vsel %vm5133, %v5664, %v5660
      %v5666 = vlaneseq
      %v5667 = vshrl.u32 %v5666, 7
      %v5668 = vsub.s32 %v5123, %v5667
      %v5669 = vrot.slane %v5100, %v5668
      %v5670 = vlaneseq
      %v5671 = vshrl.u32 %v5670, 7
      %v5672 = vsub.s32 %v5128, %v5671
      %v5673 = vrot.slane %v5103, %v5672
      %v5674 = vsel %vm5133, %v5673, %v5669
      %v5675 = vlaneseq
      %v5676 = vshrl.u32 %v5675, 7
      %v5677 = vsub.s32 %v5123, %v5676
      %v5678 = vrot.slane %v5106, %v5677
      %v5679 = vlaneseq
      %v5680 = vshrl.u32 %v5679, 7
      %v5681 = vsub.s32 %v5128, %v5680
      %v5682 = vrot.slane %v5109, %v5681
      %v5683 = vsel %vm5133, %v5682, %v5678
      %v5684 = vlaneseq
      %v5685 = vshrl.u32 %v5684, 7
      %v5686 = vsub.s32 %v5123, %v5685
      %v5687 = vrot.slane %v5112, %v5686
      %v5688 = vlaneseq
      %v5689 = vshrl.u32 %v5688, 7
      %v5690 = vsub.s32 %v5128, %v5689
      %v5691 = vrot.slane %v5115, %v5690
      %v5692 = vsel %vm5133, %v5691, %v5687
      %v5693 = vlaneseq
      %v5694 = vshrl.u32 %v5693, 7
      %v5695 = vsub.s32 %v5123, %v5694
      %v5696 = vrot.slane %v5118, %v5695
      %v5697 = vlaneseq
      %v5698 = vshrl.u32 %v5697, 7
      %v5699 = vsub.s32 %v5128, %v5698
      %v5700 = vrot.slane %v5121, %v5699
      %v5701 = vsel %vm5133, %v5700, %v5696
      %vm5702 = vcmask 1041409
      %v5703 = vsel %vm5702, %v5143, %v5134
      %vm5704 = vcmask 1042434
      %v5705 = vsel %vm5704, %v5152, %v5703
      %vm5706 = vcmask 1043459
      %v5707 = vsel %vm5706, %v5161, %v5705
      %vm5708 = vcmask 1044484
      %v5709 = vsel %vm5708, %v5170, %v5707
      %vm5710 = vcmask 1045509
      %v5711 = vsel %vm5710, %v5179, %v5709
      %vm5712 = vcmask 1046534
      %v5713 = vsel %vm5712, %v5188, %v5711
      %vm5714 = vcmask 1047559
      %v5715 = vsel %vm5714, %v5197, %v5713
      %v5716 = vsel %vm5702, %v5215, %v5206
      %v5717 = vsel %vm5704, %v5224, %v5716
      %v5718 = vsel %vm5706, %v5233, %v5717
      %v5719 = vsel %vm5708, %v5242, %v5718
      %v5720 = vsel %vm5710, %v5251, %v5719
      %v5721 = vsel %vm5712, %v5260, %v5720
      %v5722 = vsel %vm5714, %v5269, %v5721
      %v5723 = vsel %vm5702, %v5287, %v5278
      %v5724 = vsel %vm5704, %v5296, %v5723
      %v5725 = vsel %vm5706, %v5305, %v5724
      %v5726 = vsel %vm5708, %v5314, %v5725
      %v5727 = vsel %vm5710, %v5323, %v5726
      %v5728 = vsel %vm5712, %v5332, %v5727
      %v5729 = vsel %vm5714, %v5341, %v5728
      %v5730 = vsel %vm5702, %v5359, %v5350
      %v5731 = vsel %vm5704, %v5368, %v5730
      %v5732 = vsel %vm5706, %v5377, %v5731
      %v5733 = vsel %vm5708, %v5386, %v5732
      %v5734 = vsel %vm5710, %v5395, %v5733
      %v5735 = vsel %vm5712, %v5404, %v5734
      %v5736 = vsel %vm5714, %v5413, %v5735
      %v5737 = vsel %vm5702, %v5431, %v5422
      %v5738 = vsel %vm5704, %v5440, %v5737
      %v5739 = vsel %vm5706, %v5449, %v5738
      %v5740 = vsel %vm5708, %v5458, %v5739
      %v5741 = vsel %vm5710, %v5467, %v5740
      %v5742 = vsel %vm5712, %v5476, %v5741
      %v5743 = vsel %vm5714, %v5485, %v5742
      %v5744 = vsel %vm5702, %v5503, %v5494
      %v5745 = vsel %vm5704, %v5512, %v5744
      %v5746 = vsel %vm5706, %v5521, %v5745
      %v5747 = vsel %vm5708, %v5530, %v5746
      %v5748 = vsel %vm5710, %v5539, %v5747
      %v5749 = vsel %vm5712, %v5548, %v5748
      %v5750 = vsel %vm5714, %v5557, %v5749
      %v5751 = vsel %vm5702, %v5575, %v5566
      %v5752 = vsel %vm5704, %v5584, %v5751
      %v5753 = vsel %vm5706, %v5593, %v5752
      %v5754 = vsel %vm5708, %v5602, %v5753
      %v5755 = vsel %vm5710, %v5611, %v5754
      %v5756 = vsel %vm5712, %v5620, %v5755
      %v5757 = vsel %vm5714, %v5629, %v5756
      %v5758 = vsel %vm5702, %v5647, %v5638
      %v5759 = vsel %vm5704, %v5656, %v5758
      %v5760 = vsel %vm5706, %v5665, %v5759
      %v5761 = vsel %vm5708, %v5674, %v5760
      %v5762 = vsel %vm5710, %v5683, %v5761
      %v5763 = vsel %vm5712, %v5692, %v5762
      %v5764 = vsel %vm5714, %v5701, %v5763
      %v5773 = vcombine.low %v5715, %v5729
      %v5774 = vcombine.high %v5715, %v5729
      %v5776 = vunpack.c.l.s4 1983009808
      %v5777 = vunpack.c.0.s8 %v5776
      %v5778 = vlaneseq
      %v5779 = vshrl.u32 %v5778, 7
      %v5780 = vsub.s32 %v5777, %v5779
      %v5781 = vrot.slane %v5773, %v5780
      %v5783 = vunpack.c.l.s4 1983009808
      %v5784 = vunpack.c.0.s8 %v5783
      %v5785 = vlaneseq
      %v5786 = vshrl.u32 %v5785, 7
      %v5787 = vsub.s32 %v5784, %v5786
      %v5788 = vrot.slane %v5774, %v5787
      %v5789 = vcombine.low %v5722, %v5736
      %v5790 = vcombine.high %v5722, %v5736
      %v5792 = vunpack.c.l.s4 1983009808
      %v5793 = vunpack.c.0.s8 %v5792
      %v5794 = vlaneseq
      %v5795 = vshrl.u32 %v5794, 7
      %v5796 = vsub.s32 %v5793, %v5795
      %v5797 = vrot.slane %v5789, %v5796
      %v5799 = vunpack.c.l.s4 1983009808
      %v5800 = vunpack.c.0.s8 %v5799
      %v5801 = vlaneseq
      %v5802 = vshrl.u32 %v5801, 7
      %v5803 = vsub.s32 %v5800, %v5802
      %v5804 = vrot.slane %v5790, %v5803
      %v5805 = vcombine.low %v5743, %v5757
      %v5806 = vcombine.high %v5743, %v5757
      %v5808 = vunpack.c.l.s4 1983009808
      %v5809 = vunpack.c.0.s8 %v5808
      %v5810 = vlaneseq
      %v5811 = vshrl.u32 %v5810, 7
      %v5812 = vsub.s32 %v5809, %v5811
      %v5813 = vrot.slane %v5805, %v5812
      %v5815 = vunpack.c.l.s4 1983009808
      %v5816 = vunpack.c.0.s8 %v5815
      %v5817 = vlaneseq
      %v5818 = vshrl.u32 %v5817, 7
      %v5819 = vsub.s32 %v5816, %v5818
      %v5820 = vrot.slane %v5806, %v5819
      %v5821 = vcombine.low %v5750, %v5764
      %v5822 = vcombine.high %v5750, %v5764
      %v5824 = vunpack.c.l.s4 1983009808
      %v5825 = vunpack.c.0.s8 %v5824
      %v5826 = vlaneseq
      %v5827 = vshrl.u32 %v5826, 7
      %v5828 = vsub.s32 %v5825, %v5827
      %v5829 = vrot.slane %v5821, %v5828
      %v5831 = vunpack.c.l.s4 1983009808
      %v5832 = vunpack.c.0.s8 %v5831
      %v5833 = vlaneseq
      %v5834 = vshrl.u32 %v5833, 7
      %v5835 = vsub.s32 %v5832, %v5834
      %v5836 = vrot.slane %v5822, %v5835
      %v5837 = vcombine.low %v5781, %v5797
      %v5838 = vcombine.high %v5781, %v5797
      %v5840 = vunpack.c.l.s4 1934713408
      %v5841 = vunpack.c.0.s8 %v5840
      %v5842 = vlaneseq
      %v5843 = vshrl.u32 %v5842, 7
      %v5844 = vsub.s32 %v5841, %v5843
      %v5845 = vrot.slane %v5837, %v5844
      %v5847 = vunpack.c.l.s4 1934713408
      %v5848 = vunpack.c.0.s8 %v5847
      %v5849 = vlaneseq
      %v5850 = vshrl.u32 %v5849, 7
      %v5851 = vsub.s32 %v5848, %v5850
      %v5852 = vrot.slane %v5838, %v5851
      %v5853 = vcombine.low %v5788, %v5804
      %v5854 = vcombine.high %v5788, %v5804
      %v5856 = vunpack.c.l.s4 1934713408
      %v5857 = vunpack.c.0.s8 %v5856
      %v5858 = vlaneseq
      %v5859 = vshrl.u32 %v5858, 7
      %v5860 = vsub.s32 %v5857, %v5859
      %v5861 = vrot.slane %v5853, %v5860
      %v5863 = vunpack.c.l.s4 1934713408
      %v5864 = vunpack.c.0.s8 %v5863
      %v5865 = vlaneseq
      %v5866 = vshrl.u32 %v5865, 7
      %v5867 = vsub.s32 %v5864, %v5866
      %v5868 = vrot.slane %v5854, %v5867
      %v5869 = vcombine.low %v5813, %v5829
      %v5870 = vcombine.high %v5813, %v5829
      %v5872 = vunpack.c.l.s4 1934713408
      %v5873 = vunpack.c.0.s8 %v5872
      %v5874 = vlaneseq
      %v5875 = vshrl.u32 %v5874, 7
      %v5876 = vsub.s32 %v5873, %v5875
      %v5877 = vrot.slane %v5869, %v5876
      %v5879 = vunpack.c.l.s4 1934713408
      %v5880 = vunpack.c.0.s8 %v5879
      %v5881 = vlaneseq
      %v5882 = vshrl.u32 %v5881, 7
      %v5883 = vsub.s32 %v5880, %v5882
      %v5884 = vrot.slane %v5870, %v5883
      %v5885 = vcombine.low %v5820, %v5836
      %v5886 = vcombine.high %v5820, %v5836
      %v5888 = vunpack.c.l.s4 1934713408
      %v5889 = vunpack.c.0.s8 %v5888
      %v5890 = vlaneseq
      %v5891 = vshrl.u32 %v5890, 7
      %v5892 = vsub.s32 %v5889, %v5891
      %v5893 = vrot.slane %v5885, %v5892
      %v5895 = vunpack.c.l.s4 1934713408
      %v5896 = vunpack.c.0.s8 %v5895
      %v5897 = vlaneseq
      %v5898 = vshrl.u32 %v5897, 7
      %v5899 = vsub.s32 %v5896, %v5898
      %v5900 = vrot.slane %v5886, %v5899
      %v5901 = vcombine.low %v5845, %v5877
      %v5902 = vcombine.high %v5845, %v5877
      %v5903 = vcombine.low %v5852, %v5884
      %v5904 = vcombine.high %v5852, %v5884
      %v5905 = vcombine.low %v5861, %v5893
      %v5906 = vcombine.high %v5861, %v5893
      %v5907 = vcombine.low %v5868, %v5900
      %v5908 = vcombine.high %v5868, %v5900
      %5917 = vrot.lane.b32.xlu0 %v5901, 120
      %v5918 = vpop.permute.xlu0 %5917
      %5919 = vrot.lane.b32.xlu0 %v5902, 120
      %v5920 = vpop.permute.xlu0 %5919
      %5921 = vrot.lane.b32.xlu0 %v5903, 120
      %v5922 = vpop.permute.xlu0 %5921
      %5923 = vrot.lane.b32.xlu0 %v5904, 120
      %v5924 = vpop.permute.xlu0 %5923
      %5925 = vrot.lane.b32.xlu0 %v5905, 120
      %v5926 = vpop.permute.xlu0 %5925
      %5927 = vrot.lane.b32.xlu0 %v5906, 120
      %v5928 = vpop.permute.xlu0 %5927
      %5929 = vrot.lane.b32.xlu0 %v5907, 120
      %v5930 = vpop.permute.xlu0 %5929
      %5931 = vrot.lane.b32.xlu0 %v5908, 120
      %v5932 = vpop.permute.xlu0 %5931
      %v5941 = vmax.f32 %v5901, %v5918
      %v5942 = vmax.f32 %v5902, %v5920
      %v5943 = vmax.f32 %v5903, %v5922
      %v5944 = vmax.f32 %v5904, %v5924
      %v5945 = vmax.f32 %v5905, %v5926
      %v5946 = vmax.f32 %v5906, %v5928
      %v5947 = vmax.f32 %v5907, %v5930
      %v5948 = vmax.f32 %v5908, %v5932
      %v5949 = vcombine.low %v5941, %v5943
      %v5950 = vcombine.high %v5941, %v5943
      %v5952 = vunpack.c.l.s4 1983009808
      %v5953 = vunpack.c.0.s8 %v5952
      %v5954 = vlaneseq
      %v5955 = vshrl.u32 %v5954, 7
      %v5956 = vsub.s32 %v5953, %v5955
      %v5957 = vrot.slane %v5949, %v5956
      %v5959 = vunpack.c.l.s4 1983009808
      %v5960 = vunpack.c.0.s8 %v5959
      %v5961 = vlaneseq
      %v5962 = vshrl.u32 %v5961, 7
      %v5963 = vsub.s32 %v5960, %v5962
      %v5964 = vrot.slane %v5950, %v5963
      %v5965 = vcombine.low %v5942, %v5944
      %v5966 = vcombine.high %v5942, %v5944
      %v5968 = vunpack.c.l.s4 1983009808
      %v5969 = vunpack.c.0.s8 %v5968
      %v5970 = vlaneseq
      %v5971 = vshrl.u32 %v5970, 7
      %v5972 = vsub.s32 %v5969, %v5971
      %v5973 = vrot.slane %v5965, %v5972
      %v5975 = vunpack.c.l.s4 1983009808
      %v5976 = vunpack.c.0.s8 %v5975
      %v5977 = vlaneseq
      %v5978 = vshrl.u32 %v5977, 7
      %v5979 = vsub.s32 %v5976, %v5978
      %v5980 = vrot.slane %v5966, %v5979
      %v5981 = vcombine.low %v5945, %v5947
      %v5982 = vcombine.high %v5945, %v5947
      %v5984 = vunpack.c.l.s4 1983009808
      %v5985 = vunpack.c.0.s8 %v5984
      %v5986 = vlaneseq
      %v5987 = vshrl.u32 %v5986, 7
      %v5988 = vsub.s32 %v5985, %v5987
      %v5989 = vrot.slane %v5981, %v5988
      %v5991 = vunpack.c.l.s4 1983009808
      %v5992 = vunpack.c.0.s8 %v5991
      %v5993 = vlaneseq
      %v5994 = vshrl.u32 %v5993, 7
      %v5995 = vsub.s32 %v5992, %v5994
      %v5996 = vrot.slane %v5982, %v5995
      %v5997 = vcombine.low %v5946, %v5948
      %v5998 = vcombine.high %v5946, %v5948
      %v6000 = vunpack.c.l.s4 1983009808
      %v6001 = vunpack.c.0.s8 %v6000
      %v6002 = vlaneseq
      %v6003 = vshrl.u32 %v6002, 7
      %v6004 = vsub.s32 %v6001, %v6003
      %v6005 = vrot.slane %v5997, %v6004
      %v6007 = vunpack.c.l.s4 1983009808
      %v6008 = vunpack.c.0.s8 %v6007
      %v6009 = vlaneseq
      %v6010 = vshrl.u32 %v6009, 7
      %v6011 = vsub.s32 %v6008, %v6010
      %v6012 = vrot.slane %v5998, %v6011
      %v6013 = vcombine.low %v5957, %v5973
      %v6014 = vcombine.high %v5957, %v5973
      %v6016 = vunpack.c.l.s4 1934713408
      %v6017 = vunpack.c.0.s8 %v6016
      %v6018 = vlaneseq
      %v6019 = vshrl.u32 %v6018, 7
      %v6020 = vsub.s32 %v6017, %v6019
      %v6021 = vrot.slane %v6013, %v6020
      %v6023 = vunpack.c.l.s4 1934713408
      %v6024 = vunpack.c.0.s8 %v6023
      %v6025 = vlaneseq
      %v6026 = vshrl.u32 %v6025, 7
      %v6027 = vsub.s32 %v6024, %v6026
      %v6028 = vrot.slane %v6014, %v6027
      %v6029 = vcombine.low %v5964, %v5980
      %v6030 = vcombine.high %v5964, %v5980
      %v6032 = vunpack.c.l.s4 1934713408
      %v6033 = vunpack.c.0.s8 %v6032
      %v6034 = vlaneseq
      %v6035 = vshrl.u32 %v6034, 7
      %v6036 = vsub.s32 %v6033, %v6035
      %v6037 = vrot.slane %v6029, %v6036
      %v6039 = vunpack.c.l.s4 1934713408
      %v6040 = vunpack.c.0.s8 %v6039
      %v6041 = vlaneseq
      %v6042 = vshrl.u32 %v6041, 7
      %v6043 = vsub.s32 %v6040, %v6042
      %v6044 = vrot.slane %v6030, %v6043
      %v6045 = vcombine.low %v5989, %v6005
      %v6046 = vcombine.high %v5989, %v6005
      %v6048 = vunpack.c.l.s4 1934713408
      %v6049 = vunpack.c.0.s8 %v6048
      %v6050 = vlaneseq
      %v6051 = vshrl.u32 %v6050, 7
      %v6052 = vsub.s32 %v6049, %v6051
      %v6053 = vrot.slane %v6045, %v6052
      %v6055 = vunpack.c.l.s4 1934713408
      %v6056 = vunpack.c.0.s8 %v6055
      %v6057 = vlaneseq
      %v6058 = vshrl.u32 %v6057, 7
      %v6059 = vsub.s32 %v6056, %v6058
      %v6060 = vrot.slane %v6046, %v6059
      %v6061 = vcombine.low %v5996, %v6012
      %v6062 = vcombine.high %v5996, %v6012
      %v6064 = vunpack.c.l.s4 1934713408
      %v6065 = vunpack.c.0.s8 %v6064
      %v6066 = vlaneseq
      %v6067 = vshrl.u32 %v6066, 7
      %v6068 = vsub.s32 %v6065, %v6067
      %v6069 = vrot.slane %v6061, %v6068
      %v6071 = vunpack.c.l.s4 1934713408
      %v6072 = vunpack.c.0.s8 %v6071
      %v6073 = vlaneseq
      %v6074 = vshrl.u32 %v6073, 7
      %v6075 = vsub.s32 %v6072, %v6074
      %v6076 = vrot.slane %v6062, %v6075
      %v6077 = vcombine.low %v6021, %v6053
      %v6078 = vcombine.high %v6021, %v6053
      %v6079 = vcombine.low %v6028, %v6060
      %v6080 = vcombine.high %v6028, %v6060
      %v6081 = vcombine.low %v6037, %v6069
      %v6082 = vcombine.high %v6037, %v6069
      %v6083 = vcombine.low %v6044, %v6076
      %v6084 = vcombine.high %v6044, %v6076
      %6086 = vrot.lane.b32.xlu0 %v6078, 8
      %v6087 = vpop.permute.xlu0 %6086
      %6090 = vrot.lane.b32.xlu0 %v6079, 16
      %v6091 = vpop.permute.xlu0 %6090
      %6094 = vrot.lane.b32.xlu0 %v6080, 24
      %v6095 = vpop.permute.xlu0 %6094
      %6098 = vrot.lane.b32.xlu0 %v6081, 32
      %v6099 = vpop.permute.xlu0 %6098
      %6102 = vrot.lane.b32.xlu0 %v6082, 40
      %v6103 = vpop.permute.xlu0 %6102
      %6106 = vrot.lane.b32.xlu0 %v6083, 48
      %v6107 = vpop.permute.xlu0 %6106
      %6110 = vrot.lane.b32.xlu0 %v6084, 56
      %v6111 = vpop.permute.xlu0 %6110
      %v6113 = vsel %vm342, %v6077, %v6087
      %vm6114 = vcmask 130048
      %v6115 = vsel %vm6114, %v6113, %v6091
      %vm6116 = vcmask 195584
      %v6117 = vsel %vm6116, %v6115, %v6095
      %vm6118 = vcmask 261120
      %v6119 = vsel %vm6118, %v6117, %v6099
      %vm6120 = vcmask 326656
      %v6121 = vsel %vm6120, %v6119, %v6103
      %vm6122 = vcmask 392192
      %v6123 = vsel %vm6122, %v6121, %v6107
      %vm6124 = vcmask 457728
      %v6125 = vsel %vm6124, %v6123, %v6111
      %vm6126 = vcmask 523264
      %6127 = vst.msk [vmem:[%s249] sm:$0xff] %vm6126, %v6125
      %p6128 = scmp.lt.s32.totalorder %s17, 1
      %s6129 = scalar_select %p6128, %s17, 1
      %s6130 = smul.addr %s6129, 8
      %s6131 = scalar_lea.vmem %s6, %s6130
      // Predicated region
      $region45: #{block_forward.1} parent=43 // pred_check
        %p6132 = pneg %p166
      $region46: #{block_forward.1} parent=43 // pred_check_branch
        %6134 = sbr.rel (%p6132) target = $region48
      $region47: #{block_forward.1} parent=43 // pred_region
        _
      $region48: #{block_forward.1} parent=43 // pred_fallthru
        _
    $region44: #{block_forward.1} parent=5 // pred_fallthru
      _
    %p6135 = scmp.le.s32.totalorder 2, %s12
    // Predicated region
    $region49: #{block_forward.1} parent=5 // pred_check
      %p6136 = pneg %p6135
    $region50: #{block_forward.1} parent=5 // pred_check_branch
      %6138 = sbr.rel (%p6136) target = $region52
    $region51: #{block_forward.1} parent=5 // pred_region
      %s6139 = ssub.s32 %s12, 2
      // Predicated region
      $region53: #{block_forward.1} parent=51 // pred_check
        %p6140 = pneg %p172
      $region54: #{block_forward.1} parent=51 // pred_check_branch
        %6142 = sbr.rel (%p6140) target = $region56
      $region55: #{block_forward.1} parent=51 // pred_region
        %p6143 = scmp.lt.s32.totalorder %s18, 1
        %s6144 = scalar_select %p6143, %s18, 1
        %s6145 = smul.addr %s6144, 8
        %s6146 = scalar_lea.vmem %s6, %s6145
      $region56: #{block_forward.1} parent=51 // pred_fallthru
        _
    $region52: #{block_forward.1} parent=5 // pred_fallthru
      _
  $region6: #{block_forward.1} parent=0 // loop_footer
    %s16 = sadd.s32 1, %s12
  $region7: #{block_forward.1} parent=0 // loop_footer_branch
    %11 = sbr.rel target = $region3
  $region8: #{block_forward.1} parent=0 // loop_exit
    _

</llo_original>
